<compile_context>
chip_gen: v5e
topology: v5e:2x2
jax: 0.10.0
libtpu: 0.0.40
codegen_flags: <defaults>
</compile_context>

<pallas_src>
import math
import functools

import jax
import jax.numpy as jnp
import numpy as np
from jax import lax
from jax.experimental import pallas as pl
from jax.experimental.pallas import tpu as pltpu


# ---------------------------------------------------------------------------
# Kernel: full encoder layer for one batch element (one (S, D) slab in VMEM).
# Weights arrive pre-transposed to (in_features, out_features) and in bf16.
# ---------------------------------------------------------------------------
def _encoder_layer_kernel(x_ref, w_qkv_ref, b_qkv_ref, w_out_ref, b_out_ref,
                          g1_ref, bt1_ref, g2_ref, bt2_ref,
                          w1_ref, b1_ref, w2_ref, b2_ref,
                          o_ref, qkv_ref, acc_ref, *, num_heads, eps):
    x = x_ref[0]                                   # (S, D) f32
    d_model = x.shape[-1]
    hd = d_model // num_heads

    def layer_norm(v, gamma, beta):
        mu = jnp.mean(v, axis=-1, keepdims=True)
        c = v - mu
        var = jnp.mean(c * c, axis=-1, keepdims=True)
        return c * lax.rsqrt(var + eps) * gamma + beta

    # ---- block 1: pre-norm + multi-head self-attention ---------------------
    xn = layer_norm(x, g1_ref[...], bt1_ref[...])

    # Fused QKV projection: (S, D) @ (D, 3D); weights pre-transposed, bf16;
    # the 1/sqrt(hd) query scale is already folded into W_q / b_q.
    qkv = jnp.dot(xn.astype(jnp.bfloat16), w_qkv_ref[...],
                  preferred_element_type=jnp.float32) + b_qkv_ref[...]   # (S, 3D) f32

    # Stage into VMEM once (lane-dense, 3D = multiple of 128 -> unmasked vst);
    # the head loop only pulls (S, hd) slices -> low vreg pressure.
    qkv_ref[...] = qkv.astype(jnp.bfloat16)

    for h in range(num_heads):                     # static unroll over heads
        q_lo = h * hd
        k_lo = d_model + h * hd
        v_lo = 2 * d_model + h * hd
        qh = qkv_ref[:, q_lo:q_lo + hd]            # (S, hd) bf16
        kh = qkv_ref[:, k_lo:k_lo + hd]
        vh = qkv_ref[:, v_lo:v_lo + hd]

        # scores: contract last dim of both operands (no kh.T materialisation)
        s = lax.dot_general(qh, kh, (((1,), (1,)), ((), ())),
                            preferred_element_type=jnp.float32)          # (S, S)
        s = s - jnp.max(s, axis=-1, keepdims=True)
        p = jnp.exp(s)                                                   # unnormalised
        rsum = jnp.sum(p, axis=-1, keepdims=True)                        # (S, 1)

        # deferred softmax normalisation: scale the small (S, hd) result,
        # not the (S, S) probability matrix.
        ctx = jnp.dot(p.astype(jnp.bfloat16), vh,
                      preferred_element_type=jnp.float32)                # (S, hd)
        ctx = ctx * pl.reciprocal(rsum, approx=True)

        # Fused output projection: accumulate this head's contribution into a
        # lane-dense f32 (S, D) VMEM slab (no width-32 masked stores, no
        # concatenate, no slab re-load).
        contrib = jnp.dot(ctx.astype(jnp.bfloat16),
                          w_out_ref[h * hd:(h + 1) * hd, :],
                          preferred_element_type=jnp.float32)            # (S, D) f32
        if h == 0:
            acc_ref[...] = contrib
        else:
            acc_ref[...] += contrib

    attn = acc_ref[...] + b_out_ref[...]           # out_proj bias added once
    x1 = x_ref[0] + attn                           # residual; dropout == identity

    # ---- block 2: pre-norm + FFN -------------------------------------------
    xn2 = layer_norm(x1, g2_ref[...], bt2_ref[...])
    h1 = jnp.dot(xn2.astype(jnp.bfloat16), w1_ref[...],
                 preferred_element_type=jnp.float32) + b1_ref[...]
    h1 = jnp.maximum(h1, 0.0)                      # ReLU
    h2 = jnp.dot(h1.astype(jnp.bfloat16), w2_ref[...],
                 preferred_element_type=jnp.float32) + b2_ref[...]

    o_ref[0] = x1 + h2                             # residual; dropout == identity


# ---------------------------------------------------------------------------
# One-time weight preprocessing (call ONCE per layer, cache the result).
# Transposes to (in, out), casts matmul weights to bf16, folds the 1/sqrt(hd)
# query scale into W_q / b_q, and reshapes 1-D params to (1, N) rows.
# ---------------------------------------------------------------------------
def preprocess_params(params, *, num_heads):
    D = params["w_out"].shape[0]
    hd = D // num_heads
    scale = 1.0 / math.sqrt(hd)

    q_scale = jnp.concatenate([jnp.full((D,), scale, jnp.float32),
                               jnp.ones((2 * D,), jnp.float32)])
    row = lambda a: a.reshape(1, -1)
    return {
        "w_qkv": (params["w_in"] * q_scale[:, None]).T.astype(jnp.bfloat16),  # (D, 3D)
        "b_qkv": row(params["b_in"] * q_scale),                               # (1, 3D)
        "w_out": params["w_out"].T.astype(jnp.bfloat16),                      # (D, D)
        "b_out": row(params["b_out"]),
        "g1": row(params["g1"]), "bt1": row(params["bt1"]),
        "g2": row(params["g2"]), "bt2": row(params["bt2"]),
        "w_ff1": params["w_ff1"].T.astype(jnp.bfloat16),                      # (D, d_ff)
        "b_ff1": row(params["b_ff1"]),
        "w_ff2": params["w_ff2"].T.astype(jnp.bfloat16),                      # (d_ff, D)
        "b_ff2": row(params["b_ff2"]),
    }


def _vmem_limit_bytes(S, D, d_ff):
    """Budget-derived VMEM limit: single-buffered weights + double-buffered
    activation blocks + kernel scratch + Mosaic-internal headroom."""
    f32, bf16 = 4, 2
    io = 2 * 2 * S * D * f32                                   # x + out, double-buffered
    weights = bf16 * (3 * D * D + D * D + D * d_ff + d_ff * D)  # single-buffered
    small = f32 * (3 * D + D + 4 * D + d_ff + D)                # biases + LN params
    scratch = bf16 * S * 3 * D + f32 * S * D                    # qkv stage + out-proj acc
    budget = io + weights + small + scratch + (16 << 20)        # headroom for internals
    return int(min(budget, 40 << 20))                           # safe on v7x (64 MiB phys)


# ---------------------------------------------------------------------------
# Wrapper
# ---------------------------------------------------------------------------
def transformer_encoder_layer(x, prepped, *, num_heads, eps=1e-5, batch_first=False):
    """x: (S, B, D) float32 (PyTorch MHA default), or (B, S, D) if batch_first.
    `prepped` is the output of preprocess_params (computed once, reused).
    Returns an array in the same layout as the input."""
    if batch_first:
        xb = x                                     # (B, S, D), no HBM transpose
    else:
        # PyTorch layout (S, B, D).  A (S, 1, D) block over the batch axis would
        # violate the (8, 128) last-two-dims rule for B < 8, so we keep one XLA
        # transpose here; pass batch_first=True to avoid it entirely.
        xb = jnp.transpose(x, (1, 0, 2))           # (B, S, D)

    B, S, D = xb.shape
    d_ff = prepped["w_ff1"].shape[1]

    # Constant-index weights/biases: single-buffered (block never changes).
    def const(shape):
        return pl.BlockSpec(shape, lambda b: (0,) * len(shape),
                            pipeline_mode=pl.Buffered(1))

    kernel = functools.partial(_encoder_layer_kernel, num_heads=num_heads, eps=eps)

    out = pl.pallas_call(
        kernel,
        out_shape=jax.ShapeDtypeStruct((B, S, D), jnp.float32),
        grid=(B,),
        in_specs=[
            pl.BlockSpec((1, S, D), lambda b: (b, 0, 0)),   # x
            const((D, 3 * D)),                              # fused QKV weight (bf16)
            const((1, 3 * D)),                              # fused QKV bias
            const((D, D)),                                  # out_proj weight (bf16)
            const((1, D)),                                  # out_proj bias
            const((1, D)), const((1, D)),                   # norm1 gamma / beta
            const((1, D)), const((1, D)),                   # norm2 gamma / beta
            const((D, d_ff)),                               # ffn W1 (bf16)
            const((1, d_ff)),                               # ffn b1
            const((d_ff, D)),                               # ffn W2 (bf16)
            const((1, D)),                                  # ffn b2
        ],
        out_specs=pl.BlockSpec((1, S, D), lambda b: (b, 0, 0)),
        scratch_shapes=[
            pltpu.VMEM((S, 3 * D), jnp.bfloat16),           # staged QKV activations
            pltpu.VMEM((S, D), jnp.float32),                # fused out-proj accumulator
        ],
        compiler_params=pltpu.CompilerParams(
            dimension_semantics=("parallel",),
            vmem_limit_bytes=_vmem_limit_bytes(S, D, d_ff)),
    )(
        xb,
        prepped["w_qkv"], prepped["b_qkv"],
        prepped["w_out"], prepped["b_out"],
        prepped["g1"], prepped["bt1"],
        prepped["g2"], prepped["bt2"],
        prepped["w_ff1"], prepped["b_ff1"],
        prepped["w_ff2"], prepped["b_ff2"],
    )

    return out if batch_first else jnp.transpose(out, (1, 0, 2))


# ---------------------------------------------------------------------------
# Pure-JAX f32 reference (same math as the PyTorch module) for validation.
# ---------------------------------------------------------------------------
def reference(x, params, *, num_heads, eps=1e-5):
    S, B, D = x.shape
    hd = D // num_heads

    def ln(v, g, b):
        mu = jnp.mean(v, axis=-1, keepdims=True)
        var = jnp.mean((v - mu) ** 2, axis=-1, keepdims=True)
        return (v - mu) / jnp.sqrt(var + eps) * g + b

    resid = x
    xn = ln(x, params["g1"], params["bt1"])
    qkv = jnp.einsum("sbd,ed->sbe", xn, params["w_in"]) + params["b_in"]
    q, k, v = jnp.split(qkv, 3, axis=-1)
    q = q.reshape(S, B, num_heads, hd) / math.sqrt(hd)
    k = k.reshape(S, B, num_heads, hd)
    v = v.reshape(S, B, num_heads, hd)
    s = jnp.einsum("qbhd,kbhd->bhqk", q, k)
    p = jax.nn.softmax(s, axis=-1)
    o = jnp.einsum("bhqk,kbhd->qbhd", p, v).reshape(S, B, D)
    o = jnp.einsum("sbd,ed->sbe", o, params["w_out"]) + params["b_out"]
    x1 = resid + o
    xn2 = ln(x1, params["g2"], params["bt2"])
    h1 = jax.nn.relu(jnp.einsum("sbd,fd->sbf", xn2, params["w_ff1"]) + params["b_ff1"])
    h2 = jnp.einsum("sbf,df->sbd", h1, params["w_ff2"]) + params["b_ff2"]
    return x1 + h2


# ---------------------------------------------------------------------------
# Main
# ---------------------------------------------------------------------------
if __name__ == "__main__":
    # Small but TPU-friendly shapes: lane-dense D, 128-granular S, d_ff = 2*D.
    S, B, D, H, DFF = 128, 2, 128, 4, 256

    key = jax.random.PRNGKey(0)
    ks = jax.random.split(key, 10)
    scale = 0.1
    params = {
        "w_in":  scale * jax.random.normal(ks[0], (3 * D, D), jnp.float32),
        "b_in":  scale * jax.random.normal(ks[1], (3 * D,), jnp.float32),
        "w_out": scale * jax.random.normal(ks[2], (D, D), jnp.float32),
        "b_out": scale * jax.random.normal(ks[3], (D,), jnp.float32),
        "g1":    jnp.ones((D,), jnp.float32),
        "bt1":   jnp.zeros((D,), jnp.float32),
        "g2":    jnp.ones((D,), jnp.float32),
        "bt2":   jnp.zeros((D,), jnp.float32),
        "w_ff1": scale * jax.random.normal(ks[4], (DFF, D), jnp.float32),
        "b_ff1": scale * jax.random.normal(ks[5], (DFF,), jnp.float32),
        "w_ff2": scale * jax.random.normal(ks[6], (D, DFF), jnp.float32),
        "b_ff2": scale * jax.random.normal(ks[7], (D,), jnp.float32),
    }

    x = jax.random.normal(ks[8], (S, B, D), jnp.float32)   # (seq, batch, d_model)

    # One-time (cacheable) weight preprocessing, outside the per-call path.
    prepped = preprocess_params(params, num_heads=H)
    prepped = jax.tree_util.tree_map(jax.block_until_ready, prepped)

    out = transformer_encoder_layer(x, prepped, num_heads=H)
    out = jax.block_until_ready(out)

    ref = reference(x, params, num_heads=H)
    # bf16 matmul inputs (f32 accumulation) + approx reciprocal -> ~1e-2 level
    np.testing.assert_allclose(np.asarray(out), np.asarray(ref), rtol=3e-2, atol=3e-2)

    print("KERNEL_OK")
</pallas_src>

<mosaic_0001>
module attributes {stable_mosaic.version = 11 : i64} {
  func.func @_encoder_layer_kernel(%arg0: i32, %arg1: memref<1x128x128xf32, #tpu.memory_space<vmem>>, %arg2: memref<128x384xbf16, #tpu.memory_space<vmem>>, %arg3: memref<1x384xf32, #tpu.memory_space<vmem>>, %arg4: memref<128x128xbf16, #tpu.memory_space<vmem>>, %arg5: memref<1x128xf32, #tpu.memory_space<vmem>>, %arg6: memref<1x128xf32, #tpu.memory_space<vmem>>, %arg7: memref<1x128xf32, #tpu.memory_space<vmem>>, %arg8: memref<1x128xf32, #tpu.memory_space<vmem>>, %arg9: memref<1x128xf32, #tpu.memory_space<vmem>>, %arg10: memref<128x256xbf16, #tpu.memory_space<vmem>>, %arg11: memref<1x256xf32, #tpu.memory_space<vmem>>, %arg12: memref<256x128xbf16, #tpu.memory_space<vmem>>, %arg13: memref<1x128xf32, #tpu.memory_space<vmem>>, %arg14: memref<1x128x128xf32, #tpu.memory_space<vmem>>, %arg15: memref<128x384xbf16, #tpu.memory_space<vmem>>, %arg16: memref<128x128xf32, #tpu.memory_space<vmem>>) attributes {dimension_semantics = [#tpu.dimension_semantics<parallel>], iteration_bounds = array<i64: 2>, scalar_prefetch = 0 : i64, scratch_operands = 2 : i64, tpu.core_type = #tpu.core_type<tc>, window_params = [{transform_indices = @transform_0, window_bounds = array<i64: 1, 128, 128>}, {pipeline_mode = #tpu.pipeline_mode<synchronous>, transform_indices = @transform_1, window_bounds = array<i64: 128, 384>}, {pipeline_mode = #tpu.pipeline_mode<synchronous>, transform_indices = @transform_2, window_bounds = array<i64: 1, 384>}, {pipeline_mode = #tpu.pipeline_mode<synchronous>, transform_indices = @transform_3, window_bounds = array<i64: 128, 128>}, {pipeline_mode = #tpu.pipeline_mode<synchronous>, transform_indices = @transform_4, window_bounds = array<i64: 1, 128>}, {pipeline_mode = #tpu.pipeline_mode<synchronous>, transform_indices = @transform_5, window_bounds = array<i64: 1, 128>}, {pipeline_mode = #tpu.pipeline_mode<synchronous>, transform_indices = @transform_6, window_bounds = array<i64: 1, 128>}, {pipeline_mode = #tpu.pipeline_mode<synchronous>, transform_indices = @transform_7, window_bounds = array<i64: 1, 128>}, {pipeline_mode = #tpu.pipeline_mode<synchronous>, transform_indices = @transform_8, window_bounds = array<i64: 1, 128>}, {pipeline_mode = #tpu.pipeline_mode<synchronous>, transform_indices = @transform_9, window_bounds = array<i64: 128, 256>}, {pipeline_mode = #tpu.pipeline_mode<synchronous>, transform_indices = @transform_10, window_bounds = array<i64: 1, 256>}, {pipeline_mode = #tpu.pipeline_mode<synchronous>, transform_indices = @transform_11, window_bounds = array<i64: 256, 128>}, {pipeline_mode = #tpu.pipeline_mode<synchronous>, transform_indices = @transform_12, window_bounds = array<i64: 1, 128>}, {transform_indices = @transform_13, window_bounds = array<i64: 1, 128, 128>}]} {
    %c0 = arith.constant 0 : index
    %c0_0 = arith.constant 0 : index
    %c0_1 = arith.constant 0 : index
    %0 = vector.load %arg1[%c0, %c0_0, %c0_1] : memref<1x128x128xf32, #tpu.memory_space<vmem>>, vector<1x128x128xf32>
    %1 = vector.shape_cast %0 : vector<1x128x128xf32> to vector<128x128xf32>
    %c0_2 = arith.constant 0 : index
    %c0_3 = arith.constant 0 : index
    %2 = vector.load %arg6[%c0_2, %c0_3] : memref<1x128xf32, #tpu.memory_space<vmem>>, vector<1x128xf32>
    %c0_4 = arith.constant 0 : index
    %c0_5 = arith.constant 0 : index
    %3 = vector.load %arg7[%c0_4, %c0_5] : memref<1x128xf32, #tpu.memory_space<vmem>>, vector<1x128xf32>
    %cst = arith.constant dense<0.000000e+00> : vector<128xf32>
    %4 = vector.multi_reduction <add>, %1, %cst [1] : vector<128x128xf32> to vector<128xf32>
    %5 = vector.shape_cast %4 : vector<128xf32> to vector<128x1xf32>
    %cst_6 = arith.constant 1.280000e+02 : f32
    %6 = vector.broadcast %cst_6 : f32 to vector<128x1xf32>
    %7 = arith.divf %5, %6 : vector<128x1xf32>
    %8 = vector.broadcast %7 : vector<128x1xf32> to vector<128x128xf32>
    %9 = arith.subf %1, %8 : vector<128x128xf32>
    %10 = arith.mulf %9, %9 : vector<128x128xf32>
    %cst_7 = arith.constant dense<0.000000e+00> : vector<128xf32>
    %11 = vector.multi_reduction <add>, %10, %cst_7 [1] : vector<128x128xf32> to vector<128xf32>
    %12 = vector.shape_cast %11 : vector<128xf32> to vector<128x1xf32>
    %cst_8 = arith.constant 1.280000e+02 : f32
    %13 = vector.broadcast %cst_8 : f32 to vector<128x1xf32>
    %14 = arith.divf %12, %13 : vector<128x1xf32>
    %cst_9 = arith.constant 9.99999974E-6 : f32
    %15 = vector.broadcast %cst_9 : f32 to vector<128x1xf32>
    %16 = arith.addf %14, %15 : vector<128x1xf32>
    %17 = math.rsqrt %16 : vector<128x1xf32>
    %18 = vector.broadcast %17 : vector<128x1xf32> to vector<128x128xf32>
    %19 = arith.mulf %9, %18 : vector<128x128xf32>
    %20 = vector.broadcast %2 : vector<1x128xf32> to vector<128x128xf32>
    %21 = arith.mulf %19, %20 : vector<128x128xf32>
    %22 = vector.broadcast %3 : vector<1x128xf32> to vector<128x128xf32>
    %23 = arith.addf %21, %22 : vector<128x128xf32>
    %24 = arith.truncf %23 : vector<128x128xf32> to vector<128x128xbf16>
    %c0_10 = arith.constant 0 : index
    %c0_11 = arith.constant 0 : index
    %25 = vector.load %arg2[%c0_10, %c0_11] : memref<128x384xbf16, #tpu.memory_space<vmem>>, vector<128x384xbf16>
    %cst_12 = arith.constant dense<0.000000e+00> : vector<128x384xf32>
    %26 = tpu.matmul %24, %25, %cst_12 {dimension_numbers = #tpu.dot_dimension_numbers<[1], [0], [0], [1], [0, 0, 1, 1], [], []>} : vector<128x128xbf16>, vector<128x384xbf16>, vector<128x384xf32> -> vector<128x384xf32>
    %c0_13 = arith.constant 0 : index
    %c0_14 = arith.constant 0 : index
    %27 = vector.load %arg3[%c0_13, %c0_14] : memref<1x384xf32, #tpu.memory_space<vmem>>, vector<1x384xf32>
    %28 = vector.broadcast %27 : vector<1x384xf32> to vector<128x384xf32>
    %29 = arith.addf %26, %28 : vector<128x384xf32>
    %30 = arith.truncf %29 : vector<128x384xf32> to vector<128x384xbf16>
    %c0_15 = arith.constant 0 : index
    %c0_16 = arith.constant 0 : index
    %31 = vector.load %arg15[%c0_15, %c0_16] : memref<128x384xbf16, #tpu.memory_space<vmem>>, vector<128x384xbf16>
    tpu.vector_store %arg15[%c0_15, %c0_16], %30 {strides = array<i32>} : memref<128x384xbf16, #tpu.memory_space<vmem>>, vector<128x384xbf16>,
    %c0_17 = arith.constant 0 : index
    %c0_18 = arith.constant 0 : index
    %32 = vector.load %arg15[%c0_17, %c0_18] : memref<128x384xbf16, #tpu.memory_space<vmem>>, vector<128x32xbf16>
    %c0_19 = arith.constant 0 : index
    %c128 = arith.constant 128 : index
    %33 = vector.load %arg15[%c0_19, %c128] : memref<128x384xbf16, #tpu.memory_space<vmem>>, vector<128x32xbf16>
    %c0_20 = arith.constant 0 : index
    %c256 = arith.constant 256 : index
    %34 = vector.load %arg15[%c0_20, %c256] : memref<128x384xbf16, #tpu.memory_space<vmem>>, vector<128x32xbf16>
    %cst_21 = arith.constant dense<0.000000e+00> : vector<128x128xf32>
    %35 = tpu.matmul %32, %33, %cst_21 {dimension_numbers = #tpu.dot_dimension_numbers<[1], [1], [0], [0], [0, 0, 1, 0], [], []>} : vector<128x32xbf16>, vector<128x32xbf16>, vector<128x128xf32> -> vector<128x128xf32>
    %cst_22 = arith.constant dense<0xFF800000> : vector<128xf32>
    %36 = vector.multi_reduction <maximumf>, %35, %cst_22 [1] : vector<128x128xf32> to vector<128xf32>
    %37 = vector.shape_cast %36 : vector<128xf32> to vector<128x1xf32>
    %38 = vector.broadcast %37 : vector<128x1xf32> to vector<128x128xf32>
    %39 = arith.subf %35, %38 : vector<128x128xf32>
    %40 = math.exp %39 : vector<128x128xf32>
    %cst_23 = arith.constant dense<0.000000e+00> : vector<128xf32>
    %41 = vector.multi_reduction <add>, %40, %cst_23 [1] : vector<128x128xf32> to vector<128xf32>
    %42 = vector.shape_cast %41 : vector<128xf32> to vector<128x1xf32>
    %43 = arith.truncf %40 : vector<128x128xf32> to vector<128x128xbf16>
    %cst_24 = arith.constant dense<0.000000e+00> : vector<128x32xf32>
    %44 = tpu.matmul %43, %34, %cst_24 {dimension_numbers = #tpu.dot_dimension_numbers<[1], [0], [0], [1], [0, 0, 1, 1], [], []>} : vector<128x128xbf16>, vector<128x32xbf16>, vector<128x32xf32> -> vector<128x32xf32>
    %45 = tpu.reciprocal %42 {approx = true} : vector<128x1xf32> -> vector<128x1xf32>
    %46 = vector.broadcast %45 : vector<128x1xf32> to vector<128x32xf32>
    %47 = arith.mulf %44, %46 : vector<128x32xf32>
    %48 = arith.truncf %47 : vector<128x32xf32> to vector<128x32xbf16>
    %c0_25 = arith.constant 0 : index
    %c0_26 = arith.constant 0 : index
    %49 = vector.load %arg4[%c0_25, %c0_26] : memref<128x128xbf16, #tpu.memory_space<vmem>>, vector<32x128xbf16>
    %cst_27 = arith.constant dense<0.000000e+00> : vector<128x128xf32>
    %50 = tpu.matmul %48, %49, %cst_27 {dimension_numbers = #tpu.dot_dimension_numbers<[1], [0], [0], [1], [0, 0, 1, 1], [], []>} : vector<128x32xbf16>, vector<32x128xbf16>, vector<128x128xf32> -> vector<128x128xf32>
    %c0_28 = arith.constant 0 : index
    %c0_29 = arith.constant 0 : index
    %51 = vector.load %arg16[%c0_28, %c0_29] : memref<128x128xf32, #tpu.memory_space<vmem>>, vector<128x128xf32>
    tpu.vector_store %arg16[%c0_28, %c0_29], %50 {strides = array<i32>} : memref<128x128xf32, #tpu.memory_space<vmem>>, vector<128x128xf32>,
    %c0_30 = arith.constant 0 : index
    %c32 = arith.constant 32 : index
    %52 = vector.load %arg15[%c0_30, %c32] : memref<128x384xbf16, #tpu.memory_space<vmem>>, vector<128x32xbf16>
    %c0_31 = arith.constant 0 : index
    %c160 = arith.constant 160 : index
    %53 = vector.load %arg15[%c0_31, %c160] : memref<128x384xbf16, #tpu.memory_space<vmem>>, vector<128x32xbf16>
    %c0_32 = arith.constant 0 : index
    %c288 = arith.constant 288 : index
    %54 = vector.load %arg15[%c0_32, %c288] : memref<128x384xbf16, #tpu.memory_space<vmem>>, vector<128x32xbf16>
    %cst_33 = arith.constant dense<0.000000e+00> : vector<128x128xf32>
    %55 = tpu.matmul %52, %53, %cst_33 {dimension_numbers = #tpu.dot_dimension_numbers<[1], [1], [0], [0], [0, 0, 1, 0], [], []>} : vector<128x32xbf16>, vector<128x32xbf16>, vector<128x128xf32> -> vector<128x128xf32>
    %cst_34 = arith.constant dense<0xFF800000> : vector<128xf32>
    %56 = vector.multi_reduction <maximumf>, %55, %cst_34 [1] : vector<128x128xf32> to vector<128xf32>
    %57 = vector.shape_cast %56 : vector<128xf32> to vector<128x1xf32>
    %58 = vector.broadcast %57 : vector<128x1xf32> to vector<128x128xf32>
    %59 = arith.subf %55, %58 : vector<128x128xf32>
    %60 = math.exp %59 : vector<128x128xf32>
    %cst_35 = arith.constant dense<0.000000e+00> : vector<128xf32>
    %61 = vector.multi_reduction <add>, %60, %cst_35 [1] : vector<128x128xf32> to vector<128xf32>
    %62 = vector.shape_cast %61 : vector<128xf32> to vector<128x1xf32>
    %63 = arith.truncf %60 : vector<128x128xf32> to vector<128x128xbf16>
    %cst_36 = arith.constant dense<0.000000e+00> : vector<128x32xf32>
    %64 = tpu.matmul %63, %54, %cst_36 {dimension_numbers = #tpu.dot_dimension_numbers<[1], [0], [0], [1], [0, 0, 1, 1], [], []>} : vector<128x128xbf16>, vector<128x32xbf16>, vector<128x32xf32> -> vector<128x32xf32>
    %65 = tpu.reciprocal %62 {approx = true} : vector<128x1xf32> -> vector<128x1xf32>
    %66 = vector.broadcast %65 : vector<128x1xf32> to vector<128x32xf32>
    %67 = arith.mulf %64, %66 : vector<128x32xf32>
    %68 = arith.truncf %67 : vector<128x32xf32> to vector<128x32xbf16>
    %c32_37 = arith.constant 32 : index
    %c0_38 = arith.constant 0 : index
    %69 = vector.load %arg4[%c32_37, %c0_38] : memref<128x128xbf16, #tpu.memory_space<vmem>>, vector<32x128xbf16>
    %cst_39 = arith.constant dense<0.000000e+00> : vector<128x128xf32>
    %70 = tpu.matmul %68, %69, %cst_39 {dimension_numbers = #tpu.dot_dimension_numbers<[1], [0], [0], [1], [0, 0, 1, 1], [], []>} : vector<128x32xbf16>, vector<32x128xbf16>, vector<128x128xf32> -> vector<128x128xf32>
    %c0_40 = arith.constant 0 : index
    %c0_41 = arith.constant 0 : index
    %71 = vector.load %arg16[%c0_40, %c0_41] : memref<128x128xf32, #tpu.memory_space<vmem>>, vector<128x128xf32>
    %72 = arith.addf %71, %70 : vector<128x128xf32>
    %c0_42 = arith.constant 0 : index
    %c0_43 = arith.constant 0 : index
    %73 = vector.load %arg16[%c0_42, %c0_43] : memref<128x128xf32, #tpu.memory_space<vmem>>, vector<128x128xf32>
    tpu.vector_store %arg16[%c0_42, %c0_43], %72 {strides = array<i32>} : memref<128x128xf32, #tpu.memory_space<vmem>>, vector<128x128xf32>,
    %c0_44 = arith.constant 0 : index
    %c64 = arith.constant 64 : index
    %74 = vector.load %arg15[%c0_44, %c64] : memref<128x384xbf16, #tpu.memory_space<vmem>>, vector<128x32xbf16>
    %c0_45 = arith.constant 0 : index
    %c192 = arith.constant 192 : index
    %75 = vector.load %arg15[%c0_45, %c192] : memref<128x384xbf16, #tpu.memory_space<vmem>>, vector<128x32xbf16>
    %c0_46 = arith.constant 0 : index
    %c320 = arith.constant 320 : index
    %76 = vector.load %arg15[%c0_46, %c320] : memref<128x384xbf16, #tpu.memory_space<vmem>>, vector<128x32xbf16>
    %cst_47 = arith.constant dense<0.000000e+00> : vector<128x128xf32>
    %77 = tpu.matmul %74, %75, %cst_47 {dimension_numbers = #tpu.dot_dimension_numbers<[1], [1], [0], [0], [0, 0, 1, 0], [], []>} : vector<128x32xbf16>, vector<128x32xbf16>, vector<128x128xf32> -> vector<128x128xf32>
    %cst_48 = arith.constant dense<0xFF800000> : vector<128xf32>
    %78 = vector.multi_reduction <maximumf>, %77, %cst_48 [1] : vector<128x128xf32> to vector<128xf32>
    %79 = vector.shape_cast %78 : vector<128xf32> to vector<128x1xf32>
    %80 = vector.broadcast %79 : vector<128x1xf32> to vector<128x128xf32>
    %81 = arith.subf %77, %80 : vector<128x128xf32>
    %82 = math.exp %81 : vector<128x128xf32>
    %cst_49 = arith.constant dense<0.000000e+00> : vector<128xf32>
    %83 = vector.multi_reduction <add>, %82, %cst_49 [1] : vector<128x128xf32> to vector<128xf32>
    %84 = vector.shape_cast %83 : vector<128xf32> to vector<128x1xf32>
    %85 = arith.truncf %82 : vector<128x128xf32> to vector<128x128xbf16>
    %cst_50 = arith.constant dense<0.000000e+00> : vector<128x32xf32>
    %86 = tpu.matmul %85, %76, %cst_50 {dimension_numbers = #tpu.dot_dimension_numbers<[1], [0], [0], [1], [0, 0, 1, 1], [], []>} : vector<128x128xbf16>, vector<128x32xbf16>, vector<128x32xf32> -> vector<128x32xf32>
    %87 = tpu.reciprocal %84 {approx = true} : vector<128x1xf32> -> vector<128x1xf32>
    %88 = vector.broadcast %87 : vector<128x1xf32> to vector<128x32xf32>
    %89 = arith.mulf %86, %88 : vector<128x32xf32>
    %90 = arith.truncf %89 : vector<128x32xf32> to vector<128x32xbf16>
    %c64_51 = arith.constant 64 : index
    %c0_52 = arith.constant 0 : index
    %91 = vector.load %arg4[%c64_51, %c0_52] : memref<128x128xbf16, #tpu.memory_space<vmem>>, vector<32x128xbf16>
    %cst_53 = arith.constant dense<0.000000e+00> : vector<128x128xf32>
    %92 = tpu.matmul %90, %91, %cst_53 {dimension_numbers = #tpu.dot_dimension_numbers<[1], [0], [0], [1], [0, 0, 1, 1], [], []>} : vector<128x32xbf16>, vector<32x128xbf16>, vector<128x128xf32> -> vector<128x128xf32>
    %c0_54 = arith.constant 0 : index
    %c0_55 = arith.constant 0 : index
    %93 = vector.load %arg16[%c0_54, %c0_55] : memref<128x128xf32, #tpu.memory_space<vmem>>, vector<128x128xf32>
    %94 = arith.addf %93, %92 : vector<128x128xf32>
    %c0_56 = arith.constant 0 : index
    %c0_57 = arith.constant 0 : index
    %95 = vector.load %arg16[%c0_56, %c0_57] : memref<128x128xf32, #tpu.memory_space<vmem>>, vector<128x128xf32>
    tpu.vector_store %arg16[%c0_56, %c0_57], %94 {strides = array<i32>} : memref<128x128xf32, #tpu.memory_space<vmem>>, vector<128x128xf32>,
    %c0_58 = arith.constant 0 : index
    %c96 = arith.constant 96 : index
    %96 = vector.load %arg15[%c0_58, %c96] : memref<128x384xbf16, #tpu.memory_space<vmem>>, vector<128x32xbf16>
    %c0_59 = arith.constant 0 : index
    %c224 = arith.constant 224 : index
    %97 = vector.load %arg15[%c0_59, %c224] : memref<128x384xbf16, #tpu.memory_space<vmem>>, vector<128x32xbf16>
    %c0_60 = arith.constant 0 : index
    %c352 = arith.constant 352 : index
    %98 = vector.load %arg15[%c0_60, %c352] : memref<128x384xbf16, #tpu.memory_space<vmem>>, vector<128x32xbf16>
    %cst_61 = arith.constant dense<0.000000e+00> : vector<128x128xf32>
    %99 = tpu.matmul %96, %97, %cst_61 {dimension_numbers = #tpu.dot_dimension_numbers<[1], [1], [0], [0], [0, 0, 1, 0], [], []>} : vector<128x32xbf16>, vector<128x32xbf16>, vector<128x128xf32> -> vector<128x128xf32>
    %cst_62 = arith.constant dense<0xFF800000> : vector<128xf32>
    %100 = vector.multi_reduction <maximumf>, %99, %cst_62 [1] : vector<128x128xf32> to vector<128xf32>
    %101 = vector.shape_cast %100 : vector<128xf32> to vector<128x1xf32>
    %102 = vector.broadcast %101 : vector<128x1xf32> to vector<128x128xf32>
    %103 = arith.subf %99, %102 : vector<128x128xf32>
    %104 = math.exp %103 : vector<128x128xf32>
    %cst_63 = arith.constant dense<0.000000e+00> : vector<128xf32>
    %105 = vector.multi_reduction <add>, %104, %cst_63 [1] : vector<128x128xf32> to vector<128xf32>
    %106 = vector.shape_cast %105 : vector<128xf32> to vector<128x1xf32>
    %107 = arith.truncf %104 : vector<128x128xf32> to vector<128x128xbf16>
    %cst_64 = arith.constant dense<0.000000e+00> : vector<128x32xf32>
    %108 = tpu.matmul %107, %98, %cst_64 {dimension_numbers = #tpu.dot_dimension_numbers<[1], [0], [0], [1], [0, 0, 1, 1], [], []>} : vector<128x128xbf16>, vector<128x32xbf16>, vector<128x32xf32> -> vector<128x32xf32>
    %109 = tpu.reciprocal %106 {approx = true} : vector<128x1xf32> -> vector<128x1xf32>
    %110 = vector.broadcast %109 : vector<128x1xf32> to vector<128x32xf32>
    %111 = arith.mulf %108, %110 : vector<128x32xf32>
    %112 = arith.truncf %111 : vector<128x32xf32> to vector<128x32xbf16>
    %c96_65 = arith.constant 96 : index
    %c0_66 = arith.constant 0 : index
    %113 = vector.load %arg4[%c96_65, %c0_66] : memref<128x128xbf16, #tpu.memory_space<vmem>>, vector<32x128xbf16>
    %cst_67 = arith.constant dense<0.000000e+00> : vector<128x128xf32>
    %114 = tpu.matmul %112, %113, %cst_67 {dimension_numbers = #tpu.dot_dimension_numbers<[1], [0], [0], [1], [0, 0, 1, 1], [], []>} : vector<128x32xbf16>, vector<32x128xbf16>, vector<128x128xf32> -> vector<128x128xf32>
    %c0_68 = arith.constant 0 : index
    %c0_69 = arith.constant 0 : index
    %115 = vector.load %arg16[%c0_68, %c0_69] : memref<128x128xf32, #tpu.memory_space<vmem>>, vector<128x128xf32>
    %116 = arith.addf %115, %114 : vector<128x128xf32>
    %c0_70 = arith.constant 0 : index
    %c0_71 = arith.constant 0 : index
    %117 = vector.load %arg16[%c0_70, %c0_71] : memref<128x128xf32, #tpu.memory_space<vmem>>, vector<128x128xf32>
    tpu.vector_store %arg16[%c0_70, %c0_71], %116 {strides = array<i32>} : memref<128x128xf32, #tpu.memory_space<vmem>>, vector<128x128xf32>,
    %c0_72 = arith.constant 0 : index
    %c0_73 = arith.constant 0 : index
    %118 = vector.load %arg16[%c0_72, %c0_73] : memref<128x128xf32, #tpu.memory_space<vmem>>, vector<128x128xf32>
    %c0_74 = arith.constant 0 : index
    %c0_75 = arith.constant 0 : index
    %119 = vector.load %arg5[%c0_74, %c0_75] : memref<1x128xf32, #tpu.memory_space<vmem>>, vector<1x128xf32>
    %120 = vector.broadcast %119 : vector<1x128xf32> to vector<128x128xf32>
    %121 = arith.addf %118, %120 : vector<128x128xf32>
    %c0_76 = arith.constant 0 : index
    %c0_77 = arith.constant 0 : index
    %c0_78 = arith.constant 0 : index
    %122 = vector.load %arg1[%c0_76, %c0_77, %c0_78] : memref<1x128x128xf32, #tpu.memory_space<vmem>>, vector<1x128x128xf32>
    %123 = vector.shape_cast %122 : vector<1x128x128xf32> to vector<128x128xf32>
    %124 = arith.addf %123, %121 : vector<128x128xf32>
    %c0_79 = arith.constant 0 : index
    %c0_80 = arith.constant 0 : index
    %125 = vector.load %arg8[%c0_79, %c0_80] : memref<1x128xf32, #tpu.memory_space<vmem>>, vector<1x128xf32>
    %c0_81 = arith.constant 0 : index
    %c0_82 = arith.constant 0 : index
    %126 = vector.load %arg9[%c0_81, %c0_82] : memref<1x128xf32, #tpu.memory_space<vmem>>, vector<1x128xf32>
    %cst_83 = arith.constant dense<0.000000e+00> : vector<128xf32>
    %127 = vector.multi_reduction <add>, %124, %cst_83 [1] : vector<128x128xf32> to vector<128xf32>
    %128 = vector.shape_cast %127 : vector<128xf32> to vector<128x1xf32>
    %cst_84 = arith.constant 1.280000e+02 : f32
    %129 = vector.broadcast %cst_84 : f32 to vector<128x1xf32>
    %130 = arith.divf %128, %129 : vector<128x1xf32>
    %131 = vector.broadcast %130 : vector<128x1xf32> to vector<128x128xf32>
    %132 = arith.subf %124, %131 : vector<128x128xf32>
    %133 = arith.mulf %132, %132 : vector<128x128xf32>
    %cst_85 = arith.constant dense<0.000000e+00> : vector<128xf32>
    %134 = vector.multi_reduction <add>, %133, %cst_85 [1] : vector<128x128xf32> to vector<128xf32>
    %135 = vector.shape_cast %134 : vector<128xf32> to vector<128x1xf32>
    %cst_86 = arith.constant 1.280000e+02 : f32
    %136 = vector.broadcast %cst_86 : f32 to vector<128x1xf32>
    %137 = arith.divf %135, %136 : vector<128x1xf32>
    %cst_87 = arith.constant 9.99999974E-6 : f32
    %138 = vector.broadcast %cst_87 : f32 to vector<128x1xf32>
    %139 = arith.addf %137, %138 : vector<128x1xf32>
    %140 = math.rsqrt %139 : vector<128x1xf32>
    %141 = vector.broadcast %140 : vector<128x1xf32> to vector<128x128xf32>
    %142 = arith.mulf %132, %141 : vector<128x128xf32>
    %143 = vector.broadcast %125 : vector<1x128xf32> to vector<128x128xf32>
    %144 = arith.mulf %142, %143 : vector<128x128xf32>
    %145 = vector.broadcast %126 : vector<1x128xf32> to vector<128x128xf32>
    %146 = arith.addf %144, %145 : vector<128x128xf32>
    %147 = arith.truncf %146 : vector<128x128xf32> to vector<128x128xbf16>
    %c0_88 = arith.constant 0 : index
    %c0_89 = arith.constant 0 : index
    %148 = vector.load %arg10[%c0_88, %c0_89] : memref<128x256xbf16, #tpu.memory_space<vmem>>, vector<128x256xbf16>
    %cst_90 = arith.constant dense<0.000000e+00> : vector<128x256xf32>
    %149 = tpu.matmul %147, %148, %cst_90 {dimension_numbers = #tpu.dot_dimension_numbers<[1], [0], [0], [1], [0, 0, 1, 1], [], []>} : vector<128x128xbf16>, vector<128x256xbf16>, vector<128x256xf32> -> vector<128x256xf32>
    %c0_91 = arith.constant 0 : index
    %c0_92 = arith.constant 0 : index
    %150 = vector.load %arg11[%c0_91, %c0_92] : memref<1x256xf32, #tpu.memory_space<vmem>>, vector<1x256xf32>
    %151 = vector.broadcast %150 : vector<1x256xf32> to vector<128x256xf32>
    %152 = arith.addf %149, %151 : vector<128x256xf32>
    %cst_93 = arith.constant 0.000000e+00 : f32
    %153 = vector.broadcast %cst_93 : f32 to vector<128x256xf32>
    %154 = arith.maximumf %152, %153 : vector<128x256xf32>
    %155 = arith.truncf %154 : vector<128x256xf32> to vector<128x256xbf16>
    %c0_94 = arith.constant 0 : index
    %c0_95 = arith.constant 0 : index
    %156 = vector.load %arg12[%c0_94, %c0_95] : memref<256x128xbf16, #tpu.memory_space<vmem>>, vector<256x128xbf16>
    %cst_96 = arith.constant dense<0.000000e+00> : vector<128x128xf32>
    %157 = tpu.matmul %155, %156, %cst_96 {dimension_numbers = #tpu.dot_dimension_numbers<[1], [0], [0], [1], [0, 0, 1, 1], [], []>} : vector<128x256xbf16>, vector<256x128xbf16>, vector<128x128xf32> -> vector<128x128xf32>
    %c0_97 = arith.constant 0 : index
    %c0_98 = arith.constant 0 : index
    %158 = vector.load %arg13[%c0_97, %c0_98] : memref<1x128xf32, #tpu.memory_space<vmem>>, vector<1x128xf32>
    %159 = vector.broadcast %158 : vector<1x128xf32> to vector<128x128xf32>
    %160 = arith.addf %157, %159 : vector<128x128xf32>
    %161 = arith.addf %124, %160 : vector<128x128xf32>
    %c0_99 = arith.constant 0 : index
    %c0_100 = arith.constant 0 : index
    %c0_101 = arith.constant 0 : index
    %162 = vector.load %arg14[%c0_99, %c0_100, %c0_101] : memref<1x128x128xf32, #tpu.memory_space<vmem>>, vector<1x128x128xf32>
    %163 = vector.shape_cast %162 : vector<1x128x128xf32> to vector<128x128xf32>
    %164 = vector.shape_cast %161 : vector<128x128xf32> to vector<1x128x128xf32>
    tpu.vector_store %arg14[%c0_99, %c0_100, %c0_101], %164 {strides = array<i32>} : memref<1x128x128xf32, #tpu.memory_space<vmem>>, vector<1x128x128xf32>,
    return
  }
  func.func @transform_0(%arg0: i32) -> (i32, i32, i32) {
    %c0_i32 = arith.constant 0 : i32
    %c0_i32_0 = arith.constant 0 : i32
    %c0_i32_1 = arith.constant 0 : i32
    return %arg0, %c0_i32, %c0_i32_0 : i32, i32, i32
  }
  func.func @transform_1(%arg0: i32) -> (i32, i32) {
    %c0_i32 = arith.constant 0 : i32
    %c0_i32_0 = arith.constant 0 : i32
    %c0_i32_1 = arith.constant 0 : i32
    return %c0_i32, %c0_i32_0 : i32, i32
  }
  func.func @transform_2(%arg0: i32) -> (i32, i32) {
    %c0_i32 = arith.constant 0 : i32
    %c0_i32_0 = arith.constant 0 : i32
    %c0_i32_1 = arith.constant 0 : i32
    return %c0_i32, %c0_i32_0 : i32, i32
  }
  func.func @transform_3(%arg0: i32) -> (i32, i32) {
    %c0_i32 = arith.constant 0 : i32
    %c0_i32_0 = arith.constant 0 : i32
    %c0_i32_1 = arith.constant 0 : i32
    return %c0_i32, %c0_i32_0 : i32, i32
  }
  func.func @transform_4(%arg0: i32) -> (i32, i32) {
    %c0_i32 = arith.constant 0 : i32
    %c0_i32_0 = arith.constant 0 : i32
    %c0_i32_1 = arith.constant 0 : i32
    return %c0_i32, %c0_i32_0 : i32, i32
  }
  func.func @transform_5(%arg0: i32) -> (i32, i32) {
    %c0_i32 = arith.constant 0 : i32
    %c0_i32_0 = arith.constant 0 : i32
    %c0_i32_1 = arith.constant 0 : i32
    return %c0_i32, %c0_i32_0 : i32, i32
  }
  func.func @transform_6(%arg0: i32) -> (i32, i32) {
    %c0_i32 = arith.constant 0 : i32
    %c0_i32_0 = arith.constant 0 : i32
    %c0_i32_1 = arith.constant 0 : i32
    return %c0_i32, %c0_i32_0 : i32, i32
  }
  func.func @transform_7(%arg0: i32) -> (i32, i32) {
    %c0_i32 = arith.constant 0 : i32
    %c0_i32_0 = arith.constant 0 : i32
    %c0_i32_1 = arith.constant 0 : i32
    return %c0_i32, %c0_i32_0 : i32, i32
  }
  func.func @transform_8(%arg0: i32) -> (i32, i32) {
    %c0_i32 = arith.constant 0 : i32
    %c0_i32_0 = arith.constant 0 : i32
    %c0_i32_1 = arith.constant 0 : i32
    return %c0_i32, %c0_i32_0 : i32, i32
  }
  func.func @transform_9(%arg0: i32) -> (i32, i32) {
    %c0_i32 = arith.constant 0 : i32
    %c0_i32_0 = arith.constant 0 : i32
    %c0_i32_1 = arith.constant 0 : i32
    return %c0_i32, %c0_i32_0 : i32, i32
  }
  func.func @transform_10(%arg0: i32) -> (i32, i32) {
    %c0_i32 = arith.constant 0 : i32
    %c0_i32_0 = arith.constant 0 : i32
    %c0_i32_1 = arith.constant 0 : i32
    return %c0_i32, %c0_i32_0 : i32, i32
  }
  func.func @transform_11(%arg0: i32) -> (i32, i32) {
    %c0_i32 = arith.constant 0 : i32
    %c0_i32_0 = arith.constant 0 : i32
    %c0_i32_1 = arith.constant 0 : i32
    return %c0_i32, %c0_i32_0 : i32, i32
  }
  func.func @transform_12(%arg0: i32) -> (i32, i32) {
    %c0_i32 = arith.constant 0 : i32
    %c0_i32_0 = arith.constant 0 : i32
    %c0_i32_1 = arith.constant 0 : i32
    return %c0_i32, %c0_i32_0 : i32, i32
  }
  func.func @transform_13(%arg0: i32) -> (i32, i32, i32) {
    %c0_i32 = arith.constant 0 : i32
    %c0_i32_0 = arith.constant 0 : i32
    %c0_i32_1 = arith.constant 0 : i32
    return %arg0, %c0_i32, %c0_i32_0 : i32, i32, i32
  }
}

</mosaic_0001>

<llo_original>
// kernel: tpu_custom_call.1
$region0: #{tpu_custom_call.1}
  #allocation0 [shape = 'u32[]', space=smem, size = 0x4, offset = 0x4, fixed_abs, tag = 'smem constant byte address 0x4 - core index']
  #allocation1 [shape = 'u32[72,128]{1,0:T(1,128)}', space=vmem, size = 0x9000, scoped, tag = 'internal scratch']
  #allocation2 [shape = 'bf16[128,384]{1,0:T(8,128)(2,1)}', space=vmem, size = 0x18000, scoped, tag = 'scratch operand']
  #allocation3 [shape = 'f32[128,128]{1,0:T(8,128)}', space=vmem, size = 0x10000, scoped, tag = 'scratch operand']
  %s0 = inlined_call_operand.hbm [shape: f32[2,128,128], index: 0, kind: input, shape index: {}]
  %s1 = inlined_call_operand.hbm [shape: bf16[128,384], index: 1, kind: input, shape index: {}]
  %s2 = inlined_call_operand.hbm [shape: f32[1,384], index: 2, kind: input, shape index: {}]
  %s3 = inlined_call_operand.hbm [shape: bf16[128,128], index: 3, kind: input, shape index: {}]
  %s4 = inlined_call_operand.vmem [shape: f32[1,128], index: 4, kind: input, shape index: {}]
  %s5 = inlined_call_operand.vmem [shape: f32[1,128], index: 5, kind: input, shape index: {}]
  %s6 = inlined_call_operand.vmem [shape: f32[1,128], index: 6, kind: input, shape index: {}]
  %s7 = inlined_call_operand.vmem [shape: f32[1,128], index: 7, kind: input, shape index: {}]
  %s8 = inlined_call_operand.vmem [shape: f32[1,128], index: 8, kind: input, shape index: {}]
  %s9 = inlined_call_operand.hbm [shape: bf16[128,256], index: 9, kind: input, shape index: {}]
  %s10 = inlined_call_operand.vmem [shape: f32[1,256], index: 10, kind: input, shape index: {}]
  %s11 = inlined_call_operand.hbm [shape: bf16[256,128], index: 11, kind: input, shape index: {}]
  %s12 = inlined_call_operand.vmem [shape: f32[1,128], index: 12, kind: input, shape index: {}]
  %s13 = inlined_call_operand.hbm [shape: f32[2,128,128], index: 13, kind: output, shape index: {}]
  %s14 = sld [smem:[#allocation0]]
  $region109: #{tpu_custom_call.1} parent=0
    _
  %s16 = ssub.s32 1, %s14
  %s17 = scalar_select 0, %s16, %s14
  $region1: #{tpu_custom_call.1} parent=0
    #allocation4 [shape = 'u8[131072]{0}', space=vmem, size = 0x20000, scoped, tag = 'input window, operand 0']
    #allocation5 [shape = 's32[2]{0}', space=sflag, size = 0x8, scoped, tag = 'scoped memory for tpu_custom_call.1']
    #allocation6 [shape = 's32[2]{0}', space=sflag, size = 0x8, scoped, tag = 'scoped memory for tpu_custom_call.1']
    #allocation7 [shape = 'u8[98304]{0}', space=vmem, size = 0x18000, scoped, tag = 'input window, operand 1, single buffered']
    #allocation8 [shape = 's32[1]{0}', space=sflag, size = 0x4, scoped, tag = 'scoped memory for tpu_custom_call.1']
    #allocation9 [shape = 'u8[1536]{0}', space=vmem, size = 0x800, scoped, tag = 'input window, operand 2, single buffered']
    #allocation10 [shape = 'u8[32768]{0}', space=vmem, size = 0x8000, scoped, tag = 'input window, operand 3, single buffered']
    #allocation11 [shape = 's32[1]{0}', space=sflag, size = 0x4, scoped, tag = 'scoped memory for tpu_custom_call.1']
    #allocation12 [shape = 'u8[65536]{0}', space=vmem, size = 0x10000, scoped, tag = 'input window, operand 9, single buffered']
    #allocation13 [shape = 'u8[65536]{0}', space=vmem, size = 0x10000, scoped, tag = 'input window, operand 11, single buffered']
    #allocation14 [shape = 's32[1]{0}', space=sflag, size = 0x4, scoped, tag = 'scoped memory for tpu_custom_call.1']
    #allocation15 [shape = 'u8[131072]{0}', space=vmem, size = 0x20000, scoped, tag = 'output window, operand 0']
    %18 = vsyncpa [#allocation5], 0
    %s19 = scalar_lea.sflag [#allocation5], 1
    %20 = vsyncpa %s19, 0
    %21 = vsyncpa [#allocation8], 0
    %22 = vsyncpa [#allocation11], 0
    %23 = vsyncpa [#allocation14], 0
    %24 = vsyncpa [#allocation6], 0
    %s25 = scalar_lea.sflag [#allocation6], 1
    %26 = vsyncpa %s25, 0
    loop: start=0, step=1, limit=4
    $region2: #{tpu_custom_call.1} parent=1 // loop_pre_header
      _
    $region3: #{tpu_custom_call.1} parent=1 // loop_header
      %s28 = sphi 0, %s32
      %p29 = scmp.ge.s32.totalorder %s28, 4
      %s38 = sphi 0, %s40
      %s41 = sphi 0, %s38
      %s42 = sphi 0, %s41
      %s58 = sphi 0, %s42
      %s62 = sphi 0, %s62
      %s64 = sphi 0, %s62
      %s65 = sphi 0, %s64
      %s79 = sphi 0, %s65
      %s83 = sphi 0, %s83
      %s85 = sphi 0, %s83
      %s86 = sphi 0, %s85
      %s100 = sphi 0, %s86
      %s104 = sphi 0, %s104
      %s106 = sphi 0, %s104
      %s107 = sphi 0, %s106
      %s121 = sphi 0, %s107
      %s125 = sphi 0, %s125
      %s127 = sphi 0, %s125
      %s128 = sphi 0, %s127
      %s142 = sphi 0, %s128
      %s146 = sphi 0, %s146
      %s148 = sphi 0, %s146
      %s149 = sphi 0, %s148
      %s163 = sphi 0, %s149
      %s167 = sphi 0, %s167
      %s169 = sphi 0, %s167
      %s170 = sphi 0, %s169
      %s184 = sphi 0, %s170
      %s188 = sphi 0, %s188
      %s190 = sphi 0, %s188
      %s191 = sphi 0, %s190
      %s205 = sphi 0, %s191
      %s209 = sphi 0, %s209
      %s211 = sphi 0, %s209
      %s212 = sphi 0, %s211
      %s226 = sphi 0, %s212
      %s230 = sphi 0, %s230
      %s232 = sphi 0, %s230
      %s233 = sphi 0, %s232
      %s247 = sphi 0, %s233
      %s251 = sphi 0, %s251
      %s253 = sphi 0, %s251
      %s254 = sphi 0, %s253
      %s268 = sphi 0, %s254
      %s272 = sphi 0, %s272
      %s274 = sphi 0, %s272
      %s275 = sphi 0, %s274
      %s289 = sphi 0, %s275
      %s293 = sphi 0, %s293
      %s295 = sphi 0, %s293
      %s296 = sphi 0, %s295
      %s310 = sphi 0, %s296
      %s316 = sphi 0, %s318
      %s319 = sphi 0, %s316
      %s320 = sphi 0, %s319
      %s336 = sphi 0, %s320
    $region4: #{tpu_custom_call.1} parent=1 // loop_header_branch
      %31 = sbr.rel (%p29) target = $region8
    $region5: #{tpu_custom_call.1} parent=1 // loop_body
      %s33 = ssub.s32 %s28, 1
      %s34 = ssub.s32 %s28, 2
      %s35 = sadd.s32 %s28, 1
      %s36 = ssub.s32 %s28, %s35
      %p37 = scmp.eq.s32.totalorder %s36, 0
      %s39 = sadd.s32 %s38, 1
      %s40 = scalar_select %p37, %s38, %s39
      %p43 = pneg %p37
      %p44 = scmp.eq.s32.totalorder %s28, 1
      %p45 = por %p43, %p44
      %p46 = scmp.ne.s32.totalorder %s38, %s41
      %p47 = scmp.eq.s32.totalorder %s28, 0
      %p48 = por %p46, %p47
      %p49 = scmp.ne.s32.totalorder %s38, %s41
      %p50 = scmp.eq.s32.totalorder %s33, 1
      %p51 = por %p49, %p50
      %p52 = scmp.ne.s32.totalorder %s41, %s42
      %p53 = scmp.eq.s32.totalorder %s33, 0
      %p54 = por %p52, %p53
      %p55 = scmp.ne.s32.totalorder %s41, %s42
      %p56 = scmp.eq.s32.totalorder %s34, 1
      %p57 = por %p55, %p56
      %p59 = scmp.ne.s32.totalorder %s42, %s58
      %p60 = scmp.eq.s32.totalorder %s34, 0
      %p61 = por %p59, %p60
      %s63 = sadd.s32 %s62, 1
      %p66 = scmp.eq.s32.totalorder %s28, 1
      %p67 = scmp.ne.s32.totalorder %s62, %s64
      %p68 = scmp.eq.s32.totalorder %s28, 0
      %p69 = por %p67, %p68
      %p70 = scmp.ne.s32.totalorder %s62, %s64
      %p71 = scmp.eq.s32.totalorder %s33, 1
      %p72 = por %p70, %p71
      %p73 = scmp.ne.s32.totalorder %s64, %s65
      %p74 = scmp.eq.s32.totalorder %s33, 0
      %p75 = por %p73, %p74
      %p76 = scmp.ne.s32.totalorder %s64, %s65
      %p77 = scmp.eq.s32.totalorder %s34, 1
      %p78 = por %p76, %p77
      %p80 = scmp.ne.s32.totalorder %s65, %s79
      %p81 = scmp.eq.s32.totalorder %s34, 0
      %p82 = por %p80, %p81
      %s84 = sadd.s32 %s83, 1
      %p87 = scmp.eq.s32.totalorder %s28, 1
      %p88 = scmp.ne.s32.totalorder %s83, %s85
      %p89 = scmp.eq.s32.totalorder %s28, 0
      %p90 = por %p88, %p89
      %p91 = scmp.ne.s32.totalorder %s83, %s85
      %p92 = scmp.eq.s32.totalorder %s33, 1
      %p93 = por %p91, %p92
      %p94 = scmp.ne.s32.totalorder %s85, %s86
      %p95 = scmp.eq.s32.totalorder %s33, 0
      %p96 = por %p94, %p95
      %p97 = scmp.ne.s32.totalorder %s85, %s86
      %p98 = scmp.eq.s32.totalorder %s34, 1
      %p99 = por %p97, %p98
      %p101 = scmp.ne.s32.totalorder %s86, %s100
      %p102 = scmp.eq.s32.totalorder %s34, 0
      %p103 = por %p101, %p102
      %s105 = sadd.s32 %s104, 1
      %p108 = scmp.eq.s32.totalorder %s28, 1
      %p109 = scmp.ne.s32.totalorder %s104, %s106
      %p110 = scmp.eq.s32.totalorder %s28, 0
      %p111 = por %p109, %p110
      %p112 = scmp.ne.s32.totalorder %s104, %s106
      %p113 = scmp.eq.s32.totalorder %s33, 1
      %p114 = por %p112, %p113
      %p115 = scmp.ne.s32.totalorder %s106, %s107
      %p116 = scmp.eq.s32.totalorder %s33, 0
      %p117 = por %p115, %p116
      %p118 = scmp.ne.s32.totalorder %s106, %s107
      %p119 = scmp.eq.s32.totalorder %s34, 1
      %p120 = por %p118, %p119
      %p122 = scmp.ne.s32.totalorder %s107, %s121
      %p123 = scmp.eq.s32.totalorder %s34, 0
      %p124 = por %p122, %p123
      %s126 = sadd.s32 %s125, 1
      %p129 = scmp.eq.s32.totalorder %s28, 1
      %p130 = scmp.ne.s32.totalorder %s125, %s127
      %p131 = scmp.eq.s32.totalorder %s28, 0
      %p132 = por %p130, %p131
      %p133 = scmp.ne.s32.totalorder %s125, %s127
      %p134 = scmp.eq.s32.totalorder %s33, 1
      %p135 = por %p133, %p134
      %p136 = scmp.ne.s32.totalorder %s127, %s128
      %p137 = scmp.eq.s32.totalorder %s33, 0
      %p138 = por %p136, %p137
      %p139 = scmp.ne.s32.totalorder %s127, %s128
      %p140 = scmp.eq.s32.totalorder %s34, 1
      %p141 = por %p139, %p140
      %p143 = scmp.ne.s32.totalorder %s128, %s142
      %p144 = scmp.eq.s32.totalorder %s34, 0
      %p145 = por %p143, %p144
      %s147 = sadd.s32 %s146, 1
      %p150 = scmp.eq.s32.totalorder %s28, 1
      %p151 = scmp.ne.s32.totalorder %s146, %s148
      %p152 = scmp.eq.s32.totalorder %s28, 0
      %p153 = por %p151, %p152
      %p154 = scmp.ne.s32.totalorder %s146, %s148
      %p155 = scmp.eq.s32.totalorder %s33, 1
      %p156 = por %p154, %p155
      %p157 = scmp.ne.s32.totalorder %s148, %s149
      %p158 = scmp.eq.s32.totalorder %s33, 0
      %p159 = por %p157, %p158
      %p160 = scmp.ne.s32.totalorder %s148, %s149
      %p161 = scmp.eq.s32.totalorder %s34, 1
      %p162 = por %p160, %p161
      %p164 = scmp.ne.s32.totalorder %s149, %s163
      %p165 = scmp.eq.s32.totalorder %s34, 0
      %p166 = por %p164, %p165
      %s168 = sadd.s32 %s167, 1
      %p171 = scmp.eq.s32.totalorder %s28, 1
      %p172 = scmp.ne.s32.totalorder %s167, %s169
      %p173 = scmp.eq.s32.totalorder %s28, 0
      %p174 = por %p172, %p173
      %p175 = scmp.ne.s32.totalorder %s167, %s169
      %p176 = scmp.eq.s32.totalorder %s33, 1
      %p177 = por %p175, %p176
      %p178 = scmp.ne.s32.totalorder %s169, %s170
      %p179 = scmp.eq.s32.totalorder %s33, 0
      %p180 = por %p178, %p179
      %p181 = scmp.ne.s32.totalorder %s169, %s170
      %p182 = scmp.eq.s32.totalorder %s34, 1
      %p183 = por %p181, %p182
      %p185 = scmp.ne.s32.totalorder %s170, %s184
      %p186 = scmp.eq.s32.totalorder %s34, 0
      %p187 = por %p185, %p186
      %s189 = sadd.s32 %s188, 1
      %p192 = scmp.eq.s32.totalorder %s28, 1
      %p193 = scmp.ne.s32.totalorder %s188, %s190
      %p194 = scmp.eq.s32.totalorder %s28, 0
      %p195 = por %p193, %p194
      %p196 = scmp.ne.s32.totalorder %s188, %s190
      %p197 = scmp.eq.s32.totalorder %s33, 1
      %p198 = por %p196, %p197
      %p199 = scmp.ne.s32.totalorder %s190, %s191
      %p200 = scmp.eq.s32.totalorder %s33, 0
      %p201 = por %p199, %p200
      %p202 = scmp.ne.s32.totalorder %s190, %s191
      %p203 = scmp.eq.s32.totalorder %s34, 1
      %p204 = por %p202, %p203
      %p206 = scmp.ne.s32.totalorder %s191, %s205
      %p207 = scmp.eq.s32.totalorder %s34, 0
      %p208 = por %p206, %p207
      %s210 = sadd.s32 %s209, 1
      %p213 = scmp.eq.s32.totalorder %s28, 1
      %p214 = scmp.ne.s32.totalorder %s209, %s211
      %p215 = scmp.eq.s32.totalorder %s28, 0
      %p216 = por %p214, %p215
      %p217 = scmp.ne.s32.totalorder %s209, %s211
      %p218 = scmp.eq.s32.totalorder %s33, 1
      %p219 = por %p217, %p218
      %p220 = scmp.ne.s32.totalorder %s211, %s212
      %p221 = scmp.eq.s32.totalorder %s33, 0
      %p222 = por %p220, %p221
      %p223 = scmp.ne.s32.totalorder %s211, %s212
      %p224 = scmp.eq.s32.totalorder %s34, 1
      %p225 = por %p223, %p224
      %p227 = scmp.ne.s32.totalorder %s212, %s226
      %p228 = scmp.eq.s32.totalorder %s34, 0
      %p229 = por %p227, %p228
      %s231 = sadd.s32 %s230, 1
      %p234 = scmp.eq.s32.totalorder %s28, 1
      %p235 = scmp.ne.s32.totalorder %s230, %s232
      %p236 = scmp.eq.s32.totalorder %s28, 0
      %p237 = por %p235, %p236
      %p238 = scmp.ne.s32.totalorder %s230, %s232
      %p239 = scmp.eq.s32.totalorder %s33, 1
      %p240 = por %p238, %p239
      %p241 = scmp.ne.s32.totalorder %s232, %s233
      %p242 = scmp.eq.s32.totalorder %s33, 0
      %p243 = por %p241, %p242
      %p244 = scmp.ne.s32.totalorder %s232, %s233
      %p245 = scmp.eq.s32.totalorder %s34, 1
      %p246 = por %p244, %p245
      %p248 = scmp.ne.s32.totalorder %s233, %s247
      %p249 = scmp.eq.s32.totalorder %s34, 0
      %p250 = por %p248, %p249
      %s252 = sadd.s32 %s251, 1
      %p255 = scmp.eq.s32.totalorder %s28, 1
      %p256 = scmp.ne.s32.totalorder %s251, %s253
      %p257 = scmp.eq.s32.totalorder %s28, 0
      %p258 = por %p256, %p257
      %p259 = scmp.ne.s32.totalorder %s251, %s253
      %p260 = scmp.eq.s32.totalorder %s33, 1
      %p261 = por %p259, %p260
      %p262 = scmp.ne.s32.totalorder %s253, %s254
      %p263 = scmp.eq.s32.totalorder %s33, 0
      %p264 = por %p262, %p263
      %p265 = scmp.ne.s32.totalorder %s253, %s254
      %p266 = scmp.eq.s32.totalorder %s34, 1
      %p267 = por %p265, %p266
      %p269 = scmp.ne.s32.totalorder %s254, %s268
      %p270 = scmp.eq.s32.totalorder %s34, 0
      %p271 = por %p269, %p270
      %s273 = sadd.s32 %s272, 1
      %p276 = scmp.eq.s32.totalorder %s28, 1
      %p277 = scmp.ne.s32.totalorder %s272, %s274
      %p278 = scmp.eq.s32.totalorder %s28, 0
      %p279 = por %p277, %p278
      %p280 = scmp.ne.s32.totalorder %s272, %s274
      %p281 = scmp.eq.s32.totalorder %s33, 1
      %p282 = por %p280, %p281
      %p283 = scmp.ne.s32.totalorder %s274, %s275
      %p284 = scmp.eq.s32.totalorder %s33, 0
      %p285 = por %p283, %p284
      %p286 = scmp.ne.s32.totalorder %s274, %s275
      %p287 = scmp.eq.s32.totalorder %s34, 1
      %p288 = por %p286, %p287
      %p290 = scmp.ne.s32.totalorder %s275, %s289
      %p291 = scmp.eq.s32.totalorder %s34, 0
      %p292 = por %p290, %p291
      %s294 = sadd.s32 %s293, 1
      %p297 = scmp.eq.s32.totalorder %s28, 1
      %p298 = scmp.ne.s32.totalorder %s293, %s295
      %p299 = scmp.eq.s32.totalorder %s28, 0
      %p300 = por %p298, %p299
      %p301 = scmp.ne.s32.totalorder %s293, %s295
      %p302 = scmp.eq.s32.totalorder %s33, 1
      %p303 = por %p301, %p302
      %p304 = scmp.ne.s32.totalorder %s295, %s296
      %p305 = scmp.eq.s32.totalorder %s33, 0
      %p306 = por %p304, %p305
      %p307 = scmp.ne.s32.totalorder %s295, %s296
      %p308 = scmp.eq.s32.totalorder %s34, 1
      %p309 = por %p307, %p308
      %p311 = scmp.ne.s32.totalorder %s296, %s310
      %p312 = scmp.eq.s32.totalorder %s34, 0
      %p313 = por %p311, %p312
      %s314 = ssub.s32 %s28, %s35
      %p315 = scmp.eq.s32.totalorder %s314, 0
      %s317 = sadd.s32 %s316, 1
      %s318 = scalar_select %p315, %s316, %s317
      %p321 = pneg %p315
      %p322 = scmp.eq.s32.totalorder %s28, 1
      %p323 = por %p321, %p322
      %p324 = scmp.ne.s32.totalorder %s316, %s319
      %p325 = scmp.eq.s32.totalorder %s28, 0
      %p326 = por %p324, %p325
      %p327 = scmp.ne.s32.totalorder %s316, %s319
      %p328 = scmp.eq.s32.totalorder %s33, 1
      %p329 = por %p327, %p328
      %p330 = scmp.ne.s32.totalorder %s319, %s320
      %p331 = scmp.eq.s32.totalorder %s33, 0
      %p332 = por %p330, %p331
      %p333 = scmp.ne.s32.totalorder %s319, %s320
      %p334 = scmp.eq.s32.totalorder %s34, 1
      %p335 = por %p333, %p334
      %p337 = scmp.ne.s32.totalorder %s320, %s336
      %p338 = scmp.eq.s32.totalorder %s34, 0
      %p339 = por %p337, %p338
      %p340 = scmp.le.s32.totalorder 1, %s28
      %p341 = scmp.lt.s32.totalorder %s28, 3
      %p342 = pnand %p340, %p341
      %p343 = pneg %p342
      // Predicated region
      $region9: #{tpu_custom_call.1} parent=5 // pred_check
        _
      $region10: #{tpu_custom_call.1} parent=5 // pred_check_branch
        %345 = sbr.rel (%p342) target = $region12
      $region11: #{tpu_custom_call.1} parent=5 // pred_region
        %s346 = ssub.s32 %s28, 1
        // Predicated region
        $region13: #{tpu_custom_call.1} parent=11 // pred_check
          %p347 = pneg %p75
        $region14: #{tpu_custom_call.1} parent=11 // pred_check_branch
          %349 = sbr.rel (%p347) target = $region16
        $region15: #{tpu_custom_call.1} parent=11 // pred_region
          %351 = vsyncadd [#allocation8], 0
          %s352 = sshll.u32 %s1, 4
          %s353 = int_to_ptr.hbm [resolvable:$true] %s352
          %s354 = sshll.u32 [#allocation7], 4
          %s355 = int_to_ptr.vmem [resolvable:$true] %s354
          %360 = dma.hbm_to_vmem [thread:$0]  %s353, 3072, %s355, [#allocation8], 192, 192, 12
        $region16: #{tpu_custom_call.1} parent=11 // pred_fallthru
          _
        // Predicated region
        $region17: #{tpu_custom_call.1} parent=11 // pred_check
          %p361 = pneg %p96
        $region18: #{tpu_custom_call.1} parent=11 // pred_check_branch
          %363 = sbr.rel (%p361) target = $region20
        $region19: #{tpu_custom_call.1} parent=11 // pred_region
          %365 = vsyncadd [#allocation8], 0
          %s367 = sshll.u32 %s2, 4
          %s368 = int_to_ptr.hbm [resolvable:$true] %s367
          %s369 = sshll.u32 [#allocation9], 4
          %s370 = int_to_ptr.vmem [resolvable:$true] %s369
          %372 = dma.hbm_to_vmem [thread:$0]  %s368, 48, %s370, [#allocation8]
        $region20: #{tpu_custom_call.1} parent=11 // pred_fallthru
          _
        // Predicated region
        $region21: #{tpu_custom_call.1} parent=11 // pred_check
          %p373 = pneg %p117
        $region22: #{tpu_custom_call.1} parent=11 // pred_check_branch
          %375 = sbr.rel (%p373) target = $region24
        $region23: #{tpu_custom_call.1} parent=11 // pred_region
          %377 = vsyncadd [#allocation11], 0
          %s378 = sshll.u32 %s3, 4
          %s379 = int_to_ptr.hbm [resolvable:$true] %s378
          %s380 = sshll.u32 [#allocation10], 4
          %s381 = int_to_ptr.vmem [resolvable:$true] %s380
          %386 = dma.hbm_to_vmem [thread:$0]  %s379, 1024, %s381, [#allocation11], 64, 64, 4
        $region24: #{tpu_custom_call.1} parent=11 // pred_fallthru
          _
        // Predicated region
        $region25: #{tpu_custom_call.1} parent=11 // pred_check
          %p387 = pneg %p138
        $region26: #{tpu_custom_call.1} parent=11 // pred_check_branch
          %389 = sbr.rel (%p387) target = $region28
        $region27: #{tpu_custom_call.1} parent=11 // pred_region
          _
        $region28: #{tpu_custom_call.1} parent=11 // pred_fallthru
          _
        // Predicated region
        $region29: #{tpu_custom_call.1} parent=11 // pred_check
          %p390 = pneg %p159
        $region30: #{tpu_custom_call.1} parent=11 // pred_check_branch
          %392 = sbr.rel (%p390) target = $region32
        $region31: #{tpu_custom_call.1} parent=11 // pred_region
          _
        $region32: #{tpu_custom_call.1} parent=11 // pred_fallthru
          _
        // Predicated region
        $region33: #{tpu_custom_call.1} parent=11 // pred_check
          %p393 = pneg %p180
        $region34: #{tpu_custom_call.1} parent=11 // pred_check_branch
          %395 = sbr.rel (%p393) target = $region36
        $region35: #{tpu_custom_call.1} parent=11 // pred_region
          _
        $region36: #{tpu_custom_call.1} parent=11 // pred_fallthru
          _
        // Predicated region
        $region37: #{tpu_custom_call.1} parent=11 // pred_check
          %p396 = pneg %p201
        $region38: #{tpu_custom_call.1} parent=11 // pred_check_branch
          %398 = sbr.rel (%p396) target = $region40
        $region39: #{tpu_custom_call.1} parent=11 // pred_region
          _
        $region40: #{tpu_custom_call.1} parent=11 // pred_fallthru
          _
        // Predicated region
        $region41: #{tpu_custom_call.1} parent=11 // pred_check
          %p399 = pneg %p222
        $region42: #{tpu_custom_call.1} parent=11 // pred_check_branch
          %401 = sbr.rel (%p399) target = $region44
        $region43: #{tpu_custom_call.1} parent=11 // pred_region
          _
        $region44: #{tpu_custom_call.1} parent=11 // pred_fallthru
          _
        // Predicated region
        $region45: #{tpu_custom_call.1} parent=11 // pred_check
          %p402 = pneg %p243
        $region46: #{tpu_custom_call.1} parent=11 // pred_check_branch
          %404 = sbr.rel (%p402) target = $region48
        $region47: #{tpu_custom_call.1} parent=11 // pred_region
          %406 = vsyncadd [#allocation11], 0
          %s407 = sshll.u32 %s9, 4
          %s408 = int_to_ptr.hbm [resolvable:$true] %s407
          %s409 = sshll.u32 [#allocation12], 4
          %s410 = int_to_ptr.vmem [resolvable:$true] %s409
          %415 = dma.hbm_to_vmem [thread:$0]  %s408, 2048, %s410, [#allocation11], 128, 128, 8
        $region48: #{tpu_custom_call.1} parent=11 // pred_fallthru
          _
        // Predicated region
        $region49: #{tpu_custom_call.1} parent=11 // pred_check
          %p416 = pneg %p264
        $region50: #{tpu_custom_call.1} parent=11 // pred_check_branch
          %418 = sbr.rel (%p416) target = $region52
        $region51: #{tpu_custom_call.1} parent=11 // pred_region
          _
        $region52: #{tpu_custom_call.1} parent=11 // pred_fallthru
          _
        // Predicated region
        $region53: #{tpu_custom_call.1} parent=11 // pred_check
          %p419 = pneg %p285
        $region54: #{tpu_custom_call.1} parent=11 // pred_check_branch
          %421 = sbr.rel (%p419) target = $region56
        $region55: #{tpu_custom_call.1} parent=11 // pred_region
          %423 = vsyncadd [#allocation14], 0
          %s424 = sshll.u32 %s11, 4
          %s425 = int_to_ptr.hbm [resolvable:$true] %s424
          %s426 = sshll.u32 [#allocation13], 4
          %s427 = int_to_ptr.vmem [resolvable:$true] %s426
          %432 = dma.hbm_to_vmem [thread:$0]  %s425, 2048, %s427, [#allocation14], 64, 64, 4
        $region56: #{tpu_custom_call.1} parent=11 // pred_fallthru
          _
        // Predicated region
        $region57: #{tpu_custom_call.1} parent=11 // pred_check
          %p433 = pneg %p306
        $region58: #{tpu_custom_call.1} parent=11 // pred_check_branch
          %435 = sbr.rel (%p433) target = $region60
        $region59: #{tpu_custom_call.1} parent=11 // pred_region
          _
        $region60: #{tpu_custom_call.1} parent=11 // pred_fallthru
          _
      $region12: #{tpu_custom_call.1} parent=5 // pred_fallthru
        _
      %p436 = scmp.lt.s32.totalorder %s28, 2
      // Predicated region
      $region61: #{tpu_custom_call.1} parent=5 // pred_check
        %p437 = pneg %p436
      $region62: #{tpu_custom_call.1} parent=5 // pred_check_branch
        %439 = sbr.rel (%p437) target = $region64
      $region63: #{tpu_custom_call.1} parent=5 // pred_region
        // Predicated region
        $region65: #{tpu_custom_call.1} parent=63 // pred_check
          %p440 = pneg %p48
        $region66: #{tpu_custom_call.1} parent=63 // pred_check_branch
          %442 = sbr.rel (%p440) target = $region68
        $region67: #{tpu_custom_call.1} parent=63 // pred_region
          %s443 = sand.u32 %s38, 1
          %s444 = scalar_lea.sflag [#allocation5], %s443
          %s445 = sand.u32 %s38, 1
          %s446 = smul.addr %s445, 128
          %s447 = scalar_lea.vmem [#allocation4], %s446
          %449 = vsyncadd %s444, 0
          %s450 = smul.addr %s28, 16
          %s451 = smul.addr %s450, 8
          %s452 = scalar_lea.hbm %s0, %s451
          %s453 = sshll.u32 %s452, 4
          %s454 = int_to_ptr.hbm [resolvable:$true] %s453
          %s455 = sshll.u32 %s447, 4
          %s456 = int_to_ptr.vmem [resolvable:$true] %s455
          %461 = dma.hbm_to_vmem [thread:$0]  %s454, 2048, %s456, %s444, 128, 128, 8
        $region68: #{tpu_custom_call.1} parent=63 // pred_fallthru
          _
      $region64: #{tpu_custom_call.1} parent=5 // pred_fallthru
        _
      %p462 = scmp.le.s32.totalorder 1, %s28
      %p463 = scmp.lt.s32.totalorder %s28, 3
      %p464 = pnand %p462, %p463
      %p465 = pneg %p464
      // Predicated region
      $region69: #{tpu_custom_call.1} parent=5 // pred_check
        _
      $region70: #{tpu_custom_call.1} parent=5 // pred_check_branch
        %467 = sbr.rel (%p464) target = $region72
      $region71: #{tpu_custom_call.1} parent=5 // pred_region
        %s468 = ssub.s32 %s28, 1
        %s469 = sand.u32 %s41, 1
        %s470 = scalar_lea.sflag [#allocation5], %s469
        %s471 = sand.u32 %s41, 1
        %s472 = smul.addr %s471, 128
        %s473 = scalar_lea.vmem [#allocation4], %s472
        // Predicated region
        $region73: #{tpu_custom_call.1} parent=71 // pred_check
          %p474 = pneg %p54
        $region74: #{tpu_custom_call.1} parent=71 // pred_check_branch
          %476 = sbr.rel (%p474) target = $region76
        $region75: #{tpu_custom_call.1} parent=71 // pred_region
          %478 = dma.done %s470, 2048
        $region76: #{tpu_custom_call.1} parent=71 // pred_fallthru
          _
        // Predicated region
        $region77: #{tpu_custom_call.1} parent=71 // pred_check
          %p479 = pneg %p75
        $region78: #{tpu_custom_call.1} parent=71 // pred_check_branch
          %481 = sbr.rel (%p479) target = $region80
        $region79: #{tpu_custom_call.1} parent=71 // pred_region
          %483 = dma.done [#allocation8], 3072
        $region80: #{tpu_custom_call.1} parent=71 // pred_fallthru
          _
        // Predicated region
        $region81: #{tpu_custom_call.1} parent=71 // pred_check
          %p484 = pneg %p96
        $region82: #{tpu_custom_call.1} parent=71 // pred_check_branch
          %486 = sbr.rel (%p484) target = $region84
        $region83: #{tpu_custom_call.1} parent=71 // pred_region
          %488 = dma.done [#allocation8], 48
        $region84: #{tpu_custom_call.1} parent=71 // pred_fallthru
          _
        // Predicated region
        $region85: #{tpu_custom_call.1} parent=71 // pred_check
          %p489 = pneg %p117
        $region86: #{tpu_custom_call.1} parent=71 // pred_check_branch
          %491 = sbr.rel (%p489) target = $region88
        $region87: #{tpu_custom_call.1} parent=71 // pred_region
          %493 = dma.done [#allocation11], 1024
        $region88: #{tpu_custom_call.1} parent=71 // pred_fallthru
          _
        // Predicated region
        $region89: #{tpu_custom_call.1} parent=71 // pred_check
          %p494 = pneg %p243
        $region90: #{tpu_custom_call.1} parent=71 // pred_check_branch
          %496 = sbr.rel (%p494) target = $region92
        $region91: #{tpu_custom_call.1} parent=71 // pred_region
          %498 = dma.done [#allocation11], 2048
        $region92: #{tpu_custom_call.1} parent=71 // pred_fallthru
          _
        // Predicated region
        $region93: #{tpu_custom_call.1} parent=71 // pred_check
          %p499 = pneg %p285
        $region94: #{tpu_custom_call.1} parent=71 // pred_check_branch
          %501 = sbr.rel (%p499) target = $region96
        $region95: #{tpu_custom_call.1} parent=71 // pred_region
          %503 = dma.done [#allocation14], 2048
        $region96: #{tpu_custom_call.1} parent=71 // pred_fallthru
          _
        %s504 = sand.u32 %s41, 1
        %s505 = scalar_lea.sflag [#allocation5], %s504
        %s506 = sand.u32 %s41, 1
        %s507 = smul.addr %s506, 128
        %s508 = scalar_lea.vmem [#allocation4], %s507
        %p509 = pneg %p54
        %p510 = pneg %p51
        %p511 = pneg %p75
        %p512 = pneg %p72
        %p513 = pneg %p96
        %p514 = pneg %p93
        %p515 = pneg %p117
        %p516 = pneg %p114
        %p517 = pneg %p138
        %p518 = pneg %p135
        %p519 = pneg %p159
        %p520 = pneg %p156
        %p521 = pneg %p180
        %p522 = pneg %p177
        %p523 = pneg %p201
        %p524 = pneg %p198
        %p525 = pneg %p222
        %p526 = pneg %p219
        %p527 = pneg %p243
        %p528 = pneg %p240
        %p529 = pneg %p264
        %p530 = pneg %p261
        %p531 = pneg %p285
        %p532 = pneg %p282
        %p533 = pneg %p306
        %p534 = pneg %p303
        %p535 = pneg %p332
        %p536 = pneg %p329
        %s537 = sand.u32 %s319, 1
        %s538 = scalar_lea.sflag [#allocation6], %s537
        %s539 = sand.u32 %s319, 1
        %s540 = smul.addr %s539, 128
        %s541 = scalar_lea.vmem [#allocation15], %s540
        %v543 = vld [vmem:[%s473] sm:$0xff]
        %v544 = vld [vmem:[%s473 + $0x8] sm:$0xff]
        %v545 = vld [vmem:[%s473 + $0x10] sm:$0xff]
        %v546 = vld [vmem:[%s473 + $0x18] sm:$0xff]
        %v547 = vld [vmem:[%s473 + $0x20] sm:$0xff]
        %v548 = vld [vmem:[%s473 + $0x28] sm:$0xff]
        %v549 = vld [vmem:[%s473 + $0x30] sm:$0xff]
        %v550 = vld [vmem:[%s473 + $0x38] sm:$0xff]
        %v551 = vld [vmem:[%s473 + $0x40] sm:$0xff]
        %v552 = vld [vmem:[%s473 + $0x48] sm:$0xff]
        %v553 = vld [vmem:[%s473 + $0x50] sm:$0xff]
        %v554 = vld [vmem:[%s473 + $0x58] sm:$0xff]
        %v555 = vld [vmem:[%s473 + $0x60] sm:$0xff]
        %v556 = vld [vmem:[%s473 + $0x68] sm:$0xff]
        %v557 = vld [vmem:[%s473 + $0x70] sm:$0xff]
        %v558 = vld [vmem:[%s473 + $0x78] sm:$0xff]
        %v559 = vld [vmem:[%s5] sm:$0x1]
        %v560 = vld [vmem:[%s6] sm:$0x1]
        %561 = vadd.xlane.f32.xlu0 %v543
        %v562 = vpop.xlane.xlu0 %561
        %563 = vadd.xlane.f32.xlu0 %v544
        %v564 = vpop.xlane.xlu0 %563
        %565 = vadd.xlane.f32.xlu0 %v545
        %v566 = vpop.xlane.xlu0 %565
        %567 = vadd.xlane.f32.xlu0 %v546
        %v568 = vpop.xlane.xlu0 %567
        %569 = vadd.xlane.f32.xlu0 %v547
        %v570 = vpop.xlane.xlu0 %569
        %571 = vadd.xlane.f32.xlu0 %v548
        %v572 = vpop.xlane.xlu0 %571
        %573 = vadd.xlane.f32.xlu0 %v549
        %v574 = vpop.xlane.xlu0 %573
        %575 = vadd.xlane.f32.xlu0 %v550
        %v576 = vpop.xlane.xlu0 %575
        %577 = vadd.xlane.f32.xlu0 %v551
        %v578 = vpop.xlane.xlu0 %577
        %579 = vadd.xlane.f32.xlu0 %v552
        %v580 = vpop.xlane.xlu0 %579
        %581 = vadd.xlane.f32.xlu0 %v553
        %v582 = vpop.xlane.xlu0 %581
        %583 = vadd.xlane.f32.xlu0 %v554
        %v584 = vpop.xlane.xlu0 %583
        %585 = vadd.xlane.f32.xlu0 %v555
        %v586 = vpop.xlane.xlu0 %585
        %587 = vadd.xlane.f32.xlu0 %v556
        %v588 = vpop.xlane.xlu0 %587
        %589 = vadd.xlane.f32.xlu0 %v557
        %v590 = vpop.xlane.xlu0 %589
        %591 = vadd.xlane.f32.xlu0 %v558
        %v592 = vpop.xlane.xlu0 %591
        %v593 = vrcp.pop 128.0
        %v594 = vmul.f32 128.0, %v593
        %v595 = vsub.f32 1.0, %v594
        %v596 = vmul.f32 %v593, %v595
        %v597 = vadd.f32 %v593, %v596
        %vm598 = vweird.f32 %v593
        %v599 = vsel %vm598, %v593, %v597
        %v600 = vmul.f32 %v562, %v599
        %v601 = vmul.f32 %v564, %v599
        %v602 = vmul.f32 %v566, %v599
        %v603 = vmul.f32 %v568, %v599
        %v604 = vmul.f32 %v570, %v599
        %v605 = vmul.f32 %v572, %v599
        %v606 = vmul.f32 %v574, %v599
        %v607 = vmul.f32 %v576, %v599
        %v608 = vmul.f32 %v578, %v599
        %v609 = vmul.f32 %v580, %v599
        %v610 = vmul.f32 %v582, %v599
        %v611 = vmul.f32 %v584, %v599
        %v612 = vmul.f32 %v586, %v599
        %v613 = vmul.f32 %v588, %v599
        %v614 = vmul.f32 %v590, %v599
        %v615 = vmul.f32 %v592, %v599
        %v616 = vsub.f32 %v543, %v600
        %v617 = vsub.f32 %v544, %v601
        %v618 = vsub.f32 %v545, %v602
        %v619 = vsub.f32 %v546, %v603
        %v620 = vsub.f32 %v547, %v604
        %v621 = vsub.f32 %v548, %v605
        %v622 = vsub.f32 %v549, %v606
        %v623 = vsub.f32 %v550, %v607
        %v624 = vsub.f32 %v551, %v608
        %v625 = vsub.f32 %v552, %v609
        %v626 = vsub.f32 %v553, %v610
        %v627 = vsub.f32 %v554, %v611
        %v628 = vsub.f32 %v555, %v612
        %v629 = vsub.f32 %v556, %v613
        %v630 = vsub.f32 %v557, %v614
        %v631 = vsub.f32 %v558, %v615
        %v632 = vmul.f32 %v616, %v616
        %v633 = vmul.f32 %v617, %v617
        %v634 = vmul.f32 %v618, %v618
        %v635 = vmul.f32 %v619, %v619
        %v636 = vmul.f32 %v620, %v620
        %v637 = vmul.f32 %v621, %v621
        %v638 = vmul.f32 %v622, %v622
        %v639 = vmul.f32 %v623, %v623
        %v640 = vmul.f32 %v624, %v624
        %v641 = vmul.f32 %v625, %v625
        %v642 = vmul.f32 %v626, %v626
        %v643 = vmul.f32 %v627, %v627
        %v644 = vmul.f32 %v628, %v628
        %v645 = vmul.f32 %v629, %v629
        %v646 = vmul.f32 %v630, %v630
        %v647 = vmul.f32 %v631, %v631
        %648 = vadd.xlane.f32.xlu0 %v632
        %v649 = vpop.xlane.xlu0 %648
        %650 = vadd.xlane.f32.xlu0 %v633
        %v651 = vpop.xlane.xlu0 %650
        %652 = vadd.xlane.f32.xlu0 %v634
        %v653 = vpop.xlane.xlu0 %652
        %654 = vadd.xlane.f32.xlu0 %v635
        %v655 = vpop.xlane.xlu0 %654
        %656 = vadd.xlane.f32.xlu0 %v636
        %v657 = vpop.xlane.xlu0 %656
        %658 = vadd.xlane.f32.xlu0 %v637
        %v659 = vpop.xlane.xlu0 %658
        %660 = vadd.xlane.f32.xlu0 %v638
        %v661 = vpop.xlane.xlu0 %660
        %662 = vadd.xlane.f32.xlu0 %v639
        %v663 = vpop.xlane.xlu0 %662
        %664 = vadd.xlane.f32.xlu0 %v640
        %v665 = vpop.xlane.xlu0 %664
        %666 = vadd.xlane.f32.xlu0 %v641
        %v667 = vpop.xlane.xlu0 %666
        %668 = vadd.xlane.f32.xlu0 %v642
        %v669 = vpop.xlane.xlu0 %668
        %670 = vadd.xlane.f32.xlu0 %v643
        %v671 = vpop.xlane.xlu0 %670
        %672 = vadd.xlane.f32.xlu0 %v644
        %v673 = vpop.xlane.xlu0 %672
        %674 = vadd.xlane.f32.xlu0 %v645
        %v675 = vpop.xlane.xlu0 %674
        %676 = vadd.xlane.f32.xlu0 %v646
        %v677 = vpop.xlane.xlu0 %676
        %678 = vadd.xlane.f32.xlu0 %v647
        %v679 = vpop.xlane.xlu0 %678
        %v680 = vmul.f32 %v649, %v599
        %v681 = vmul.f32 %v651, %v599
        %v682 = vmul.f32 %v653, %v599
        %v683 = vmul.f32 %v655, %v599
        %v684 = vmul.f32 %v657, %v599
        %v685 = vmul.f32 %v659, %v599
        %v686 = vmul.f32 %v661, %v599
        %v687 = vmul.f32 %v663, %v599
        %v688 = vmul.f32 %v665, %v599
        %v689 = vmul.f32 %v667, %v599
        %v690 = vmul.f32 %v669, %v599
        %v691 = vmul.f32 %v671, %v599
        %v692 = vmul.f32 %v673, %v599
        %v693 = vmul.f32 %v675, %v599
        %v694 = vmul.f32 %v677, %v599
        %v695 = vmul.f32 %v679, %v599
        %v696 = vadd.f32 %v680, 1e-05
        %v697 = vadd.f32 %v681, 1e-05
        %v698 = vadd.f32 %v682, 1e-05
        %v699 = vadd.f32 %v683, 1e-05
        %v700 = vadd.f32 %v684, 1e-05
        %v701 = vadd.f32 %v685, 1e-05
        %v702 = vadd.f32 %v686, 1e-05
        %v703 = vadd.f32 %v687, 1e-05
        %v704 = vadd.f32 %v688, 1e-05
        %v705 = vadd.f32 %v689, 1e-05
        %v706 = vadd.f32 %v690, 1e-05
        %v707 = vadd.f32 %v691, 1e-05
        %v708 = vadd.f32 %v692, 1e-05
        %v709 = vadd.f32 %v693, 1e-05
        %v710 = vadd.f32 %v694, 1e-05
        %v711 = vadd.f32 %v695, 1e-05
        %v712 = vrsqrt.pop %v696
        %v713 = vmul.f32 %v712, %v696
        %v714 = vmul.f32 %v713, %v712
        %v715 = vmul.f32 0.5, %v714
        %v716 = vsub.f32 1.5, %v715
        %v717 = vmul.f32 %v712, %v716
        %vm718 = vweird.f32 %v696
        %vm719 = vweird.f32 %v712
        %vm720 = vmor %vm718, %vm719
        %v721 = vsel %vm720, %v712, %v717
        %v722 = vrsqrt.pop %v697
        %v723 = vmul.f32 %v722, %v697
        %v724 = vmul.f32 %v723, %v722
        %v725 = vmul.f32 0.5, %v724
        %v726 = vsub.f32 1.5, %v725
        %v727 = vmul.f32 %v722, %v726
        %vm728 = vweird.f32 %v697
        %vm729 = vweird.f32 %v722
        %vm730 = vmor %vm728, %vm729
        %v731 = vsel %vm730, %v722, %v727
        %v732 = vrsqrt.pop %v698
        %v733 = vmul.f32 %v732, %v698
        %v734 = vmul.f32 %v733, %v732
        %v735 = vmul.f32 0.5, %v734
        %v736 = vsub.f32 1.5, %v735
        %v737 = vmul.f32 %v732, %v736
        %vm738 = vweird.f32 %v698
        %vm739 = vweird.f32 %v732
        %vm740 = vmor %vm738, %vm739
        %v741 = vsel %vm740, %v732, %v737
        %v742 = vrsqrt.pop %v699
        %v743 = vmul.f32 %v742, %v699
        %v744 = vmul.f32 %v743, %v742
        %v745 = vmul.f32 0.5, %v744
        %v746 = vsub.f32 1.5, %v745
        %v747 = vmul.f32 %v742, %v746
        %vm748 = vweird.f32 %v699
        %vm749 = vweird.f32 %v742
        %vm750 = vmor %vm748, %vm749
        %v751 = vsel %vm750, %v742, %v747
        %v752 = vrsqrt.pop %v700
        %v753 = vmul.f32 %v752, %v700
        %v754 = vmul.f32 %v753, %v752
        %v755 = vmul.f32 0.5, %v754
        %v756 = vsub.f32 1.5, %v755
        %v757 = vmul.f32 %v752, %v756
        %vm758 = vweird.f32 %v700
        %vm759 = vweird.f32 %v752
        %vm760 = vmor %vm758, %vm759
        %v761 = vsel %vm760, %v752, %v757
        %v762 = vrsqrt.pop %v701
        %v763 = vmul.f32 %v762, %v701
        %v764 = vmul.f32 %v763, %v762
        %v765 = vmul.f32 0.5, %v764
        %v766 = vsub.f32 1.5, %v765
        %v767 = vmul.f32 %v762, %v766
        %vm768 = vweird.f32 %v701
        %vm769 = vweird.f32 %v762
        %vm770 = vmor %vm768, %vm769
        %v771 = vsel %vm770, %v762, %v767
        %v772 = vrsqrt.pop %v702
        %v773 = vmul.f32 %v772, %v702
        %v774 = vmul.f32 %v773, %v772
        %v775 = vmul.f32 0.5, %v774
        %v776 = vsub.f32 1.5, %v775
        %v777 = vmul.f32 %v772, %v776
        %vm778 = vweird.f32 %v702
        %vm779 = vweird.f32 %v772
        %vm780 = vmor %vm778, %vm779
        %v781 = vsel %vm780, %v772, %v777
        %v782 = vrsqrt.pop %v703
        %v783 = vmul.f32 %v782, %v703
        %v784 = vmul.f32 %v783, %v782
        %v785 = vmul.f32 0.5, %v784
        %v786 = vsub.f32 1.5, %v785
        %v787 = vmul.f32 %v782, %v786
        %vm788 = vweird.f32 %v703
        %vm789 = vweird.f32 %v782
        %vm790 = vmor %vm788, %vm789
        %v791 = vsel %vm790, %v782, %v787
        %v792 = vrsqrt.pop %v704
        %v793 = vmul.f32 %v792, %v704
        %v794 = vmul.f32 %v793, %v792
        %v795 = vmul.f32 0.5, %v794
        %v796 = vsub.f32 1.5, %v795
        %v797 = vmul.f32 %v792, %v796
        %vm798 = vweird.f32 %v704
        %vm799 = vweird.f32 %v792
        %vm800 = vmor %vm798, %vm799
        %v801 = vsel %vm800, %v792, %v797
        %v802 = vrsqrt.pop %v705
        %v803 = vmul.f32 %v802, %v705
        %v804 = vmul.f32 %v803, %v802
        %v805 = vmul.f32 0.5, %v804
        %v806 = vsub.f32 1.5, %v805
        %v807 = vmul.f32 %v802, %v806
        %vm808 = vweird.f32 %v705
        %vm809 = vweird.f32 %v802
        %vm810 = vmor %vm808, %vm809
        %v811 = vsel %vm810, %v802, %v807
        %v812 = vrsqrt.pop %v706
        %v813 = vmul.f32 %v812, %v706
        %v814 = vmul.f32 %v813, %v812
        %v815 = vmul.f32 0.5, %v814
        %v816 = vsub.f32 1.5, %v815
        %v817 = vmul.f32 %v812, %v816
        %vm818 = vweird.f32 %v706
        %vm819 = vweird.f32 %v812
        %vm820 = vmor %vm818, %vm819
        %v821 = vsel %vm820, %v812, %v817
        %v822 = vrsqrt.pop %v707
        %v823 = vmul.f32 %v822, %v707
        %v824 = vmul.f32 %v823, %v822
        %v825 = vmul.f32 0.5, %v824
        %v826 = vsub.f32 1.5, %v825
        %v827 = vmul.f32 %v822, %v826
        %vm828 = vweird.f32 %v707
        %vm829 = vweird.f32 %v822
        %vm830 = vmor %vm828, %vm829
        %v831 = vsel %vm830, %v822, %v827
        %v832 = vrsqrt.pop %v708
        %v833 = vmul.f32 %v832, %v708
        %v834 = vmul.f32 %v833, %v832
        %v835 = vmul.f32 0.5, %v834
        %v836 = vsub.f32 1.5, %v835
        %v837 = vmul.f32 %v832, %v836
        %vm838 = vweird.f32 %v708
        %vm839 = vweird.f32 %v832
        %vm840 = vmor %vm838, %vm839
        %v841 = vsel %vm840, %v832, %v837
        %v842 = vrsqrt.pop %v709
        %v843 = vmul.f32 %v842, %v709
        %v844 = vmul.f32 %v843, %v842
        %v845 = vmul.f32 0.5, %v844
        %v846 = vsub.f32 1.5, %v845
        %v847 = vmul.f32 %v842, %v846
        %vm848 = vweird.f32 %v709
        %vm849 = vweird.f32 %v842
        %vm850 = vmor %vm848, %vm849
        %v851 = vsel %vm850, %v842, %v847
        %v852 = vrsqrt.pop %v710
        %v853 = vmul.f32 %v852, %v710
        %v854 = vmul.f32 %v853, %v852
        %v855 = vmul.f32 0.5, %v854
        %v856 = vsub.f32 1.5, %v855
        %v857 = vmul.f32 %v852, %v856
        %vm858 = vweird.f32 %v710
        %vm859 = vweird.f32 %v852
        %vm860 = vmor %vm858, %vm859
        %v861 = vsel %vm860, %v852, %v857
        %v862 = vrsqrt.pop %v711
        %v863 = vmul.f32 %v862, %v711
        %v864 = vmul.f32 %v863, %v862
        %v865 = vmul.f32 0.5, %v864
        %v866 = vsub.f32 1.5, %v865
        %v867 = vmul.f32 %v862, %v866
        %vm868 = vweird.f32 %v711
        %vm869 = vweird.f32 %v862
        %vm870 = vmor %vm868, %vm869
        %v871 = vsel %vm870, %v862, %v867
        %v872 = vmul.f32 %v616, %v721
        %v873 = vmul.f32 %v617, %v731
        %v874 = vmul.f32 %v618, %v741
        %v875 = vmul.f32 %v619, %v751
        %v876 = vmul.f32 %v620, %v761
        %v877 = vmul.f32 %v621, %v771
        %v878 = vmul.f32 %v622, %v781
        %v879 = vmul.f32 %v623, %v791
        %v880 = vmul.f32 %v624, %v801
        %v881 = vmul.f32 %v625, %v811
        %v882 = vmul.f32 %v626, %v821
        %v883 = vmul.f32 %v627, %v831
        %v884 = vmul.f32 %v628, %v841
        %v885 = vmul.f32 %v629, %v851
        %v886 = vmul.f32 %v630, %v861
        %v887 = vmul.f32 %v631, %v871
        %v889 = vperm.slane %v559, 0
        %v891 = vmul.f32 %v872, %v889
        %v892 = vmul.f32 %v873, %v889
        %v893 = vmul.f32 %v874, %v889
        %v894 = vmul.f32 %v875, %v889
        %v895 = vmul.f32 %v876, %v889
        %v896 = vmul.f32 %v877, %v889
        %v897 = vmul.f32 %v878, %v889
        %v898 = vmul.f32 %v879, %v889
        %v899 = vmul.f32 %v880, %v889
        %v900 = vmul.f32 %v881, %v889
        %v901 = vmul.f32 %v882, %v889
        %v902 = vmul.f32 %v883, %v889
        %v903 = vmul.f32 %v884, %v889
        %v904 = vmul.f32 %v885, %v889
        %v905 = vmul.f32 %v886, %v889
        %v906 = vmul.f32 %v887, %v889
        %v908 = vperm.slane %v560, 0
        %v910 = vadd.f32 %v891, %v908
        %v911 = vadd.f32 %v892, %v908
        %v912 = vadd.f32 %v893, %v908
        %v913 = vadd.f32 %v894, %v908
        %v914 = vadd.f32 %v895, %v908
        %v915 = vadd.f32 %v896, %v908
        %v916 = vadd.f32 %v897, %v908
        %v917 = vadd.f32 %v898, %v908
        %v918 = vadd.f32 %v899, %v908
        %v919 = vadd.f32 %v900, %v908
        %v920 = vadd.f32 %v901, %v908
        %v921 = vadd.f32 %v902, %v908
        %v922 = vadd.f32 %v903, %v908
        %v923 = vadd.f32 %v904, %v908
        %v924 = vadd.f32 %v905, %v908
        %v925 = vadd.f32 %v906, %v908
        %v926 = vpack.c.bf16 %v911, %v910
        %v927 = vpack.c.bf16 %v913, %v912
        %v928 = vpack.c.bf16 %v915, %v914
        %v929 = vpack.c.bf16 %v917, %v916
        %v930 = vpack.c.bf16 %v919, %v918
        %v931 = vpack.c.bf16 %v921, %v920
        %v932 = vpack.c.bf16 %v923, %v922
        %v933 = vpack.c.bf16 %v925, %v924
        %v934 = vld [vmem:[#allocation7] sm:$0xff]
        %v935 = vld [vmem:[#allocation7 + $0x8] sm:$0xf]
        %v936 = vld [vmem:[#allocation7 + $0xc] sm:$0xff]
        %v937 = vld [vmem:[#allocation7 + $0x14] sm:$0xf]
        %v938 = vld [vmem:[#allocation7 + $0x18] sm:$0xff]
        %v939 = vld [vmem:[#allocation7 + $0x20] sm:$0xf]
        %v940 = vld [vmem:[#allocation7 + $0x24] sm:$0xff]
        %v941 = vld [vmem:[#allocation7 + $0x2c] sm:$0xf]
        %v942 = vld [vmem:[#allocation7 + $0x30] sm:$0xff]
        %v943 = vld [vmem:[#allocation7 + $0x38] sm:$0xf]
        %v944 = vld [vmem:[#allocation7 + $0x3c] sm:$0xff]
        %v945 = vld [vmem:[#allocation7 + $0x44] sm:$0xf]
        %v946 = vld [vmem:[#allocation7 + $0x48] sm:$0xff]
        %v947 = vld [vmem:[#allocation7 + $0x50] sm:$0xf]
        %v948 = vld [vmem:[#allocation7 + $0x54] sm:$0xff]
        %v949 = vld [vmem:[#allocation7 + $0x5c] sm:$0xf]
        %v950 = vld [vmem:[#allocation7 + $0x60] sm:$0xff]
        %v951 = vld [vmem:[#allocation7 + $0x68] sm:$0xf]
        %v952 = vld [vmem:[#allocation7 + $0x6c] sm:$0xff]
        %v953 = vld [vmem:[#allocation7 + $0x74] sm:$0xf]
        %v954 = vld [vmem:[#allocation7 + $0x78] sm:$0xff]
        %v955 = vld [vmem:[#allocation7 + $0x80] sm:$0xf]
        %v956 = vld [vmem:[#allocation7 + $0x84] sm:$0xff]
        %v957 = vld [vmem:[#allocation7 + $0x8c] sm:$0xf]
        %v958 = vld [vmem:[#allocation7 + $0x90] sm:$0xff]
        %v959 = vld [vmem:[#allocation7 + $0x98] sm:$0xf]
        %v960 = vld [vmem:[#allocation7 + $0x9c] sm:$0xff]
        %v961 = vld [vmem:[#allocation7 + $0xa4] sm:$0xf]
        %v962 = vld [vmem:[#allocation7 + $0xa8] sm:$0xff]
        %v963 = vld [vmem:[#allocation7 + $0xb0] sm:$0xf]
        %v964 = vld [vmem:[#allocation7 + $0xb4] sm:$0xff]
        %v965 = vld [vmem:[#allocation7 + $0xbc] sm:$0xf]
        %v966 = vld [vmem:[#allocation9] sm:$0x7]
        %v968 = vperm.slane %v966, 0
        %v969 = vperm.slane %v966, 1
        %v970 = vperm.slane %v966, 2
        %v1006 = vunpack.c.l.b16 %v934
        %v1007 = vunpack.c.h.b16 %v934
        %v1008 = vunpack.c.l.b16 %v935
        %v1009 = vunpack.c.l.b16 %v936
        %v1010 = vunpack.c.h.b16 %v936
        %v1011 = vunpack.c.l.b16 %v937
        %v1012 = vunpack.c.l.b16 %v938
        %v1013 = vunpack.c.h.b16 %v938
        %v1014 = vunpack.c.l.b16 %v939
        %v1015 = vunpack.c.l.b16 %v940
        %v1016 = vunpack.c.h.b16 %v940
        %v1017 = vunpack.c.l.b16 %v941
        %v1018 = vunpack.c.l.b16 %v942
        %v1019 = vunpack.c.h.b16 %v942
        %v1020 = vunpack.c.l.b16 %v943
        %v1021 = vunpack.c.l.b16 %v944
        %v1022 = vunpack.c.h.b16 %v944
        %v1023 = vunpack.c.l.b16 %v945
        %v1024 = vunpack.c.l.b16 %v946
        %v1025 = vunpack.c.h.b16 %v946
        %v1026 = vunpack.c.l.b16 %v947
        %v1027 = vunpack.c.l.b16 %v948
        %v1028 = vunpack.c.h.b16 %v948
        %v1029 = vunpack.c.l.b16 %v949
        %v1030 = vunpack.c.l.b16 %v950
        %v1031 = vunpack.c.h.b16 %v950
        %v1032 = vunpack.c.l.b16 %v951
        %v1033 = vunpack.c.l.b16 %v952
        %v1034 = vunpack.c.h.b16 %v952
        %v1035 = vunpack.c.l.b16 %v953
        %v1036 = vunpack.c.l.b16 %v954
        %v1037 = vunpack.c.h.b16 %v954
        %v1038 = vunpack.c.l.b16 %v955
        %v1039 = vunpack.c.l.b16 %v956
        %v1040 = vunpack.c.h.b16 %v956
        %v1041 = vunpack.c.l.b16 %v957
        %v1042 = vunpack.c.l.b16 %v958
        %v1043 = vunpack.c.h.b16 %v958
        %v1044 = vunpack.c.l.b16 %v959
        %v1045 = vunpack.c.l.b16 %v960
        %v1046 = vunpack.c.h.b16 %v960
        %v1047 = vunpack.c.l.b16 %v961
        %v1048 = vunpack.c.l.b16 %v962
        %v1049 = vunpack.c.h.b16 %v962
        %v1050 = vunpack.c.l.b16 %v963
        %v1051 = vunpack.c.l.b16 %v964
        %v1052 = vunpack.c.h.b16 %v964
        %v1053 = vunpack.c.l.b16 %v965
        %v1054 = vpack.c.b16 %v1009, %v1006
        %v1055 = vpack.c.b16 %v1010, %v1007
        %v1056 = vpack.c.b16 %v1011, %v1008
        %v1057 = vpack.c.b16 %v1015, %v1012
        %v1058 = vpack.c.b16 %v1016, %v1013
        %v1059 = vpack.c.b16 %v1017, %v1014
        %v1060 = vpack.c.b16 %v1021, %v1018
        %v1061 = vpack.c.b16 %v1022, %v1019
        %v1062 = vpack.c.b16 %v1023, %v1020
        %v1063 = vpack.c.b16 %v1027, %v1024
        %v1064 = vpack.c.b16 %v1028, %v1025
        %v1065 = vpack.c.b16 %v1029, %v1026
        %v1066 = vpack.c.b16 %v1033, %v1030
        %v1067 = vpack.c.b16 %v1034, %v1031
        %v1068 = vpack.c.b16 %v1035, %v1032
        %v1069 = vpack.c.b16 %v1039, %v1036
        %v1070 = vpack.c.b16 %v1040, %v1037
        %v1071 = vpack.c.b16 %v1041, %v1038
        %v1072 = vpack.c.b16 %v1045, %v1042
        %v1073 = vpack.c.b16 %v1046, %v1043
        %v1074 = vpack.c.b16 %v1047, %v1044
        %v1075 = vpack.c.b16 %v1051, %v1048
        %v1076 = vpack.c.b16 %v1052, %v1049
        %v1077 = vpack.c.b16 %v1053, %v1050
        %1102 = vmatpush.bf16.msra.mxu0 %v1075
        %1103 = vmatpush.bf16.msra.mxu0 %v1072
        %1104 = vmatpush.bf16.msra.mxu0 %v1069
        %1105 = vmatpush.bf16.msra.mxu0 %v1066
        %1106 = vmatpush.bf16.msra.mxu0 %v1063
        %1107 = vmatpush.bf16.msra.mxu0 %v1060
        %1108 = vmatpush.bf16.msra.mxu0 %v1057
        %1109 = vmatpush.bf16.msra.mxu0 %v1054
        %1110 = vmatmul.bf16.gmra.mxu0 %v926
        %v1111 = vpop.f32.mrf.mxu0
        %v1112 = vadd.f32 %v968, %v1111
        %v1113 = vpop.f32.mrf.mxu0
        %v1114 = vadd.f32 %v968, %v1113
        %1115 = vmatmul.bf16.gmra.mxu0 %v927
        %v1116 = vpop.f32.mrf.mxu0
        %v1117 = vadd.f32 %v968, %v1116
        %v1118 = vpop.f32.mrf.mxu0
        %v1119 = vadd.f32 %v968, %v1118
        %1120 = vmatmul.bf16.gmra.mxu0 %v928
        %v1121 = vpop.f32.mrf.mxu0
        %v1122 = vadd.f32 %v968, %v1121
        %v1123 = vpop.f32.mrf.mxu0
        %v1124 = vadd.f32 %v968, %v1123
        %1125 = vmatmul.bf16.gmra.mxu0 %v929
        %v1126 = vpop.f32.mrf.mxu0
        %v1127 = vadd.f32 %v968, %v1126
        %v1128 = vpop.f32.mrf.mxu0
        %v1129 = vadd.f32 %v968, %v1128
        %1130 = vmatmul.bf16.gmra.mxu0 %v930
        %v1131 = vpop.f32.mrf.mxu0
        %v1132 = vadd.f32 %v968, %v1131
        %v1133 = vpop.f32.mrf.mxu0
        %v1134 = vadd.f32 %v968, %v1133
        %1135 = vmatmul.bf16.gmra.mxu0 %v931
        %v1136 = vpop.f32.mrf.mxu0
        %v1137 = vadd.f32 %v968, %v1136
        %v1138 = vpop.f32.mrf.mxu0
        %v1139 = vadd.f32 %v968, %v1138
        %1140 = vmatmul.bf16.gmra.mxu0 %v932
        %v1141 = vpop.f32.mrf.mxu0
        %v1142 = vadd.f32 %v968, %v1141
        %v1143 = vpop.f32.mrf.mxu0
        %v1144 = vadd.f32 %v968, %v1143
        %1145 = vmatmul.bf16.gmra.mxu0 %v933
        %v1146 = vpop.f32.mrf.mxu0
        %v1147 = vadd.f32 %v968, %v1146
        %v1148 = vpop.f32.mrf.mxu0
        %v1149 = vadd.f32 %v968, %v1148
        %1150 = vdwg.mxu0
        %1151 = vmatpush.bf16.msra.mxu0 %v1076
        %1152 = vmatpush.bf16.msra.mxu0 %v1073
        %1153 = vmatpush.bf16.msra.mxu0 %v1070
        %1154 = vmatpush.bf16.msra.mxu0 %v1067
        %1155 = vmatpush.bf16.msra.mxu0 %v1064
        %1156 = vmatpush.bf16.msra.mxu0 %v1061
        %1157 = vmatpush.bf16.msra.mxu0 %v1058
        %1158 = vmatpush.bf16.msra.mxu0 %v1055
        %1159 = vmatmul.bf16.gmra.mxu0 %v926
        %v1160 = vpop.f32.mrf.mxu0
        %v1161 = vadd.f32 %v969, %v1160
        %v1162 = vpop.f32.mrf.mxu0
        %v1163 = vadd.f32 %v969, %v1162
        %1164 = vmatmul.bf16.gmra.mxu0 %v927
        %v1165 = vpop.f32.mrf.mxu0
        %v1166 = vadd.f32 %v969, %v1165
        %v1167 = vpop.f32.mrf.mxu0
        %v1168 = vadd.f32 %v969, %v1167
        %1169 = vmatmul.bf16.gmra.mxu0 %v928
        %v1170 = vpop.f32.mrf.mxu0
        %v1171 = vadd.f32 %v969, %v1170
        %v1172 = vpop.f32.mrf.mxu0
        %v1173 = vadd.f32 %v969, %v1172
        %1174 = vmatmul.bf16.gmra.mxu0 %v929
        %v1175 = vpop.f32.mrf.mxu0
        %v1176 = vadd.f32 %v969, %v1175
        %v1177 = vpop.f32.mrf.mxu0
        %v1178 = vadd.f32 %v969, %v1177
        %1179 = vmatmul.bf16.gmra.mxu0 %v930
        %v1180 = vpop.f32.mrf.mxu0
        %v1181 = vadd.f32 %v969, %v1180
        %v1182 = vpop.f32.mrf.mxu0
        %v1183 = vadd.f32 %v969, %v1182
        %1184 = vmatmul.bf16.gmra.mxu0 %v931
        %v1185 = vpop.f32.mrf.mxu0
        %v1186 = vadd.f32 %v969, %v1185
        %v1187 = vpop.f32.mrf.mxu0
        %v1188 = vadd.f32 %v969, %v1187
        %1189 = vmatmul.bf16.gmra.mxu0 %v932
        %v1190 = vpop.f32.mrf.mxu0
        %v1191 = vadd.f32 %v969, %v1190
        %v1192 = vpop.f32.mrf.mxu0
        %v1193 = vadd.f32 %v969, %v1192
        %1194 = vmatmul.bf16.gmra.mxu0 %v933
        %v1195 = vpop.f32.mrf.mxu0
        %v1196 = vadd.f32 %v969, %v1195
        %v1197 = vpop.f32.mrf.mxu0
        %v1198 = vadd.f32 %v969, %v1197
        %1199 = vdwg.mxu0
        %1200 = vmatpush.bf16.msra.mxu0 %v1077
        %1201 = vmatpush.bf16.msra.mxu0 %v1074
        %1202 = vmatpush.bf16.msra.mxu0 %v1071
        %1203 = vmatpush.bf16.msra.mxu0 %v1068
        %1204 = vmatpush.bf16.msra.mxu0 %v1065
        %1205 = vmatpush.bf16.msra.mxu0 %v1062
        %1206 = vmatpush.bf16.msra.mxu0 %v1059
        %1207 = vmatpush.bf16.msra.mxu0 %v1056
        %1208 = vmatmul.bf16.gmra.mxu0 %v926
        %v1209 = vpop.f32.mrf.mxu0
        %v1210 = vadd.f32 %v970, %v1209
        %v1211 = vpop.f32.mrf.mxu0
        %v1212 = vadd.f32 %v970, %v1211
        %1213 = vmatmul.bf16.gmra.mxu0 %v927
        %v1214 = vpop.f32.mrf.mxu0
        %v1215 = vadd.f32 %v970, %v1214
        %v1216 = vpop.f32.mrf.mxu0
        %v1217 = vadd.f32 %v970, %v1216
        %1218 = vmatmul.bf16.gmra.mxu0 %v928
        %v1219 = vpop.f32.mrf.mxu0
        %v1220 = vadd.f32 %v970, %v1219
        %v1221 = vpop.f32.mrf.mxu0
        %v1222 = vadd.f32 %v970, %v1221
        %1223 = vmatmul.bf16.gmra.mxu0 %v929
        %v1224 = vpop.f32.mrf.mxu0
        %v1225 = vadd.f32 %v970, %v1224
        %v1226 = vpop.f32.mrf.mxu0
        %v1227 = vadd.f32 %v970, %v1226
        %1228 = vmatmul.bf16.gmra.mxu0 %v930
        %v1229 = vpop.f32.mrf.mxu0
        %v1230 = vadd.f32 %v970, %v1229
        %v1231 = vpop.f32.mrf.mxu0
        %v1232 = vadd.f32 %v970, %v1231
        %1233 = vmatmul.bf16.gmra.mxu0 %v931
        %v1234 = vpop.f32.mrf.mxu0
        %v1235 = vadd.f32 %v970, %v1234
        %v1236 = vpop.f32.mrf.mxu0
        %v1237 = vadd.f32 %v970, %v1236
        %1238 = vmatmul.bf16.gmra.mxu0 %v932
        %v1239 = vpop.f32.mrf.mxu0
        %v1240 = vadd.f32 %v970, %v1239
        %v1241 = vpop.f32.mrf.mxu0
        %v1242 = vadd.f32 %v970, %v1241
        %1243 = vmatmul.bf16.gmra.mxu0 %v933
        %v1244 = vpop.f32.mrf.mxu0
        %v1245 = vadd.f32 %v970, %v1244
        %v1246 = vpop.f32.mrf.mxu0
        %v1247 = vadd.f32 %v970, %v1246
        %1248 = vdwg.mxu0
        %v1249 = vpack.c.bf16 %v1161, %v1112
        %v1250 = vpack.c.bf16 %v1210, %v1210
        %v1251 = vpack.c.bf16 %v1163, %v1114
        %v1252 = vpack.c.bf16 %v1212, %v1212
        %v1253 = vpack.c.bf16 %v1166, %v1117
        %v1254 = vpack.c.bf16 %v1215, %v1215
        %v1255 = vpack.c.bf16 %v1168, %v1119
        %v1256 = vpack.c.bf16 %v1217, %v1217
        %v1257 = vpack.c.bf16 %v1171, %v1122
        %v1258 = vpack.c.bf16 %v1220, %v1220
        %v1259 = vpack.c.bf16 %v1173, %v1124
        %v1260 = vpack.c.bf16 %v1222, %v1222
        %v1261 = vpack.c.bf16 %v1176, %v1127
        %v1262 = vpack.c.bf16 %v1225, %v1225
        %v1263 = vpack.c.bf16 %v1178, %v1129
        %v1264 = vpack.c.bf16 %v1227, %v1227
        %v1265 = vpack.c.bf16 %v1181, %v1132
        %v1266 = vpack.c.bf16 %v1230, %v1230
        %v1267 = vpack.c.bf16 %v1183, %v1134
        %v1268 = vpack.c.bf16 %v1232, %v1232
        %v1269 = vpack.c.bf16 %v1186, %v1137
        %v1270 = vpack.c.bf16 %v1235, %v1235
        %v1271 = vpack.c.bf16 %v1188, %v1139
        %v1272 = vpack.c.bf16 %v1237, %v1237
        %v1273 = vpack.c.bf16 %v1191, %v1142
        %v1274 = vpack.c.bf16 %v1240, %v1240
        %v1275 = vpack.c.bf16 %v1193, %v1144
        %v1276 = vpack.c.bf16 %v1242, %v1242
        %v1277 = vpack.c.bf16 %v1196, %v1147
        %v1278 = vpack.c.bf16 %v1245, %v1245
        %v1279 = vpack.c.bf16 %v1198, %v1149
        %v1280 = vpack.c.bf16 %v1247, %v1247
        %1281 = vst [vmem:[#allocation2] sm:$0xff] %v1249
        %1282 = vst [vmem:[#allocation2 + $0x8] sm:$0xf] %v1250
        %1283 = vst [vmem:[#allocation2 + $0xc] sm:$0xff] %v1251
        %1284 = vst [vmem:[#allocation2 + $0x14] sm:$0xf] %v1252
        %1285 = vst [vmem:[#allocation2 + $0x18] sm:$0xff] %v1253
        %1286 = vst [vmem:[#allocation2 + $0x20] sm:$0xf] %v1254
        %1287 = vst [vmem:[#allocation2 + $0x24] sm:$0xff] %v1255
        %1288 = vst [vmem:[#allocation2 + $0x2c] sm:$0xf] %v1256
        %1289 = vst [vmem:[#allocation2 + $0x30] sm:$0xff] %v1257
        %1290 = vst [vmem:[#allocation2 + $0x38] sm:$0xf] %v1258
        %1291 = vst [vmem:[#allocation2 + $0x3c] sm:$0xff] %v1259
        %1292 = vst [vmem:[#allocation2 + $0x44] sm:$0xf] %v1260
        %1293 = vst [vmem:[#allocation2 + $0x48] sm:$0xff] %v1261
        %1294 = vst [vmem:[#allocation2 + $0x50] sm:$0xf] %v1262
        %1295 = vst [vmem:[#allocation2 + $0x54] sm:$0xff] %v1263
        %1296 = vst [vmem:[#allocation2 + $0x5c] sm:$0xf] %v1264
        %1297 = vst [vmem:[#allocation2 + $0x60] sm:$0xff] %v1265
        %1298 = vst [vmem:[#allocation2 + $0x68] sm:$0xf] %v1266
        %1299 = vst [vmem:[#allocation2 + $0x6c] sm:$0xff] %v1267
        %1300 = vst [vmem:[#allocation2 + $0x74] sm:$0xf] %v1268
        %1301 = vst [vmem:[#allocation2 + $0x78] sm:$0xff] %v1269
        %1302 = vst [vmem:[#allocation2 + $0x80] sm:$0xf] %v1270
        %1303 = vst [vmem:[#allocation2 + $0x84] sm:$0xff] %v1271
        %1304 = vst [vmem:[#allocation2 + $0x8c] sm:$0xf] %v1272
        %1305 = vst [vmem:[#allocation2 + $0x90] sm:$0xff] %v1273
        %1306 = vst [vmem:[#allocation2 + $0x98] sm:$0xf] %v1274
        %1307 = vst [vmem:[#allocation2 + $0x9c] sm:$0xff] %v1275
        %1308 = vst [vmem:[#allocation2 + $0xa4] sm:$0xf] %v1276
        %1309 = vst [vmem:[#allocation2 + $0xa8] sm:$0xff] %v1277
        %1310 = vst [vmem:[#allocation2 + $0xb0] sm:$0xf] %v1278
        %1311 = vst [vmem:[#allocation2 + $0xb4] sm:$0xff] %v1279
        %1312 = vst [vmem:[#allocation2 + $0xbc] sm:$0xf] %v1280
        %v1313 = vld [vmem:[#allocation2] sm:$0xf]
        %v1314 = vld [vmem:[#allocation2 + $0xc] sm:$0xf]
        %v1315 = vld [vmem:[#allocation2 + $0x18] sm:$0xf]
        %v1316 = vld [vmem:[#allocation2 + $0x24] sm:$0xf]
        %v1317 = vld [vmem:[#allocation2 + $0x30] sm:$0xf]
        %v1318 = vld [vmem:[#allocation2 + $0x3c] sm:$0xf]
        %v1319 = vld [vmem:[#allocation2 + $0x48] sm:$0xf]
        %v1320 = vld [vmem:[#allocation2 + $0x54] sm:$0xf]
        %v1321 = vld [vmem:[#allocation2 + $0x60] sm:$0xf]
        %v1322 = vld [vmem:[#allocation2 + $0x6c] sm:$0xf]
        %v1323 = vld [vmem:[#allocation2 + $0x78] sm:$0xf]
        %v1324 = vld [vmem:[#allocation2 + $0x84] sm:$0xf]
        %v1325 = vld [vmem:[#allocation2 + $0x90] sm:$0xf]
        %v1326 = vld [vmem:[#allocation2 + $0x9c] sm:$0xf]
        %v1327 = vld [vmem:[#allocation2 + $0xa8] sm:$0xf]
        %v1328 = vld [vmem:[#allocation2 + $0xb4] sm:$0xf]
        %v1329 = vld [vmem:[#allocation2 + $0x4] sm:$0xf]
        %v1330 = vld [vmem:[#allocation2 + $0x10] sm:$0xf]
        %v1331 = vld [vmem:[#allocation2 + $0x1c] sm:$0xf]
        %v1332 = vld [vmem:[#allocation2 + $0x28] sm:$0xf]
        %v1333 = vld [vmem:[#allocation2 + $0x34] sm:$0xf]
        %v1334 = vld [vmem:[#allocation2 + $0x40] sm:$0xf]
        %v1335 = vld [vmem:[#allocation2 + $0x4c] sm:$0xf]
        %v1336 = vld [vmem:[#allocation2 + $0x58] sm:$0xf]
        %v1337 = vld [vmem:[#allocation2 + $0x64] sm:$0xf]
        %v1338 = vld [vmem:[#allocation2 + $0x70] sm:$0xf]
        %v1339 = vld [vmem:[#allocation2 + $0x7c] sm:$0xf]
        %v1340 = vld [vmem:[#allocation2 + $0x88] sm:$0xf]
        %v1341 = vld [vmem:[#allocation2 + $0x94] sm:$0xf]
        %v1342 = vld [vmem:[#allocation2 + $0xa0] sm:$0xf]
        %v1343 = vld [vmem:[#allocation2 + $0xac] sm:$0xf]
        %v1344 = vld [vmem:[#allocation2 + $0xb8] sm:$0xf]
        %v1345 = vld [vmem:[#allocation2 + $0x8] sm:$0xf]
        %v1346 = vld [vmem:[#allocation2 + $0x14] sm:$0xf]
        %v1347 = vld [vmem:[#allocation2 + $0x20] sm:$0xf]
        %v1348 = vld [vmem:[#allocation2 + $0x2c] sm:$0xf]
        %v1349 = vld [vmem:[#allocation2 + $0x38] sm:$0xf]
        %v1350 = vld [vmem:[#allocation2 + $0x44] sm:$0xf]
        %v1351 = vld [vmem:[#allocation2 + $0x50] sm:$0xf]
        %v1352 = vld [vmem:[#allocation2 + $0x5c] sm:$0xf]
        %v1353 = vld [vmem:[#allocation2 + $0x68] sm:$0xf]
        %v1354 = vld [vmem:[#allocation2 + $0x74] sm:$0xf]
        %v1355 = vld [vmem:[#allocation2 + $0x80] sm:$0xf]
        %v1356 = vld [vmem:[#allocation2 + $0x8c] sm:$0xf]
        %v1357 = vld [vmem:[#allocation2 + $0x98] sm:$0xf]
        %v1358 = vld [vmem:[#allocation2 + $0xa4] sm:$0xf]
        %v1359 = vld [vmem:[#allocation2 + $0xb0] sm:$0xf]
        %v1360 = vld [vmem:[#allocation2 + $0xbc] sm:$0xf]
        %v1377 = vunpack.c.l.b16 %v1313
        %v1378 = vunpack.c.l.b16 %v1314
        %v1379 = vunpack.c.l.b16 %v1315
        %v1380 = vunpack.c.l.b16 %v1316
        %v1381 = vunpack.c.l.b16 %v1317
        %v1382 = vunpack.c.l.b16 %v1318
        %v1383 = vunpack.c.l.b16 %v1319
        %v1384 = vunpack.c.l.b16 %v1320
        %v1385 = vunpack.c.l.b16 %v1321
        %v1386 = vunpack.c.l.b16 %v1322
        %v1387 = vunpack.c.l.b16 %v1323
        %v1388 = vunpack.c.l.b16 %v1324
        %v1389 = vunpack.c.l.b16 %v1325
        %v1390 = vunpack.c.l.b16 %v1326
        %v1391 = vunpack.c.l.b16 %v1327
        %v1392 = vunpack.c.l.b16 %v1328
        %v1393 = vpack.c.b16 %v1378, %v1377
        %v1394 = vpack.c.b16 %v1380, %v1379
        %v1395 = vpack.c.b16 %v1382, %v1381
        %v1396 = vpack.c.b16 %v1384, %v1383
        %v1397 = vpack.c.b16 %v1386, %v1385
        %v1398 = vpack.c.b16 %v1388, %v1387
        %v1399 = vpack.c.b16 %v1390, %v1389
        %v1400 = vpack.c.b16 %v1392, %v1391
        %v1417 = vunpack.c.l.b16 %v1329
        %v1418 = vunpack.c.l.b16 %v1330
        %v1419 = vunpack.c.l.b16 %v1331
        %v1420 = vunpack.c.l.b16 %v1332
        %v1421 = vunpack.c.l.b16 %v1333
        %v1422 = vunpack.c.l.b16 %v1334
        %v1423 = vunpack.c.l.b16 %v1335
        %v1424 = vunpack.c.l.b16 %v1336
        %v1425 = vunpack.c.l.b16 %v1337
        %v1426 = vunpack.c.l.b16 %v1338
        %v1427 = vunpack.c.l.b16 %v1339
        %v1428 = vunpack.c.l.b16 %v1340
        %v1429 = vunpack.c.l.b16 %v1341
        %v1430 = vunpack.c.l.b16 %v1342
        %v1431 = vunpack.c.l.b16 %v1343
        %v1432 = vunpack.c.l.b16 %v1344
        %v1433 = vpack.c.b16 %v1418, %v1417
        %v1434 = vpack.c.b16 %v1420, %v1419
        %v1435 = vpack.c.b16 %v1422, %v1421
        %v1436 = vpack.c.b16 %v1424, %v1423
        %v1437 = vpack.c.b16 %v1426, %v1425
        %v1438 = vpack.c.b16 %v1428, %v1427
        %v1439 = vpack.c.b16 %v1430, %v1429
        %v1440 = vpack.c.b16 %v1432, %v1431
        %vm1441 = vcmask 261120
        %v1443 = vsel %vm1441, %v1393, 0
        %v1446 = vsel %vm1441, %v1394, 0
        %v1449 = vsel %vm1441, %v1395, 0
        %v1452 = vsel %vm1441, %v1396, 0
        %v1455 = vsel %vm1441, %v1397, 0
        %v1458 = vsel %vm1441, %v1398, 0
        %v1461 = vsel %vm1441, %v1399, 0
        %v1464 = vsel %vm1441, %v1400, 0
        %v1467 = vsel %vm1441, %v1433, 0
        %v1470 = vsel %vm1441, %v1434, 0
        %v1473 = vsel %vm1441, %v1435, 0
        %v1476 = vsel %vm1441, %v1436, 0
        %v1479 = vsel %vm1441, %v1437, 0
        %v1482 = vsel %vm1441, %v1438, 0
        %v1485 = vsel %vm1441, %v1439, 0
        %v1488 = vsel %vm1441, %v1440, 0
        %1490 = vmatpush.bf16.xpose.msra.mxu0 %v1488
        %1491 = vmatpush.bf16.xpose.msra.mxu0 %v1485
        %1492 = vmatpush.bf16.xpose.msra.mxu0 %v1482
        %1493 = vmatpush.bf16.xpose.msra.mxu0 %v1479
        %1494 = vmatpush.bf16.xpose.msra.mxu0 %v1476
        %1495 = vmatpush.bf16.xpose.msra.mxu0 %v1473
        %1496 = vmatpush.bf16.xpose.msra.mxu0 %v1470
        %1497 = vmatpush.bf16.xpose.msra.mxu0 %v1467
        %1498 = vmatmul.bf16.gmra.mxu0 %v1443
        %v1499 = vpop.f32.mrf.mxu0
        %v1500 = vadd.f32 0.0, %v1499
        %v1501 = vpop.f32.mrf.mxu0
        %v1502 = vadd.f32 0.0, %v1501
        %1503 = vmatmul.bf16.gmra.mxu0 %v1446
        %v1504 = vpop.f32.mrf.mxu0
        %v1505 = vadd.f32 0.0, %v1504
        %v1506 = vpop.f32.mrf.mxu0
        %v1507 = vadd.f32 0.0, %v1506
        %1508 = vmatmul.bf16.gmra.mxu0 %v1449
        %v1509 = vpop.f32.mrf.mxu0
        %v1510 = vadd.f32 0.0, %v1509
        %v1511 = vpop.f32.mrf.mxu0
        %v1512 = vadd.f32 0.0, %v1511
        %1513 = vmatmul.bf16.gmra.mxu0 %v1452
        %v1514 = vpop.f32.mrf.mxu0
        %v1515 = vadd.f32 0.0, %v1514
        %v1516 = vpop.f32.mrf.mxu0
        %v1517 = vadd.f32 0.0, %v1516
        %1518 = vmatmul.bf16.gmra.mxu0 %v1455
        %v1519 = vpop.f32.mrf.mxu0
        %v1520 = vadd.f32 0.0, %v1519
        %v1521 = vpop.f32.mrf.mxu0
        %v1522 = vadd.f32 0.0, %v1521
        %1523 = vmatmul.bf16.gmra.mxu0 %v1458
        %v1524 = vpop.f32.mrf.mxu0
        %v1525 = vadd.f32 0.0, %v1524
        %v1526 = vpop.f32.mrf.mxu0
        %v1527 = vadd.f32 0.0, %v1526
        %1528 = vmatmul.bf16.gmra.mxu0 %v1461
        %v1529 = vpop.f32.mrf.mxu0
        %v1530 = vadd.f32 0.0, %v1529
        %v1531 = vpop.f32.mrf.mxu0
        %v1532 = vadd.f32 0.0, %v1531
        %1533 = vmatmul.bf16.gmra.mxu0 %v1464
        %v1534 = vpop.f32.mrf.mxu0
        %v1535 = vadd.f32 0.0, %v1534
        %v1536 = vpop.f32.mrf.mxu0
        %v1537 = vadd.f32 0.0, %v1536
        %1538 = vdwg.mxu0
        %1539 = vmax.xlane.f32.xlu0 %v1500
        %v1540 = vpop.xlane.xlu0 %1539
        %1541 = vmax.xlane.f32.xlu0 %v1502
        %v1542 = vpop.xlane.xlu0 %1541
        %1543 = vmax.xlane.f32.xlu0 %v1505
        %v1544 = vpop.xlane.xlu0 %1543
        %1545 = vmax.xlane.f32.xlu0 %v1507
        %v1546 = vpop.xlane.xlu0 %1545
        %1547 = vmax.xlane.f32.xlu0 %v1510
        %v1548 = vpop.xlane.xlu0 %1547
        %1549 = vmax.xlane.f32.xlu0 %v1512
        %v1550 = vpop.xlane.xlu0 %1549
        %1551 = vmax.xlane.f32.xlu0 %v1515
        %v1552 = vpop.xlane.xlu0 %1551
        %1553 = vmax.xlane.f32.xlu0 %v1517
        %v1554 = vpop.xlane.xlu0 %1553
        %1555 = vmax.xlane.f32.xlu0 %v1520
        %v1556 = vpop.xlane.xlu0 %1555
        %1557 = vmax.xlane.f32.xlu0 %v1522
        %v1558 = vpop.xlane.xlu0 %1557
        %1559 = vmax.xlane.f32.xlu0 %v1525
        %v1560 = vpop.xlane.xlu0 %1559
        %1561 = vmax.xlane.f32.xlu0 %v1527
        %v1562 = vpop.xlane.xlu0 %1561
        %1563 = vmax.xlane.f32.xlu0 %v1530
        %v1564 = vpop.xlane.xlu0 %1563
        %1565 = vmax.xlane.f32.xlu0 %v1532
        %v1566 = vpop.xlane.xlu0 %1565
        %1567 = vmax.xlane.f32.xlu0 %v1535
        %v1568 = vpop.xlane.xlu0 %1567
        %1569 = vmax.xlane.f32.xlu0 %v1537
        %v1570 = vpop.xlane.xlu0 %1569
        %v1571 = vsub.f32 %v1500, %v1540
        %v1572 = vsub.f32 %v1502, %v1542
        %v1573 = vsub.f32 %v1505, %v1544
        %v1574 = vsub.f32 %v1507, %v1546
        %v1575 = vsub.f32 %v1510, %v1548
        %v1576 = vsub.f32 %v1512, %v1550
        %v1577 = vsub.f32 %v1515, %v1552
        %v1578 = vsub.f32 %v1517, %v1554
        %v1579 = vsub.f32 %v1520, %v1556
        %v1580 = vsub.f32 %v1522, %v1558
        %v1581 = vsub.f32 %v1525, %v1560
        %v1582 = vsub.f32 %v1527, %v1562
        %v1583 = vsub.f32 %v1530, %v1564
        %v1584 = vsub.f32 %v1532, %v1566
        %v1585 = vsub.f32 %v1535, %v1568
        %v1586 = vsub.f32 %v1537, %v1570
        %v1587 = vmul.f32 %v1571, 1.442695
        %v1588 = vpow.pop %v1587
        %v1589 = vmul.f32 %v1572, 1.442695
        %v1590 = vpow.pop %v1589
        %v1591 = vmul.f32 %v1573, 1.442695
        %v1592 = vpow.pop %v1591
        %v1593 = vmul.f32 %v1574, 1.442695
        %v1594 = vpow.pop %v1593
        %v1595 = vmul.f32 %v1575, 1.442695
        %v1596 = vpow.pop %v1595
        %v1597 = vmul.f32 %v1576, 1.442695
        %v1598 = vpow.pop %v1597
        %v1599 = vmul.f32 %v1577, 1.442695
        %v1600 = vpow.pop %v1599
        %v1601 = vmul.f32 %v1578, 1.442695
        %v1602 = vpow.pop %v1601
        %v1603 = vmul.f32 %v1579, 1.442695
        %v1604 = vpow.pop %v1603
        %v1605 = vmul.f32 %v1580, 1.442695
        %v1606 = vpow.pop %v1605
        %v1607 = vmul.f32 %v1581, 1.442695
        %v1608 = vpow.pop %v1607
        %v1609 = vmul.f32 %v1582, 1.442695
        %v1610 = vpow.pop %v1609
        %v1611 = vmul.f32 %v1583, 1.442695
        %v1612 = vpow.pop %v1611
        %v1613 = vmul.f32 %v1584, 1.442695
        %v1614 = vpow.pop %v1613
        %v1615 = vmul.f32 %v1585, 1.442695
        %v1616 = vpow.pop %v1615
        %v1617 = vmul.f32 %v1586, 1.442695
        %v1618 = vpow.pop %v1617
        %1619 = vadd.xlane.f32.xlu0 %v1588
        %v1620 = vpop.xlane.xlu0 %1619
        %1621 = vadd.xlane.f32.xlu0 %v1590
        %v1622 = vpop.xlane.xlu0 %1621
        %1623 = vadd.xlane.f32.xlu0 %v1592
        %v1624 = vpop.xlane.xlu0 %1623
        %1625 = vadd.xlane.f32.xlu0 %v1594
        %v1626 = vpop.xlane.xlu0 %1625
        %1627 = vadd.xlane.f32.xlu0 %v1596
        %v1628 = vpop.xlane.xlu0 %1627
        %1629 = vadd.xlane.f32.xlu0 %v1598
        %v1630 = vpop.xlane.xlu0 %1629
        %1631 = vadd.xlane.f32.xlu0 %v1600
        %v1632 = vpop.xlane.xlu0 %1631
        %1633 = vadd.xlane.f32.xlu0 %v1602
        %v1634 = vpop.xlane.xlu0 %1633
        %1635 = vadd.xlane.f32.xlu0 %v1604
        %v1636 = vpop.xlane.xlu0 %1635
        %1637 = vadd.xlane.f32.xlu0 %v1606
        %v1638 = vpop.xlane.xlu0 %1637
        %1639 = vadd.xlane.f32.xlu0 %v1608
        %v1640 = vpop.xlane.xlu0 %1639
        %1641 = vadd.xlane.f32.xlu0 %v1610
        %v1642 = vpop.xlane.xlu0 %1641
        %1643 = vadd.xlane.f32.xlu0 %v1612
        %v1644 = vpop.xlane.xlu0 %1643
        %1645 = vadd.xlane.f32.xlu0 %v1614
        %v1646 = vpop.xlane.xlu0 %1645
        %1647 = vadd.xlane.f32.xlu0 %v1616
        %v1648 = vpop.xlane.xlu0 %1647
        %1649 = vadd.xlane.f32.xlu0 %v1618
        %v1650 = vpop.xlane.xlu0 %1649
        %v1651 = vpack.c.bf16 %v1590, %v1588
        %v1652 = vpack.c.bf16 %v1594, %v1592
        %v1653 = vpack.c.bf16 %v1598, %v1596
        %v1654 = vpack.c.bf16 %v1602, %v1600
        %v1655 = vpack.c.bf16 %v1606, %v1604
        %v1656 = vpack.c.bf16 %v1610, %v1608
        %v1657 = vpack.c.bf16 %v1614, %v1612
        %v1658 = vpack.c.bf16 %v1618, %v1616
        %v1675 = vunpack.c.l.b16 %v1345
        %v1676 = vunpack.c.l.b16 %v1346
        %v1677 = vunpack.c.l.b16 %v1347
        %v1678 = vunpack.c.l.b16 %v1348
        %v1679 = vunpack.c.l.b16 %v1349
        %v1680 = vunpack.c.l.b16 %v1350
        %v1681 = vunpack.c.l.b16 %v1351
        %v1682 = vunpack.c.l.b16 %v1352
        %v1683 = vunpack.c.l.b16 %v1353
        %v1684 = vunpack.c.l.b16 %v1354
        %v1685 = vunpack.c.l.b16 %v1355
        %v1686 = vunpack.c.l.b16 %v1356
        %v1687 = vunpack.c.l.b16 %v1357
        %v1688 = vunpack.c.l.b16 %v1358
        %v1689 = vunpack.c.l.b16 %v1359
        %v1690 = vunpack.c.l.b16 %v1360
        %v1691 = vpack.c.b16 %v1676, %v1675
        %v1692 = vpack.c.b16 %v1678, %v1677
        %v1693 = vpack.c.b16 %v1680, %v1679
        %v1694 = vpack.c.b16 %v1682, %v1681
        %v1695 = vpack.c.b16 %v1684, %v1683
        %v1696 = vpack.c.b16 %v1686, %v1685
        %v1697 = vpack.c.b16 %v1688, %v1687
        %v1698 = vpack.c.b16 %v1690, %v1689
        %1707 = vmatpush.bf16.msra.mxu0 %v1698
        %1708 = vmatpush.bf16.msra.mxu0 %v1697
        %1709 = vmatpush.bf16.msra.mxu0 %v1696
        %1710 = vmatpush.bf16.msra.mxu0 %v1695
        %1711 = vmatpush.bf16.msra.mxu0 %v1694
        %1712 = vmatpush.bf16.msra.mxu0 %v1693
        %1713 = vmatpush.bf16.msra.mxu0 %v1692
        %1714 = vmatpush.bf16.msra.mxu0 %v1691
        %1715 = vmatmul.bf16.gmra.mxu0 %v1651
        %v1716 = vpop.f32.mrf.mxu0
        %v1717 = vadd.f32 0.0, %v1716
        %v1718 = vpop.f32.mrf.mxu0
        %v1719 = vadd.f32 0.0, %v1718
        %1720 = vmatmul.bf16.gmra.mxu0 %v1652
        %v1721 = vpop.f32.mrf.mxu0
        %v1722 = vadd.f32 0.0, %v1721
        %v1723 = vpop.f32.mrf.mxu0
        %v1724 = vadd.f32 0.0, %v1723
        %1725 = vmatmul.bf16.gmra.mxu0 %v1653
        %v1726 = vpop.f32.mrf.mxu0
        %v1727 = vadd.f32 0.0, %v1726
        %v1728 = vpop.f32.mrf.mxu0
        %v1729 = vadd.f32 0.0, %v1728
        %1730 = vmatmul.bf16.gmra.mxu0 %v1654
        %v1731 = vpop.f32.mrf.mxu0
        %v1732 = vadd.f32 0.0, %v1731
        %v1733 = vpop.f32.mrf.mxu0
        %v1734 = vadd.f32 0.0, %v1733
        %1735 = vmatmul.bf16.gmra.mxu0 %v1655
        %v1736 = vpop.f32.mrf.mxu0
        %v1737 = vadd.f32 0.0, %v1736
        %v1738 = vpop.f32.mrf.mxu0
        %v1739 = vadd.f32 0.0, %v1738
        %1740 = vmatmul.bf16.gmra.mxu0 %v1656
        %v1741 = vpop.f32.mrf.mxu0
        %v1742 = vadd.f32 0.0, %v1741
        %v1743 = vpop.f32.mrf.mxu0
        %v1744 = vadd.f32 0.0, %v1743
        %1745 = vmatmul.bf16.gmra.mxu0 %v1657
        %v1746 = vpop.f32.mrf.mxu0
        %v1747 = vadd.f32 0.0, %v1746
        %v1748 = vpop.f32.mrf.mxu0
        %v1749 = vadd.f32 0.0, %v1748
        %1750 = vmatmul.bf16.gmra.mxu0 %v1658
        %v1751 = vpop.f32.mrf.mxu0
        %v1752 = vadd.f32 0.0, %v1751
        %v1753 = vpop.f32.mrf.mxu0
        %v1754 = vadd.f32 0.0, %v1753
        %1755 = vdwg.mxu0
        %v1756 = vrcp.pop %v1620
        %v1757 = vrcp.pop %v1622
        %v1758 = vrcp.pop %v1624
        %v1759 = vrcp.pop %v1626
        %v1760 = vrcp.pop %v1628
        %v1761 = vrcp.pop %v1630
        %v1762 = vrcp.pop %v1632
        %v1763 = vrcp.pop %v1634
        %v1764 = vrcp.pop %v1636
        %v1765 = vrcp.pop %v1638
        %v1766 = vrcp.pop %v1640
        %v1767 = vrcp.pop %v1642
        %v1768 = vrcp.pop %v1644
        %v1769 = vrcp.pop %v1646
        %v1770 = vrcp.pop %v1648
        %v1771 = vrcp.pop %v1650
        %v1772 = vmul.f32 %v1717, %v1756
        %v1773 = vmul.f32 %v1719, %v1757
        %v1774 = vmul.f32 %v1722, %v1758
        %v1775 = vmul.f32 %v1724, %v1759
        %v1776 = vmul.f32 %v1727, %v1760
        %v1777 = vmul.f32 %v1729, %v1761
        %v1778 = vmul.f32 %v1732, %v1762
        %v1779 = vmul.f32 %v1734, %v1763
        %v1780 = vmul.f32 %v1737, %v1764
        %v1781 = vmul.f32 %v1739, %v1765
        %v1782 = vmul.f32 %v1742, %v1766
        %v1783 = vmul.f32 %v1744, %v1767
        %v1784 = vmul.f32 %v1747, %v1768
        %v1785 = vmul.f32 %v1749, %v1769
        %v1786 = vmul.f32 %v1752, %v1770
        %v1787 = vmul.f32 %v1754, %v1771
        %v1788 = vpack.c.bf16 %v1773, %v1772
        %v1789 = vpack.c.bf16 %v1775, %v1774
        %v1790 = vpack.c.bf16 %v1777, %v1776
        %v1791 = vpack.c.bf16 %v1779, %v1778
        %v1792 = vpack.c.bf16 %v1781, %v1780
        %v1793 = vpack.c.bf16 %v1783, %v1782
        %v1794 = vpack.c.bf16 %v1785, %v1784
        %v1795 = vpack.c.bf16 %v1787, %v1786
        %v1796 = vld [vmem:[#allocation10] sm:$0xf]
        %v1797 = vld [vmem:[#allocation10 + $0x4] sm:$0xf]
        %v1798 = vld [vmem:[#allocation10 + $0x8] sm:$0xf]
        %v1799 = vld [vmem:[#allocation10 + $0xc] sm:$0xf]
        %v1804 = vunpack.c.l.b16 %v1796
        %v1805 = vunpack.c.l.b16 %v1797
        %v1806 = vunpack.c.l.b16 %v1798
        %v1807 = vunpack.c.l.b16 %v1799
        %v1808 = vpack.c.b16 %v1805, %v1804
        %v1809 = vpack.c.b16 %v1807, %v1806
        %v1813 = vsel %vm1441, %v1788, 0
        %v1816 = vsel %vm1441, %v1789, 0
        %v1819 = vsel %vm1441, %v1790, 0
        %v1822 = vsel %vm1441, %v1791, 0
        %v1825 = vsel %vm1441, %v1792, 0
        %v1828 = vsel %vm1441, %v1793, 0
        %v1831 = vsel %vm1441, %v1794, 0
        %v1834 = vsel %vm1441, %v1795, 0
        %1836 = vmatpush.bf16.msra.mxu0 0
        %1837 = vmatpush.bf16.msra.mxu0 0
        %1838 = vmatpush.bf16.msra.mxu0 0
        %1839 = vmatpush.bf16.msra.mxu0 0
        %1840 = vmatpush.bf16.msra.mxu0 0
        %1841 = vmatpush.bf16.msra.mxu0 0
        %1842 = vmatpush.bf16.msra.mxu0 %v1809
        %1843 = vmatpush.bf16.msra.mxu0 %v1808
        %1844 = vmatmul.bf16.gmra.mxu0 %v1813
        %v1845 = vpop.f32.mrf.mxu0
        %v1846 = vadd.f32 0.0, %v1845
        %v1847 = vpop.f32.mrf.mxu0
        %v1848 = vadd.f32 0.0, %v1847
        %1849 = vmatmul.bf16.gmra.mxu0 %v1816
        %v1850 = vpop.f32.mrf.mxu0
        %v1851 = vadd.f32 0.0, %v1850
        %v1852 = vpop.f32.mrf.mxu0
        %v1853 = vadd.f32 0.0, %v1852
        %1854 = vmatmul.bf16.gmra.mxu0 %v1819
        %v1855 = vpop.f32.mrf.mxu0
        %v1856 = vadd.f32 0.0, %v1855
        %v1857 = vpop.f32.mrf.mxu0
        %v1858 = vadd.f32 0.0, %v1857
        %1859 = vmatmul.bf16.gmra.mxu0 %v1822
        %v1860 = vpop.f32.mrf.mxu0
        %v1861 = vadd.f32 0.0, %v1860
        %v1862 = vpop.f32.mrf.mxu0
        %v1863 = vadd.f32 0.0, %v1862
        %1864 = vmatmul.bf16.gmra.mxu0 %v1825
        %v1865 = vpop.f32.mrf.mxu0
        %v1866 = vadd.f32 0.0, %v1865
        %v1867 = vpop.f32.mrf.mxu0
        %v1868 = vadd.f32 0.0, %v1867
        %1869 = vmatmul.bf16.gmra.mxu0 %v1828
        %v1870 = vpop.f32.mrf.mxu0
        %v1871 = vadd.f32 0.0, %v1870
        %v1872 = vpop.f32.mrf.mxu0
        %v1873 = vadd.f32 0.0, %v1872
        %1874 = vmatmul.bf16.gmra.mxu0 %v1831
        %v1875 = vpop.f32.mrf.mxu0
        %v1876 = vadd.f32 0.0, %v1875
        %v1877 = vpop.f32.mrf.mxu0
        %v1878 = vadd.f32 0.0, %v1877
        %1879 = vmatmul.bf16.gmra.mxu0 %v1834
        %v1880 = vpop.f32.mrf.mxu0
        %v1881 = vadd.f32 0.0, %v1880
        %v1882 = vpop.f32.mrf.mxu0
        %v1883 = vadd.f32 0.0, %v1882
        %1884 = vdwg.mxu0
        %1885 = vst [vmem:[#allocation3] sm:$0xff] %v1846
        %1886 = vst [vmem:[#allocation3 + $0x8] sm:$0xff] %v1848
        %1887 = vst [vmem:[#allocation3 + $0x10] sm:$0xff] %v1851
        %1888 = vst [vmem:[#allocation3 + $0x18] sm:$0xff] %v1853
        %1889 = vst [vmem:[#allocation3 + $0x20] sm:$0xff] %v1856
        %1890 = vst [vmem:[#allocation3 + $0x28] sm:$0xff] %v1858
        %1891 = vst [vmem:[#allocation3 + $0x30] sm:$0xff] %v1861
        %1892 = vst [vmem:[#allocation3 + $0x38] sm:$0xff] %v1863
        %1893 = vst [vmem:[#allocation3 + $0x40] sm:$0xff] %v1866
        %1894 = vst [vmem:[#allocation3 + $0x48] sm:$0xff] %v1868
        %1895 = vst [vmem:[#allocation3 + $0x50] sm:$0xff] %v1871
        %1896 = vst [vmem:[#allocation3 + $0x58] sm:$0xff] %v1873
        %1897 = vst [vmem:[#allocation3 + $0x60] sm:$0xff] %v1876
        %1898 = vst [vmem:[#allocation3 + $0x68] sm:$0xff] %v1878
        %1899 = vst [vmem:[#allocation3 + $0x70] sm:$0xff] %v1881
        %1900 = vst [vmem:[#allocation3 + $0x78] sm:$0xff] %v1883
        %v1901 = vld [vmem:[#allocation2] sm:$0xf]
        %v1902 = vld [vmem:[#allocation2 + $0xc] sm:$0xf]
        %v1903 = vld [vmem:[#allocation2 + $0x18] sm:$0xf]
        %v1904 = vld [vmem:[#allocation2 + $0x24] sm:$0xf]
        %v1905 = vld [vmem:[#allocation2 + $0x30] sm:$0xf]
        %v1906 = vld [vmem:[#allocation2 + $0x3c] sm:$0xf]
        %v1907 = vld [vmem:[#allocation2 + $0x48] sm:$0xf]
        %v1908 = vld [vmem:[#allocation2 + $0x54] sm:$0xf]
        %v1909 = vld [vmem:[#allocation2 + $0x60] sm:$0xf]
        %v1910 = vld [vmem:[#allocation2 + $0x6c] sm:$0xf]
        %v1911 = vld [vmem:[#allocation2 + $0x78] sm:$0xf]
        %v1912 = vld [vmem:[#allocation2 + $0x84] sm:$0xf]
        %v1913 = vld [vmem:[#allocation2 + $0x90] sm:$0xf]
        %v1914 = vld [vmem:[#allocation2 + $0x9c] sm:$0xf]
        %v1915 = vld [vmem:[#allocation2 + $0xa8] sm:$0xf]
        %v1916 = vld [vmem:[#allocation2 + $0xb4] sm:$0xf]
        %v1917 = vld [vmem:[#allocation2 + $0x4] sm:$0xf]
        %v1918 = vld [vmem:[#allocation2 + $0x10] sm:$0xf]
        %v1919 = vld [vmem:[#allocation2 + $0x1c] sm:$0xf]
        %v1920 = vld [vmem:[#allocation2 + $0x28] sm:$0xf]
        %v1921 = vld [vmem:[#allocation2 + $0x34] sm:$0xf]
        %v1922 = vld [vmem:[#allocation2 + $0x40] sm:$0xf]
        %v1923 = vld [vmem:[#allocation2 + $0x4c] sm:$0xf]
        %v1924 = vld [vmem:[#allocation2 + $0x58] sm:$0xf]
        %v1925 = vld [vmem:[#allocation2 + $0x64] sm:$0xf]
        %v1926 = vld [vmem:[#allocation2 + $0x70] sm:$0xf]
        %v1927 = vld [vmem:[#allocation2 + $0x7c] sm:$0xf]
        %v1928 = vld [vmem:[#allocation2 + $0x88] sm:$0xf]
        %v1929 = vld [vmem:[#allocation2 + $0x94] sm:$0xf]
        %v1930 = vld [vmem:[#allocation2 + $0xa0] sm:$0xf]
        %v1931 = vld [vmem:[#allocation2 + $0xac] sm:$0xf]
        %v1932 = vld [vmem:[#allocation2 + $0xb8] sm:$0xf]
        %v1933 = vld [vmem:[#allocation2 + $0x8] sm:$0xf]
        %v1934 = vld [vmem:[#allocation2 + $0x14] sm:$0xf]
        %v1935 = vld [vmem:[#allocation2 + $0x20] sm:$0xf]
        %v1936 = vld [vmem:[#allocation2 + $0x2c] sm:$0xf]
        %v1937 = vld [vmem:[#allocation2 + $0x38] sm:$0xf]
        %v1938 = vld [vmem:[#allocation2 + $0x44] sm:$0xf]
        %v1939 = vld [vmem:[#allocation2 + $0x50] sm:$0xf]
        %v1940 = vld [vmem:[#allocation2 + $0x5c] sm:$0xf]
        %v1941 = vld [vmem:[#allocation2 + $0x68] sm:$0xf]
        %v1942 = vld [vmem:[#allocation2 + $0x74] sm:$0xf]
        %v1943 = vld [vmem:[#allocation2 + $0x80] sm:$0xf]
        %v1944 = vld [vmem:[#allocation2 + $0x8c] sm:$0xf]
        %v1945 = vld [vmem:[#allocation2 + $0x98] sm:$0xf]
        %v1946 = vld [vmem:[#allocation2 + $0xa4] sm:$0xf]
        %v1947 = vld [vmem:[#allocation2 + $0xb0] sm:$0xf]
        %v1948 = vld [vmem:[#allocation2 + $0xbc] sm:$0xf]
        %v1965 = vunpack.c.l.b16 %v1901
        %v1966 = vunpack.c.l.b16 %v1902
        %v1967 = vunpack.c.l.b16 %v1903
        %v1968 = vunpack.c.l.b16 %v1904
        %v1969 = vunpack.c.l.b16 %v1905
        %v1970 = vunpack.c.l.b16 %v1906
        %v1971 = vunpack.c.l.b16 %v1907
        %v1972 = vunpack.c.l.b16 %v1908
        %v1973 = vunpack.c.l.b16 %v1909
        %v1974 = vunpack.c.l.b16 %v1910
        %v1975 = vunpack.c.l.b16 %v1911
        %v1976 = vunpack.c.l.b16 %v1912
        %v1977 = vunpack.c.l.b16 %v1913
        %v1978 = vunpack.c.l.b16 %v1914
        %v1979 = vunpack.c.l.b16 %v1915
        %v1980 = vunpack.c.l.b16 %v1916
        %v1981 = vpack.c.b16 %v1966, %v1965
        %v1982 = vpack.c.b16 %v1968, %v1967
        %v1983 = vpack.c.b16 %v1970, %v1969
        %v1984 = vpack.c.b16 %v1972, %v1971
        %v1985 = vpack.c.b16 %v1974, %v1973
        %v1986 = vpack.c.b16 %v1976, %v1975
        %v1987 = vpack.c.b16 %v1978, %v1977
        %v1988 = vpack.c.b16 %v1980, %v1979
        %1989 = vrot.lane.b32.xlu0 %v1981, 96
        %v1990 = vpop.permute.xlu0 %1989
        %1991 = vrot.lane.b32.xlu0 %v1982, 96
        %v1992 = vpop.permute.xlu0 %1991
        %1993 = vrot.lane.b32.xlu0 %v1983, 96
        %v1994 = vpop.permute.xlu0 %1993
        %1995 = vrot.lane.b32.xlu0 %v1984, 96
        %v1996 = vpop.permute.xlu0 %1995
        %1997 = vrot.lane.b32.xlu0 %v1985, 96
        %v1998 = vpop.permute.xlu0 %1997
        %1999 = vrot.lane.b32.xlu0 %v1986, 96
        %v2000 = vpop.permute.xlu0 %1999
        %2001 = vrot.lane.b32.xlu0 %v1987, 96
        %v2002 = vpop.permute.xlu0 %2001
        %2003 = vrot.lane.b32.xlu0 %v1988, 96
        %v2004 = vpop.permute.xlu0 %2003
        %v2021 = vunpack.c.l.b16 %v1917
        %v2022 = vunpack.c.l.b16 %v1918
        %v2023 = vunpack.c.l.b16 %v1919
        %v2024 = vunpack.c.l.b16 %v1920
        %v2025 = vunpack.c.l.b16 %v1921
        %v2026 = vunpack.c.l.b16 %v1922
        %v2027 = vunpack.c.l.b16 %v1923
        %v2028 = vunpack.c.l.b16 %v1924
        %v2029 = vunpack.c.l.b16 %v1925
        %v2030 = vunpack.c.l.b16 %v1926
        %v2031 = vunpack.c.l.b16 %v1927
        %v2032 = vunpack.c.l.b16 %v1928
        %v2033 = vunpack.c.l.b16 %v1929
        %v2034 = vunpack.c.l.b16 %v1930
        %v2035 = vunpack.c.l.b16 %v1931
        %v2036 = vunpack.c.l.b16 %v1932
        %v2037 = vpack.c.b16 %v2022, %v2021
        %v2038 = vpack.c.b16 %v2024, %v2023
        %v2039 = vpack.c.b16 %v2026, %v2025
        %v2040 = vpack.c.b16 %v2028, %v2027
        %v2041 = vpack.c.b16 %v2030, %v2029
        %v2042 = vpack.c.b16 %v2032, %v2031
        %v2043 = vpack.c.b16 %v2034, %v2033
        %v2044 = vpack.c.b16 %v2036, %v2035
        %2045 = vrot.lane.b32.xlu0 %v2037, 96
        %v2046 = vpop.permute.xlu0 %2045
        %2047 = vrot.lane.b32.xlu0 %v2038, 96
        %v2048 = vpop.permute.xlu0 %2047
        %2049 = vrot.lane.b32.xlu0 %v2039, 96
        %v2050 = vpop.permute.xlu0 %2049
        %2051 = vrot.lane.b32.xlu0 %v2040, 96
        %v2052 = vpop.permute.xlu0 %2051
        %2053 = vrot.lane.b32.xlu0 %v2041, 96
        %v2054 = vpop.permute.xlu0 %2053
        %2055 = vrot.lane.b32.xlu0 %v2042, 96
        %v2056 = vpop.permute.xlu0 %2055
        %2057 = vrot.lane.b32.xlu0 %v2043, 96
        %v2058 = vpop.permute.xlu0 %2057
        %2059 = vrot.lane.b32.xlu0 %v2044, 96
        %v2060 = vpop.permute.xlu0 %2059
        %v2062 = vsel %vm1441, %v1990, 0
        %v2065 = vsel %vm1441, %v1992, 0
        %v2068 = vsel %vm1441, %v1994, 0
        %v2071 = vsel %vm1441, %v1996, 0
        %v2074 = vsel %vm1441, %v1998, 0
        %v2077 = vsel %vm1441, %v2000, 0
        %v2080 = vsel %vm1441, %v2002, 0
        %v2083 = vsel %vm1441, %v2004, 0
        %v2086 = vsel %vm1441, %v2046, 0
        %v2089 = vsel %vm1441, %v2048, 0
        %v2092 = vsel %vm1441, %v2050, 0
        %v2095 = vsel %vm1441, %v2052, 0
        %v2098 = vsel %vm1441, %v2054, 0
        %v2101 = vsel %vm1441, %v2056, 0
        %v2104 = vsel %vm1441, %v2058, 0
        %v2107 = vsel %vm1441, %v2060, 0
        %2109 = vmatpush.bf16.xpose.msra.mxu0 %v2107
        %2110 = vmatpush.bf16.xpose.msra.mxu0 %v2104
        %2111 = vmatpush.bf16.xpose.msra.mxu0 %v2101
        %2112 = vmatpush.bf16.xpose.msra.mxu0 %v2098
        %2113 = vmatpush.bf16.xpose.msra.mxu0 %v2095
        %2114 = vmatpush.bf16.xpose.msra.mxu0 %v2092
        %2115 = vmatpush.bf16.xpose.msra.mxu0 %v2089
        %2116 = vmatpush.bf16.xpose.msra.mxu0 %v2086
        %2117 = vmatmul.bf16.gmra.mxu0 %v2062
        %v2118 = vpop.f32.mrf.mxu0
        %v2119 = vadd.f32 0.0, %v2118
        %v2120 = vpop.f32.mrf.mxu0
        %v2121 = vadd.f32 0.0, %v2120
        %2122 = vmatmul.bf16.gmra.mxu0 %v2065
        %v2123 = vpop.f32.mrf.mxu0
        %v2124 = vadd.f32 0.0, %v2123
        %v2125 = vpop.f32.mrf.mxu0
        %v2126 = vadd.f32 0.0, %v2125
        %2127 = vmatmul.bf16.gmra.mxu0 %v2068
        %v2128 = vpop.f32.mrf.mxu0
        %v2129 = vadd.f32 0.0, %v2128
        %v2130 = vpop.f32.mrf.mxu0
        %v2131 = vadd.f32 0.0, %v2130
        %2132 = vmatmul.bf16.gmra.mxu0 %v2071
        %v2133 = vpop.f32.mrf.mxu0
        %v2134 = vadd.f32 0.0, %v2133
        %v2135 = vpop.f32.mrf.mxu0
        %v2136 = vadd.f32 0.0, %v2135
        %2137 = vmatmul.bf16.gmra.mxu0 %v2074
        %v2138 = vpop.f32.mrf.mxu0
        %v2139 = vadd.f32 0.0, %v2138
        %v2140 = vpop.f32.mrf.mxu0
        %v2141 = vadd.f32 0.0, %v2140
        %2142 = vmatmul.bf16.gmra.mxu0 %v2077
        %v2143 = vpop.f32.mrf.mxu0
        %v2144 = vadd.f32 0.0, %v2143
        %v2145 = vpop.f32.mrf.mxu0
        %v2146 = vadd.f32 0.0, %v2145
        %2147 = vmatmul.bf16.gmra.mxu0 %v2080
        %v2148 = vpop.f32.mrf.mxu0
        %v2149 = vadd.f32 0.0, %v2148
        %v2150 = vpop.f32.mrf.mxu0
        %v2151 = vadd.f32 0.0, %v2150
        %2152 = vmatmul.bf16.gmra.mxu0 %v2083
        %v2153 = vpop.f32.mrf.mxu0
        %v2154 = vadd.f32 0.0, %v2153
        %v2155 = vpop.f32.mrf.mxu0
        %v2156 = vadd.f32 0.0, %v2155
        %2157 = vdwg.mxu0
        %2158 = vmax.xlane.f32.xlu0 %v2119
        %v2159 = vpop.xlane.xlu0 %2158
        %2160 = vmax.xlane.f32.xlu0 %v2121
        %v2161 = vpop.xlane.xlu0 %2160
        %2162 = vmax.xlane.f32.xlu0 %v2124
        %v2163 = vpop.xlane.xlu0 %2162
        %2164 = vmax.xlane.f32.xlu0 %v2126
        %v2165 = vpop.xlane.xlu0 %2164
        %2166 = vmax.xlane.f32.xlu0 %v2129
        %v2167 = vpop.xlane.xlu0 %2166
        %2168 = vmax.xlane.f32.xlu0 %v2131
        %v2169 = vpop.xlane.xlu0 %2168
        %2170 = vmax.xlane.f32.xlu0 %v2134
        %v2171 = vpop.xlane.xlu0 %2170
        %2172 = vmax.xlane.f32.xlu0 %v2136
        %v2173 = vpop.xlane.xlu0 %2172
        %2174 = vmax.xlane.f32.xlu0 %v2139
        %v2175 = vpop.xlane.xlu0 %2174
        %2176 = vmax.xlane.f32.xlu0 %v2141
        %v2177 = vpop.xlane.xlu0 %2176
        %2178 = vmax.xlane.f32.xlu0 %v2144
        %v2179 = vpop.xlane.xlu0 %2178
        %2180 = vmax.xlane.f32.xlu0 %v2146
        %v2181 = vpop.xlane.xlu0 %2180
        %2182 = vmax.xlane.f32.xlu0 %v2149
        %v2183 = vpop.xlane.xlu0 %2182
        %2184 = vmax.xlane.f32.xlu0 %v2151
        %v2185 = vpop.xlane.xlu0 %2184
        %2186 = vmax.xlane.f32.xlu0 %v2154
        %v2187 = vpop.xlane.xlu0 %2186
        %2188 = vmax.xlane.f32.xlu0 %v2156
        %v2189 = vpop.xlane.xlu0 %2188
        %v2190 = vsub.f32 %v2119, %v2159
        %v2191 = vsub.f32 %v2121, %v2161
        %v2192 = vsub.f32 %v2124, %v2163
        %v2193 = vsub.f32 %v2126, %v2165
        %v2194 = vsub.f32 %v2129, %v2167
        %v2195 = vsub.f32 %v2131, %v2169
        %v2196 = vsub.f32 %v2134, %v2171
        %v2197 = vsub.f32 %v2136, %v2173
        %v2198 = vsub.f32 %v2139, %v2175
        %v2199 = vsub.f32 %v2141, %v2177
        %v2200 = vsub.f32 %v2144, %v2179
        %v2201 = vsub.f32 %v2146, %v2181
        %v2202 = vsub.f32 %v2149, %v2183
        %v2203 = vsub.f32 %v2151, %v2185
        %v2204 = vsub.f32 %v2154, %v2187
        %v2205 = vsub.f32 %v2156, %v2189
        %v2206 = vmul.f32 %v2190, 1.442695
        %v2207 = vpow.pop %v2206
        %v2208 = vmul.f32 %v2191, 1.442695
        %v2209 = vpow.pop %v2208
        %v2210 = vmul.f32 %v2192, 1.442695
        %v2211 = vpow.pop %v2210
        %v2212 = vmul.f32 %v2193, 1.442695
        %v2213 = vpow.pop %v2212
        %v2214 = vmul.f32 %v2194, 1.442695
        %v2215 = vpow.pop %v2214
        %v2216 = vmul.f32 %v2195, 1.442695
        %v2217 = vpow.pop %v2216
        %v2218 = vmul.f32 %v2196, 1.442695
        %v2219 = vpow.pop %v2218
        %v2220 = vmul.f32 %v2197, 1.442695
        %v2221 = vpow.pop %v2220
        %v2222 = vmul.f32 %v2198, 1.442695
        %v2223 = vpow.pop %v2222
        %v2224 = vmul.f32 %v2199, 1.442695
        %v2225 = vpow.pop %v2224
        %v2226 = vmul.f32 %v2200, 1.442695
        %v2227 = vpow.pop %v2226
        %v2228 = vmul.f32 %v2201, 1.442695
        %v2229 = vpow.pop %v2228
        %v2230 = vmul.f32 %v2202, 1.442695
        %v2231 = vpow.pop %v2230
        %v2232 = vmul.f32 %v2203, 1.442695
        %v2233 = vpow.pop %v2232
        %v2234 = vmul.f32 %v2204, 1.442695
        %v2235 = vpow.pop %v2234
        %v2236 = vmul.f32 %v2205, 1.442695
        %v2237 = vpow.pop %v2236
        %2238 = vadd.xlane.f32.xlu0 %v2207
        %v2239 = vpop.xlane.xlu0 %2238
        %2240 = vadd.xlane.f32.xlu0 %v2209
        %v2241 = vpop.xlane.xlu0 %2240
        %2242 = vadd.xlane.f32.xlu0 %v2211
        %v2243 = vpop.xlane.xlu0 %2242
        %2244 = vadd.xlane.f32.xlu0 %v2213
        %v2245 = vpop.xlane.xlu0 %2244
        %2246 = vadd.xlane.f32.xlu0 %v2215
        %v2247 = vpop.xlane.xlu0 %2246
        %2248 = vadd.xlane.f32.xlu0 %v2217
        %v2249 = vpop.xlane.xlu0 %2248
        %2250 = vadd.xlane.f32.xlu0 %v2219
        %v2251 = vpop.xlane.xlu0 %2250
        %2252 = vadd.xlane.f32.xlu0 %v2221
        %v2253 = vpop.xlane.xlu0 %2252
        %2254 = vadd.xlane.f32.xlu0 %v2223
        %v2255 = vpop.xlane.xlu0 %2254
        %2256 = vadd.xlane.f32.xlu0 %v2225
        %v2257 = vpop.xlane.xlu0 %2256
        %2258 = vadd.xlane.f32.xlu0 %v2227
        %v2259 = vpop.xlane.xlu0 %2258
        %2260 = vadd.xlane.f32.xlu0 %v2229
        %v2261 = vpop.xlane.xlu0 %2260
        %2262 = vadd.xlane.f32.xlu0 %v2231
        %v2263 = vpop.xlane.xlu0 %2262
        %2264 = vadd.xlane.f32.xlu0 %v2233
        %v2265 = vpop.xlane.xlu0 %2264
        %2266 = vadd.xlane.f32.xlu0 %v2235
        %v2267 = vpop.xlane.xlu0 %2266
        %2268 = vadd.xlane.f32.xlu0 %v2237
        %v2269 = vpop.xlane.xlu0 %2268
        %v2270 = vpack.c.bf16 %v2209, %v2207
        %v2271 = vpack.c.bf16 %v2213, %v2211
        %v2272 = vpack.c.bf16 %v2217, %v2215
        %v2273 = vpack.c.bf16 %v2221, %v2219
        %v2274 = vpack.c.bf16 %v2225, %v2223
        %v2275 = vpack.c.bf16 %v2229, %v2227
        %v2276 = vpack.c.bf16 %v2233, %v2231
        %v2277 = vpack.c.bf16 %v2237, %v2235
        %v2294 = vunpack.c.l.b16 %v1933
        %v2295 = vunpack.c.l.b16 %v1934
        %v2296 = vunpack.c.l.b16 %v1935
        %v2297 = vunpack.c.l.b16 %v1936
        %v2298 = vunpack.c.l.b16 %v1937
        %v2299 = vunpack.c.l.b16 %v1938
        %v2300 = vunpack.c.l.b16 %v1939
        %v2301 = vunpack.c.l.b16 %v1940
        %v2302 = vunpack.c.l.b16 %v1941
        %v2303 = vunpack.c.l.b16 %v1942
        %v2304 = vunpack.c.l.b16 %v1943
        %v2305 = vunpack.c.l.b16 %v1944
        %v2306 = vunpack.c.l.b16 %v1945
        %v2307 = vunpack.c.l.b16 %v1946
        %v2308 = vunpack.c.l.b16 %v1947
        %v2309 = vunpack.c.l.b16 %v1948
        %v2310 = vpack.c.b16 %v2295, %v2294
        %v2311 = vpack.c.b16 %v2297, %v2296
        %v2312 = vpack.c.b16 %v2299, %v2298
        %v2313 = vpack.c.b16 %v2301, %v2300
        %v2314 = vpack.c.b16 %v2303, %v2302
        %v2315 = vpack.c.b16 %v2305, %v2304
        %v2316 = vpack.c.b16 %v2307, %v2306
        %v2317 = vpack.c.b16 %v2309, %v2308
        %2318 = vrot.lane.b32.xlu0 %v2310, 96
        %v2319 = vpop.permute.xlu0 %2318
        %2320 = vrot.lane.b32.xlu0 %v2311, 96
        %v2321 = vpop.permute.xlu0 %2320
        %2322 = vrot.lane.b32.xlu0 %v2312, 96
        %v2323 = vpop.permute.xlu0 %2322
        %2324 = vrot.lane.b32.xlu0 %v2313, 96
        %v2325 = vpop.permute.xlu0 %2324
        %2326 = vrot.lane.b32.xlu0 %v2314, 96
        %v2327 = vpop.permute.xlu0 %2326
        %2328 = vrot.lane.b32.xlu0 %v2315, 96
        %v2329 = vpop.permute.xlu0 %2328
        %2330 = vrot.lane.b32.xlu0 %v2316, 96
        %v2331 = vpop.permute.xlu0 %2330
        %2332 = vrot.lane.b32.xlu0 %v2317, 96
        %v2333 = vpop.permute.xlu0 %2332
        %2342 = vmatpush.bf16.msra.mxu0 %v2333
        %2343 = vmatpush.bf16.msra.mxu0 %v2331
        %2344 = vmatpush.bf16.msra.mxu0 %v2329
        %2345 = vmatpush.bf16.msra.mxu0 %v2327
        %2346 = vmatpush.bf16.msra.mxu0 %v2325
        %2347 = vmatpush.bf16.msra.mxu0 %v2323
        %2348 = vmatpush.bf16.msra.mxu0 %v2321
        %2349 = vmatpush.bf16.msra.mxu0 %v2319
        %2350 = vmatmul.bf16.gmra.mxu0 %v2270
        %v2351 = vpop.f32.mrf.mxu0
        %v2352 = vadd.f32 0.0, %v2351
        %v2353 = vpop.f32.mrf.mxu0
        %v2354 = vadd.f32 0.0, %v2353
        %2355 = vmatmul.bf16.gmra.mxu0 %v2271
        %v2356 = vpop.f32.mrf.mxu0
        %v2357 = vadd.f32 0.0, %v2356
        %v2358 = vpop.f32.mrf.mxu0
        %v2359 = vadd.f32 0.0, %v2358
        %2360 = vmatmul.bf16.gmra.mxu0 %v2272
        %v2361 = vpop.f32.mrf.mxu0
        %v2362 = vadd.f32 0.0, %v2361
        %v2363 = vpop.f32.mrf.mxu0
        %v2364 = vadd.f32 0.0, %v2363
        %2365 = vmatmul.bf16.gmra.mxu0 %v2273
        %v2366 = vpop.f32.mrf.mxu0
        %v2367 = vadd.f32 0.0, %v2366
        %v2368 = vpop.f32.mrf.mxu0
        %v2369 = vadd.f32 0.0, %v2368
        %2370 = vmatmul.bf16.gmra.mxu0 %v2274
        %v2371 = vpop.f32.mrf.mxu0
        %v2372 = vadd.f32 0.0, %v2371
        %v2373 = vpop.f32.mrf.mxu0
        %v2374 = vadd.f32 0.0, %v2373
        %2375 = vmatmul.bf16.gmra.mxu0 %v2275
        %v2376 = vpop.f32.mrf.mxu0
        %v2377 = vadd.f32 0.0, %v2376
        %v2378 = vpop.f32.mrf.mxu0
        %v2379 = vadd.f32 0.0, %v2378
        %2380 = vmatmul.bf16.gmra.mxu0 %v2276
        %v2381 = vpop.f32.mrf.mxu0
        %v2382 = vadd.f32 0.0, %v2381
        %v2383 = vpop.f32.mrf.mxu0
        %v2384 = vadd.f32 0.0, %v2383
        %2385 = vmatmul.bf16.gmra.mxu0 %v2277
        %v2386 = vpop.f32.mrf.mxu0
        %v2387 = vadd.f32 0.0, %v2386
        %v2388 = vpop.f32.mrf.mxu0
        %v2389 = vadd.f32 0.0, %v2388
        %2390 = vdwg.mxu0
        %v2391 = vrcp.pop %v2239
        %v2392 = vrcp.pop %v2241
        %v2393 = vrcp.pop %v2243
        %v2394 = vrcp.pop %v2245
        %v2395 = vrcp.pop %v2247
        %v2396 = vrcp.pop %v2249
        %v2397 = vrcp.pop %v2251
        %v2398 = vrcp.pop %v2253
        %v2399 = vrcp.pop %v2255
        %v2400 = vrcp.pop %v2257
        %v2401 = vrcp.pop %v2259
        %v2402 = vrcp.pop %v2261
        %v2403 = vrcp.pop %v2263
        %v2404 = vrcp.pop %v2265
        %v2405 = vrcp.pop %v2267
        %v2406 = vrcp.pop %v2269
        %v2407 = vmul.f32 %v2352, %v2391
        %v2408 = vmul.f32 %v2354, %v2392
        %v2409 = vmul.f32 %v2357, %v2393
        %v2410 = vmul.f32 %v2359, %v2394
        %v2411 = vmul.f32 %v2362, %v2395
        %v2412 = vmul.f32 %v2364, %v2396
        %v2413 = vmul.f32 %v2367, %v2397
        %v2414 = vmul.f32 %v2369, %v2398
        %v2415 = vmul.f32 %v2372, %v2399
        %v2416 = vmul.f32 %v2374, %v2400
        %v2417 = vmul.f32 %v2377, %v2401
        %v2418 = vmul.f32 %v2379, %v2402
        %v2419 = vmul.f32 %v2382, %v2403
        %v2420 = vmul.f32 %v2384, %v2404
        %v2421 = vmul.f32 %v2387, %v2405
        %v2422 = vmul.f32 %v2389, %v2406
        %v2423 = vpack.c.bf16 %v2408, %v2407
        %v2424 = vpack.c.bf16 %v2410, %v2409
        %v2425 = vpack.c.bf16 %v2412, %v2411
        %v2426 = vpack.c.bf16 %v2414, %v2413
        %v2427 = vpack.c.bf16 %v2416, %v2415
        %v2428 = vpack.c.bf16 %v2418, %v2417
        %v2429 = vpack.c.bf16 %v2420, %v2419
        %v2430 = vpack.c.bf16 %v2422, %v2421
        %v2431 = vld [vmem:[#allocation10 + $0x10] sm:$0xf]
        %v2432 = vld [vmem:[#allocation10 + $0x14] sm:$0xf]
        %v2433 = vld [vmem:[#allocation10 + $0x18] sm:$0xf]
        %v2434 = vld [vmem:[#allocation10 + $0x1c] sm:$0xf]
        %v2439 = vunpack.c.l.b16 %v2431
        %v2440 = vunpack.c.l.b16 %v2432
        %v2441 = vunpack.c.l.b16 %v2433
        %v2442 = vunpack.c.l.b16 %v2434
        %v2443 = vpack.c.b16 %v2440, %v2439
        %v2444 = vpack.c.b16 %v2442, %v2441
        %v2448 = vsel %vm1441, %v2423, 0
        %v2451 = vsel %vm1441, %v2424, 0
        %v2454 = vsel %vm1441, %v2425, 0
        %v2457 = vsel %vm1441, %v2426, 0
        %v2460 = vsel %vm1441, %v2427, 0
        %v2463 = vsel %vm1441, %v2428, 0
        %v2466 = vsel %vm1441, %v2429, 0
        %v2469 = vsel %vm1441, %v2430, 0
        %2471 = vmatpush.bf16.msra.mxu0 0
        %2472 = vmatpush.bf16.msra.mxu0 0
        %2473 = vmatpush.bf16.msra.mxu0 0
        %2474 = vmatpush.bf16.msra.mxu0 0
        %2475 = vmatpush.bf16.msra.mxu0 0
        %2476 = vmatpush.bf16.msra.mxu0 0
        %2477 = vmatpush.bf16.msra.mxu0 %v2444
        %2478 = vmatpush.bf16.msra.mxu0 %v2443
        %2479 = vmatmul.bf16.gmra.mxu0 %v2448
        %v2480 = vpop.f32.mrf.mxu0
        %v2481 = vadd.f32 0.0, %v2480
        %v2482 = vpop.f32.mrf.mxu0
        %v2483 = vadd.f32 0.0, %v2482
        %2484 = vmatmul.bf16.gmra.mxu0 %v2451
        %v2485 = vpop.f32.mrf.mxu0
        %v2486 = vadd.f32 0.0, %v2485
        %v2487 = vpop.f32.mrf.mxu0
        %v2488 = vadd.f32 0.0, %v2487
        %2489 = vmatmul.bf16.gmra.mxu0 %v2454
        %v2490 = vpop.f32.mrf.mxu0
        %v2491 = vadd.f32 0.0, %v2490
        %v2492 = vpop.f32.mrf.mxu0
        %v2493 = vadd.f32 0.0, %v2492
        %2494 = vmatmul.bf16.gmra.mxu0 %v2457
        %v2495 = vpop.f32.mrf.mxu0
        %v2496 = vadd.f32 0.0, %v2495
        %v2497 = vpop.f32.mrf.mxu0
        %v2498 = vadd.f32 0.0, %v2497
        %2499 = vmatmul.bf16.gmra.mxu0 %v2460
        %v2500 = vpop.f32.mrf.mxu0
        %v2501 = vadd.f32 0.0, %v2500
        %v2502 = vpop.f32.mrf.mxu0
        %v2503 = vadd.f32 0.0, %v2502
        %2504 = vmatmul.bf16.gmra.mxu0 %v2463
        %v2505 = vpop.f32.mrf.mxu0
        %v2506 = vadd.f32 0.0, %v2505
        %v2507 = vpop.f32.mrf.mxu0
        %v2508 = vadd.f32 0.0, %v2507
        %2509 = vmatmul.bf16.gmra.mxu0 %v2466
        %v2510 = vpop.f32.mrf.mxu0
        %v2511 = vadd.f32 0.0, %v2510
        %v2512 = vpop.f32.mrf.mxu0
        %v2513 = vadd.f32 0.0, %v2512
        %2514 = vmatmul.bf16.gmra.mxu0 %v2469
        %v2515 = vpop.f32.mrf.mxu0
        %v2516 = vadd.f32 0.0, %v2515
        %v2517 = vpop.f32.mrf.mxu0
        %v2518 = vadd.f32 0.0, %v2517
        %2519 = vdwg.mxu0
        %v2520 = vld [vmem:[#allocation3] sm:$0xff]
        %v2521 = vld [vmem:[#allocation3 + $0x8] sm:$0xff]
        %v2522 = vld [vmem:[#allocation3 + $0x10] sm:$0xff]
        %v2523 = vld [vmem:[#allocation3 + $0x18] sm:$0xff]
        %v2524 = vld [vmem:[#allocation3 + $0x20] sm:$0xff]
        %v2525 = vld [vmem:[#allocation3 + $0x28] sm:$0xff]
        %v2526 = vld [vmem:[#allocation3 + $0x30] sm:$0xff]
        %v2527 = vld [vmem:[#allocation3 + $0x38] sm:$0xff]
        %v2528 = vld [vmem:[#allocation3 + $0x40] sm:$0xff]
        %v2529 = vld [vmem:[#allocation3 + $0x48] sm:$0xff]
        %v2530 = vld [vmem:[#allocation3 + $0x50] sm:$0xff]
        %v2531 = vld [vmem:[#allocation3 + $0x58] sm:$0xff]
        %v2532 = vld [vmem:[#allocation3 + $0x60] sm:$0xff]
        %v2533 = vld [vmem:[#allocation3 + $0x68] sm:$0xff]
        %v2534 = vld [vmem:[#allocation3 + $0x70] sm:$0xff]
        %v2535 = vld [vmem:[#allocation3 + $0x78] sm:$0xff]
        %v2536 = vadd.f32 %v2520, %v2481
        %v2537 = vadd.f32 %v2521, %v2483
        %v2538 = vadd.f32 %v2522, %v2486
        %v2539 = vadd.f32 %v2523, %v2488
        %v2540 = vadd.f32 %v2524, %v2491
        %v2541 = vadd.f32 %v2525, %v2493
        %v2542 = vadd.f32 %v2526, %v2496
        %v2543 = vadd.f32 %v2527, %v2498
        %v2544 = vadd.f32 %v2528, %v2501
        %v2545 = vadd.f32 %v2529, %v2503
        %v2546 = vadd.f32 %v2530, %v2506
        %v2547 = vadd.f32 %v2531, %v2508
        %v2548 = vadd.f32 %v2532, %v2511
        %v2549 = vadd.f32 %v2533, %v2513
        %v2550 = vadd.f32 %v2534, %v2516
        %v2551 = vadd.f32 %v2535, %v2518
        %2552 = vst [vmem:[#allocation3] sm:$0xff] %v2536
        %2553 = vst [vmem:[#allocation3 + $0x8] sm:$0xff] %v2537
        %2554 = vst [vmem:[#allocation3 + $0x10] sm:$0xff] %v2538
        %2555 = vst [vmem:[#allocation3 + $0x18] sm:$0xff] %v2539
        %2556 = vst [vmem:[#allocation3 + $0x20] sm:$0xff] %v2540
        %2557 = vst [vmem:[#allocation3 + $0x28] sm:$0xff] %v2541
        %2558 = vst [vmem:[#allocation3 + $0x30] sm:$0xff] %v2542
        %2559 = vst [vmem:[#allocation3 + $0x38] sm:$0xff] %v2543
        %2560 = vst [vmem:[#allocation3 + $0x40] sm:$0xff] %v2544
        %2561 = vst [vmem:[#allocation3 + $0x48] sm:$0xff] %v2545
        %2562 = vst [vmem:[#allocation3 + $0x50] sm:$0xff] %v2546
        %2563 = vst [vmem:[#allocation3 + $0x58] sm:$0xff] %v2547
        %2564 = vst [vmem:[#allocation3 + $0x60] sm:$0xff] %v2548
        %2565 = vst [vmem:[#allocation3 + $0x68] sm:$0xff] %v2549
        %2566 = vst [vmem:[#allocation3 + $0x70] sm:$0xff] %v2550
        %2567 = vst [vmem:[#allocation3 + $0x78] sm:$0xff] %v2551
        %v2568 = vld [vmem:[#allocation2] sm:$0xf]
        %v2569 = vld [vmem:[#allocation2 + $0xc] sm:$0xf]
        %v2570 = vld [vmem:[#allocation2 + $0x18] sm:$0xf]
        %v2571 = vld [vmem:[#allocation2 + $0x24] sm:$0xf]
        %v2572 = vld [vmem:[#allocation2 + $0x30] sm:$0xf]
        %v2573 = vld [vmem:[#allocation2 + $0x3c] sm:$0xf]
        %v2574 = vld [vmem:[#allocation2 + $0x48] sm:$0xf]
        %v2575 = vld [vmem:[#allocation2 + $0x54] sm:$0xf]
        %v2576 = vld [vmem:[#allocation2 + $0x60] sm:$0xf]
        %v2577 = vld [vmem:[#allocation2 + $0x6c] sm:$0xf]
        %v2578 = vld [vmem:[#allocation2 + $0x78] sm:$0xf]
        %v2579 = vld [vmem:[#allocation2 + $0x84] sm:$0xf]
        %v2580 = vld [vmem:[#allocation2 + $0x90] sm:$0xf]
        %v2581 = vld [vmem:[#allocation2 + $0x9c] sm:$0xf]
        %v2582 = vld [vmem:[#allocation2 + $0xa8] sm:$0xf]
        %v2583 = vld [vmem:[#allocation2 + $0xb4] sm:$0xf]
        %v2584 = vld [vmem:[#allocation2 + $0x4] sm:$0xf]
        %v2585 = vld [vmem:[#allocation2 + $0x10] sm:$0xf]
        %v2586 = vld [vmem:[#allocation2 + $0x1c] sm:$0xf]
        %v2587 = vld [vmem:[#allocation2 + $0x28] sm:$0xf]
        %v2588 = vld [vmem:[#allocation2 + $0x34] sm:$0xf]
        %v2589 = vld [vmem:[#allocation2 + $0x40] sm:$0xf]
        %v2590 = vld [vmem:[#allocation2 + $0x4c] sm:$0xf]
        %v2591 = vld [vmem:[#allocation2 + $0x58] sm:$0xf]
        %v2592 = vld [vmem:[#allocation2 + $0x64] sm:$0xf]
        %v2593 = vld [vmem:[#allocation2 + $0x70] sm:$0xf]
        %v2594 = vld [vmem:[#allocation2 + $0x7c] sm:$0xf]
        %v2595 = vld [vmem:[#allocation2 + $0x88] sm:$0xf]
        %v2596 = vld [vmem:[#allocation2 + $0x94] sm:$0xf]
        %v2597 = vld [vmem:[#allocation2 + $0xa0] sm:$0xf]
        %v2598 = vld [vmem:[#allocation2 + $0xac] sm:$0xf]
        %v2599 = vld [vmem:[#allocation2 + $0xb8] sm:$0xf]
        %v2600 = vld [vmem:[#allocation2 + $0x8] sm:$0xf]
        %v2601 = vld [vmem:[#allocation2 + $0x14] sm:$0xf]
        %v2602 = vld [vmem:[#allocation2 + $0x20] sm:$0xf]
        %v2603 = vld [vmem:[#allocation2 + $0x2c] sm:$0xf]
        %v2604 = vld [vmem:[#allocation2 + $0x38] sm:$0xf]
        %v2605 = vld [vmem:[#allocation2 + $0x44] sm:$0xf]
        %v2606 = vld [vmem:[#allocation2 + $0x50] sm:$0xf]
        %v2607 = vld [vmem:[#allocation2 + $0x5c] sm:$0xf]
        %v2608 = vld [vmem:[#allocation2 + $0x68] sm:$0xf]
        %v2609 = vld [vmem:[#allocation2 + $0x74] sm:$0xf]
        %v2610 = vld [vmem:[#allocation2 + $0x80] sm:$0xf]
        %v2611 = vld [vmem:[#allocation2 + $0x8c] sm:$0xf]
        %v2612 = vld [vmem:[#allocation2 + $0x98] sm:$0xf]
        %v2613 = vld [vmem:[#allocation2 + $0xa4] sm:$0xf]
        %v2614 = vld [vmem:[#allocation2 + $0xb0] sm:$0xf]
        %v2615 = vld [vmem:[#allocation2 + $0xbc] sm:$0xf]
        %v2632 = vunpack.c.l.b16 %v2568
        %v2633 = vunpack.c.l.b16 %v2569
        %v2634 = vunpack.c.l.b16 %v2570
        %v2635 = vunpack.c.l.b16 %v2571
        %v2636 = vunpack.c.l.b16 %v2572
        %v2637 = vunpack.c.l.b16 %v2573
        %v2638 = vunpack.c.l.b16 %v2574
        %v2639 = vunpack.c.l.b16 %v2575
        %v2640 = vunpack.c.l.b16 %v2576
        %v2641 = vunpack.c.l.b16 %v2577
        %v2642 = vunpack.c.l.b16 %v2578
        %v2643 = vunpack.c.l.b16 %v2579
        %v2644 = vunpack.c.l.b16 %v2580
        %v2645 = vunpack.c.l.b16 %v2581
        %v2646 = vunpack.c.l.b16 %v2582
        %v2647 = vunpack.c.l.b16 %v2583
        %v2648 = vpack.c.b16 %v2633, %v2632
        %v2649 = vpack.c.b16 %v2635, %v2634
        %v2650 = vpack.c.b16 %v2637, %v2636
        %v2651 = vpack.c.b16 %v2639, %v2638
        %v2652 = vpack.c.b16 %v2641, %v2640
        %v2653 = vpack.c.b16 %v2643, %v2642
        %v2654 = vpack.c.b16 %v2645, %v2644
        %v2655 = vpack.c.b16 %v2647, %v2646
        %2656 = vrot.lane.b32.xlu0 %v2648, 64
        %v2657 = vpop.permute.xlu0 %2656
        %2658 = vrot.lane.b32.xlu0 %v2649, 64
        %v2659 = vpop.permute.xlu0 %2658
        %2660 = vrot.lane.b32.xlu0 %v2650, 64
        %v2661 = vpop.permute.xlu0 %2660
        %2662 = vrot.lane.b32.xlu0 %v2651, 64
        %v2663 = vpop.permute.xlu0 %2662
        %2664 = vrot.lane.b32.xlu0 %v2652, 64
        %v2665 = vpop.permute.xlu0 %2664
        %2666 = vrot.lane.b32.xlu0 %v2653, 64
        %v2667 = vpop.permute.xlu0 %2666
        %2668 = vrot.lane.b32.xlu0 %v2654, 64
        %v2669 = vpop.permute.xlu0 %2668
        %2670 = vrot.lane.b32.xlu0 %v2655, 64
        %v2671 = vpop.permute.xlu0 %2670
        %v2688 = vunpack.c.l.b16 %v2584
        %v2689 = vunpack.c.l.b16 %v2585
        %v2690 = vunpack.c.l.b16 %v2586
        %v2691 = vunpack.c.l.b16 %v2587
        %v2692 = vunpack.c.l.b16 %v2588
        %v2693 = vunpack.c.l.b16 %v2589
        %v2694 = vunpack.c.l.b16 %v2590
        %v2695 = vunpack.c.l.b16 %v2591
        %v2696 = vunpack.c.l.b16 %v2592
        %v2697 = vunpack.c.l.b16 %v2593
        %v2698 = vunpack.c.l.b16 %v2594
        %v2699 = vunpack.c.l.b16 %v2595
        %v2700 = vunpack.c.l.b16 %v2596
        %v2701 = vunpack.c.l.b16 %v2597
        %v2702 = vunpack.c.l.b16 %v2598
        %v2703 = vunpack.c.l.b16 %v2599
        %v2704 = vpack.c.b16 %v2689, %v2688
        %v2705 = vpack.c.b16 %v2691, %v2690
        %v2706 = vpack.c.b16 %v2693, %v2692
        %v2707 = vpack.c.b16 %v2695, %v2694
        %v2708 = vpack.c.b16 %v2697, %v2696
        %v2709 = vpack.c.b16 %v2699, %v2698
        %v2710 = vpack.c.b16 %v2701, %v2700
        %v2711 = vpack.c.b16 %v2703, %v2702
        %2712 = vrot.lane.b32.xlu0 %v2704, 64
        %v2713 = vpop.permute.xlu0 %2712
        %2714 = vrot.lane.b32.xlu0 %v2705, 64
        %v2715 = vpop.permute.xlu0 %2714
        %2716 = vrot.lane.b32.xlu0 %v2706, 64
        %v2717 = vpop.permute.xlu0 %2716
        %2718 = vrot.lane.b32.xlu0 %v2707, 64
        %v2719 = vpop.permute.xlu0 %2718
        %2720 = vrot.lane.b32.xlu0 %v2708, 64
        %v2721 = vpop.permute.xlu0 %2720
        %2722 = vrot.lane.b32.xlu0 %v2709, 64
        %v2723 = vpop.permute.xlu0 %2722
        %2724 = vrot.lane.b32.xlu0 %v2710, 64
        %v2725 = vpop.permute.xlu0 %2724
        %2726 = vrot.lane.b32.xlu0 %v2711, 64
        %v2727 = vpop.permute.xlu0 %2726
        %v2729 = vsel %vm1441, %v2657, 0
        %v2732 = vsel %vm1441, %v2659, 0
        %v2735 = vsel %vm1441, %v2661, 0
        %v2738 = vsel %vm1441, %v2663, 0
        %v2741 = vsel %vm1441, %v2665, 0
        %v2744 = vsel %vm1441, %v2667, 0
        %v2747 = vsel %vm1441, %v2669, 0
        %v2750 = vsel %vm1441, %v2671, 0
        %v2753 = vsel %vm1441, %v2713, 0
        %v2756 = vsel %vm1441, %v2715, 0
        %v2759 = vsel %vm1441, %v2717, 0
        %v2762 = vsel %vm1441, %v2719, 0
        %v2765 = vsel %vm1441, %v2721, 0
        %v2768 = vsel %vm1441, %v2723, 0
        %v2771 = vsel %vm1441, %v2725, 0
        %v2774 = vsel %vm1441, %v2727, 0
        %2776 = vmatpush.bf16.xpose.msra.mxu0 %v2774
        %2777 = vmatpush.bf16.xpose.msra.mxu0 %v2771
        %2778 = vmatpush.bf16.xpose.msra.mxu0 %v2768
        %2779 = vmatpush.bf16.xpose.msra.mxu0 %v2765
        %2780 = vmatpush.bf16.xpose.msra.mxu0 %v2762
        %2781 = vmatpush.bf16.xpose.msra.mxu0 %v2759
        %2782 = vmatpush.bf16.xpose.msra.mxu0 %v2756
        %2783 = vmatpush.bf16.xpose.msra.mxu0 %v2753
        %2784 = vmatmul.bf16.gmra.mxu0 %v2729
        %v2785 = vpop.f32.mrf.mxu0
        %v2786 = vadd.f32 0.0, %v2785
        %v2787 = vpop.f32.mrf.mxu0
        %v2788 = vadd.f32 0.0, %v2787
        %2789 = vmatmul.bf16.gmra.mxu0 %v2732
        %v2790 = vpop.f32.mrf.mxu0
        %v2791 = vadd.f32 0.0, %v2790
        %v2792 = vpop.f32.mrf.mxu0
        %v2793 = vadd.f32 0.0, %v2792
        %2794 = vmatmul.bf16.gmra.mxu0 %v2735
        %v2795 = vpop.f32.mrf.mxu0
        %v2796 = vadd.f32 0.0, %v2795
        %v2797 = vpop.f32.mrf.mxu0
        %v2798 = vadd.f32 0.0, %v2797
        %2799 = vmatmul.bf16.gmra.mxu0 %v2738
        %v2800 = vpop.f32.mrf.mxu0
        %v2801 = vadd.f32 0.0, %v2800
        %v2802 = vpop.f32.mrf.mxu0
        %v2803 = vadd.f32 0.0, %v2802
        %2804 = vmatmul.bf16.gmra.mxu0 %v2741
        %v2805 = vpop.f32.mrf.mxu0
        %v2806 = vadd.f32 0.0, %v2805
        %v2807 = vpop.f32.mrf.mxu0
        %v2808 = vadd.f32 0.0, %v2807
        %2809 = vmatmul.bf16.gmra.mxu0 %v2744
        %v2810 = vpop.f32.mrf.mxu0
        %v2811 = vadd.f32 0.0, %v2810
        %v2812 = vpop.f32.mrf.mxu0
        %v2813 = vadd.f32 0.0, %v2812
        %2814 = vmatmul.bf16.gmra.mxu0 %v2747
        %v2815 = vpop.f32.mrf.mxu0
        %v2816 = vadd.f32 0.0, %v2815
        %v2817 = vpop.f32.mrf.mxu0
        %v2818 = vadd.f32 0.0, %v2817
        %2819 = vmatmul.bf16.gmra.mxu0 %v2750
        %v2820 = vpop.f32.mrf.mxu0
        %v2821 = vadd.f32 0.0, %v2820
        %v2822 = vpop.f32.mrf.mxu0
        %v2823 = vadd.f32 0.0, %v2822
        %2824 = vdwg.mxu0
        %2825 = vmax.xlane.f32.xlu0 %v2786
        %v2826 = vpop.xlane.xlu0 %2825
        %2827 = vmax.xlane.f32.xlu0 %v2788
        %v2828 = vpop.xlane.xlu0 %2827
        %2829 = vmax.xlane.f32.xlu0 %v2791
        %v2830 = vpop.xlane.xlu0 %2829
        %2831 = vmax.xlane.f32.xlu0 %v2793
        %v2832 = vpop.xlane.xlu0 %2831
        %2833 = vmax.xlane.f32.xlu0 %v2796
        %v2834 = vpop.xlane.xlu0 %2833
        %2835 = vmax.xlane.f32.xlu0 %v2798
        %v2836 = vpop.xlane.xlu0 %2835
        %2837 = vmax.xlane.f32.xlu0 %v2801
        %v2838 = vpop.xlane.xlu0 %2837
        %2839 = vmax.xlane.f32.xlu0 %v2803
        %v2840 = vpop.xlane.xlu0 %2839
        %2841 = vmax.xlane.f32.xlu0 %v2806
        %v2842 = vpop.xlane.xlu0 %2841
        %2843 = vmax.xlane.f32.xlu0 %v2808
        %v2844 = vpop.xlane.xlu0 %2843
        %2845 = vmax.xlane.f32.xlu0 %v2811
        %v2846 = vpop.xlane.xlu0 %2845
        %2847 = vmax.xlane.f32.xlu0 %v2813
        %v2848 = vpop.xlane.xlu0 %2847
        %2849 = vmax.xlane.f32.xlu0 %v2816
        %v2850 = vpop.xlane.xlu0 %2849
        %2851 = vmax.xlane.f32.xlu0 %v2818
        %v2852 = vpop.xlane.xlu0 %2851
        %2853 = vmax.xlane.f32.xlu0 %v2821
        %v2854 = vpop.xlane.xlu0 %2853
        %2855 = vmax.xlane.f32.xlu0 %v2823
        %v2856 = vpop.xlane.xlu0 %2855
        %v2857 = vsub.f32 %v2786, %v2826
        %v2858 = vsub.f32 %v2788, %v2828
        %v2859 = vsub.f32 %v2791, %v2830
        %v2860 = vsub.f32 %v2793, %v2832
        %v2861 = vsub.f32 %v2796, %v2834
        %v2862 = vsub.f32 %v2798, %v2836
        %v2863 = vsub.f32 %v2801, %v2838
        %v2864 = vsub.f32 %v2803, %v2840
        %v2865 = vsub.f32 %v2806, %v2842
        %v2866 = vsub.f32 %v2808, %v2844
        %v2867 = vsub.f32 %v2811, %v2846
        %v2868 = vsub.f32 %v2813, %v2848
        %v2869 = vsub.f32 %v2816, %v2850
        %v2870 = vsub.f32 %v2818, %v2852
        %v2871 = vsub.f32 %v2821, %v2854
        %v2872 = vsub.f32 %v2823, %v2856
        %v2873 = vmul.f32 %v2857, 1.442695
        %v2874 = vpow.pop %v2873
        %v2875 = vmul.f32 %v2858, 1.442695
        %v2876 = vpow.pop %v2875
        %v2877 = vmul.f32 %v2859, 1.442695
        %v2878 = vpow.pop %v2877
        %v2879 = vmul.f32 %v2860, 1.442695
        %v2880 = vpow.pop %v2879
        %v2881 = vmul.f32 %v2861, 1.442695
        %v2882 = vpow.pop %v2881
        %v2883 = vmul.f32 %v2862, 1.442695
        %v2884 = vpow.pop %v2883
        %v2885 = vmul.f32 %v2863, 1.442695
        %v2886 = vpow.pop %v2885
        %v2887 = vmul.f32 %v2864, 1.442695
        %v2888 = vpow.pop %v2887
        %v2889 = vmul.f32 %v2865, 1.442695
        %v2890 = vpow.pop %v2889
        %v2891 = vmul.f32 %v2866, 1.442695
        %v2892 = vpow.pop %v2891
        %v2893 = vmul.f32 %v2867, 1.442695
        %v2894 = vpow.pop %v2893
        %v2895 = vmul.f32 %v2868, 1.442695
        %v2896 = vpow.pop %v2895
        %v2897 = vmul.f32 %v2869, 1.442695
        %v2898 = vpow.pop %v2897
        %v2899 = vmul.f32 %v2870, 1.442695
        %v2900 = vpow.pop %v2899
        %v2901 = vmul.f32 %v2871, 1.442695
        %v2902 = vpow.pop %v2901
        %v2903 = vmul.f32 %v2872, 1.442695
        %v2904 = vpow.pop %v2903
        %2905 = vadd.xlane.f32.xlu0 %v2874
        %v2906 = vpop.xlane.xlu0 %2905
        %2907 = vadd.xlane.f32.xlu0 %v2876
        %v2908 = vpop.xlane.xlu0 %2907
        %2909 = vadd.xlane.f32.xlu0 %v2878
        %v2910 = vpop.xlane.xlu0 %2909
        %2911 = vadd.xlane.f32.xlu0 %v2880
        %v2912 = vpop.xlane.xlu0 %2911
        %2913 = vadd.xlane.f32.xlu0 %v2882
        %v2914 = vpop.xlane.xlu0 %2913
        %2915 = vadd.xlane.f32.xlu0 %v2884
        %v2916 = vpop.xlane.xlu0 %2915
        %2917 = vadd.xlane.f32.xlu0 %v2886
        %v2918 = vpop.xlane.xlu0 %2917
        %2919 = vadd.xlane.f32.xlu0 %v2888
        %v2920 = vpop.xlane.xlu0 %2919
        %2921 = vadd.xlane.f32.xlu0 %v2890
        %v2922 = vpop.xlane.xlu0 %2921
        %2923 = vadd.xlane.f32.xlu0 %v2892
        %v2924 = vpop.xlane.xlu0 %2923
        %2925 = vadd.xlane.f32.xlu0 %v2894
        %v2926 = vpop.xlane.xlu0 %2925
        %2927 = vadd.xlane.f32.xlu0 %v2896
        %v2928 = vpop.xlane.xlu0 %2927
        %2929 = vadd.xlane.f32.xlu0 %v2898
        %v2930 = vpop.xlane.xlu0 %2929
        %2931 = vadd.xlane.f32.xlu0 %v2900
        %v2932 = vpop.xlane.xlu0 %2931
        %2933 = vadd.xlane.f32.xlu0 %v2902
        %v2934 = vpop.xlane.xlu0 %2933
        %2935 = vadd.xlane.f32.xlu0 %v2904
        %v2936 = vpop.xlane.xlu0 %2935
        %v2937 = vpack.c.bf16 %v2876, %v2874
        %v2938 = vpack.c.bf16 %v2880, %v2878
        %v2939 = vpack.c.bf16 %v2884, %v2882
        %v2940 = vpack.c.bf16 %v2888, %v2886
        %v2941 = vpack.c.bf16 %v2892, %v2890
        %v2942 = vpack.c.bf16 %v2896, %v2894
        %v2943 = vpack.c.bf16 %v2900, %v2898
        %v2944 = vpack.c.bf16 %v2904, %v2902
        %v2961 = vunpack.c.l.b16 %v2600
        %v2962 = vunpack.c.l.b16 %v2601
        %v2963 = vunpack.c.l.b16 %v2602
        %v2964 = vunpack.c.l.b16 %v2603
        %v2965 = vunpack.c.l.b16 %v2604
        %v2966 = vunpack.c.l.b16 %v2605
        %v2967 = vunpack.c.l.b16 %v2606
        %v2968 = vunpack.c.l.b16 %v2607
        %v2969 = vunpack.c.l.b16 %v2608
        %v2970 = vunpack.c.l.b16 %v2609
        %v2971 = vunpack.c.l.b16 %v2610
        %v2972 = vunpack.c.l.b16 %v2611
        %v2973 = vunpack.c.l.b16 %v2612
        %v2974 = vunpack.c.l.b16 %v2613
        %v2975 = vunpack.c.l.b16 %v2614
        %v2976 = vunpack.c.l.b16 %v2615
        %v2977 = vpack.c.b16 %v2962, %v2961
        %v2978 = vpack.c.b16 %v2964, %v2963
        %v2979 = vpack.c.b16 %v2966, %v2965
        %v2980 = vpack.c.b16 %v2968, %v2967
        %v2981 = vpack.c.b16 %v2970, %v2969
        %v2982 = vpack.c.b16 %v2972, %v2971
        %v2983 = vpack.c.b16 %v2974, %v2973
        %v2984 = vpack.c.b16 %v2976, %v2975
        %2985 = vrot.lane.b32.xlu0 %v2977, 64
        %v2986 = vpop.permute.xlu0 %2985
        %2987 = vrot.lane.b32.xlu0 %v2978, 64
        %v2988 = vpop.permute.xlu0 %2987
        %2989 = vrot.lane.b32.xlu0 %v2979, 64
        %v2990 = vpop.permute.xlu0 %2989
        %2991 = vrot.lane.b32.xlu0 %v2980, 64
        %v2992 = vpop.permute.xlu0 %2991
        %2993 = vrot.lane.b32.xlu0 %v2981, 64
        %v2994 = vpop.permute.xlu0 %2993
        %2995 = vrot.lane.b32.xlu0 %v2982, 64
        %v2996 = vpop.permute.xlu0 %2995
        %2997 = vrot.lane.b32.xlu0 %v2983, 64
        %v2998 = vpop.permute.xlu0 %2997
        %2999 = vrot.lane.b32.xlu0 %v2984, 64
        %v3000 = vpop.permute.xlu0 %2999
        %3009 = vmatpush.bf16.msra.mxu0 %v3000
        %3010 = vmatpush.bf16.msra.mxu0 %v2998
        %3011 = vmatpush.bf16.msra.mxu0 %v2996
        %3012 = vmatpush.bf16.msra.mxu0 %v2994
        %3013 = vmatpush.bf16.msra.mxu0 %v2992
        %3014 = vmatpush.bf16.msra.mxu0 %v2990
        %3015 = vmatpush.bf16.msra.mxu0 %v2988
        %3016 = vmatpush.bf16.msra.mxu0 %v2986
        %3017 = vmatmul.bf16.gmra.mxu0 %v2937
        %v3018 = vpop.f32.mrf.mxu0
        %v3019 = vadd.f32 0.0, %v3018
        %v3020 = vpop.f32.mrf.mxu0
        %v3021 = vadd.f32 0.0, %v3020
        %3022 = vmatmul.bf16.gmra.mxu0 %v2938
        %v3023 = vpop.f32.mrf.mxu0
        %v3024 = vadd.f32 0.0, %v3023
        %v3025 = vpop.f32.mrf.mxu0
        %v3026 = vadd.f32 0.0, %v3025
        %3027 = vmatmul.bf16.gmra.mxu0 %v2939
        %v3028 = vpop.f32.mrf.mxu0
        %v3029 = vadd.f32 0.0, %v3028
        %v3030 = vpop.f32.mrf.mxu0
        %v3031 = vadd.f32 0.0, %v3030
        %3032 = vmatmul.bf16.gmra.mxu0 %v2940
        %v3033 = vpop.f32.mrf.mxu0
        %v3034 = vadd.f32 0.0, %v3033
        %v3035 = vpop.f32.mrf.mxu0
        %v3036 = vadd.f32 0.0, %v3035
        %3037 = vmatmul.bf16.gmra.mxu0 %v2941
        %v3038 = vpop.f32.mrf.mxu0
        %v3039 = vadd.f32 0.0, %v3038
        %v3040 = vpop.f32.mrf.mxu0
        %v3041 = vadd.f32 0.0, %v3040
        %3042 = vmatmul.bf16.gmra.mxu0 %v2942
        %v3043 = vpop.f32.mrf.mxu0
        %v3044 = vadd.f32 0.0, %v3043
        %v3045 = vpop.f32.mrf.mxu0
        %v3046 = vadd.f32 0.0, %v3045
        %3047 = vmatmul.bf16.gmra.mxu0 %v2943
        %v3048 = vpop.f32.mrf.mxu0
        %v3049 = vadd.f32 0.0, %v3048
        %v3050 = vpop.f32.mrf.mxu0
        %v3051 = vadd.f32 0.0, %v3050
        %3052 = vmatmul.bf16.gmra.mxu0 %v2944
        %v3053 = vpop.f32.mrf.mxu0
        %v3054 = vadd.f32 0.0, %v3053
        %v3055 = vpop.f32.mrf.mxu0
        %v3056 = vadd.f32 0.0, %v3055
        %3057 = vdwg.mxu0
        %v3058 = vrcp.pop %v2906
        %v3059 = vrcp.pop %v2908
        %v3060 = vrcp.pop %v2910
        %v3061 = vrcp.pop %v2912
        %v3062 = vrcp.pop %v2914
        %v3063 = vrcp.pop %v2916
        %v3064 = vrcp.pop %v2918
        %v3065 = vrcp.pop %v2920
        %v3066 = vrcp.pop %v2922
        %v3067 = vrcp.pop %v2924
        %v3068 = vrcp.pop %v2926
        %v3069 = vrcp.pop %v2928
        %v3070 = vrcp.pop %v2930
        %v3071 = vrcp.pop %v2932
        %v3072 = vrcp.pop %v2934
        %v3073 = vrcp.pop %v2936
        %v3074 = vmul.f32 %v3019, %v3058
        %v3075 = vmul.f32 %v3021, %v3059
        %v3076 = vmul.f32 %v3024, %v3060
        %v3077 = vmul.f32 %v3026, %v3061
        %v3078 = vmul.f32 %v3029, %v3062
        %v3079 = vmul.f32 %v3031, %v3063
        %v3080 = vmul.f32 %v3034, %v3064
        %v3081 = vmul.f32 %v3036, %v3065
        %v3082 = vmul.f32 %v3039, %v3066
        %v3083 = vmul.f32 %v3041, %v3067
        %v3084 = vmul.f32 %v3044, %v3068
        %v3085 = vmul.f32 %v3046, %v3069
        %v3086 = vmul.f32 %v3049, %v3070
        %v3087 = vmul.f32 %v3051, %v3071
        %v3088 = vmul.f32 %v3054, %v3072
        %v3089 = vmul.f32 %v3056, %v3073
        %v3090 = vpack.c.bf16 %v3075, %v3074
        %v3091 = vpack.c.bf16 %v3077, %v3076
        %v3092 = vpack.c.bf16 %v3079, %v3078
        %v3093 = vpack.c.bf16 %v3081, %v3080
        %v3094 = vpack.c.bf16 %v3083, %v3082
        %v3095 = vpack.c.bf16 %v3085, %v3084
        %v3096 = vpack.c.bf16 %v3087, %v3086
        %v3097 = vpack.c.bf16 %v3089, %v3088
        %v3098 = vld [vmem:[#allocation10 + $0x20] sm:$0xf]
        %v3099 = vld [vmem:[#allocation10 + $0x24] sm:$0xf]
        %v3100 = vld [vmem:[#allocation10 + $0x28] sm:$0xf]
        %v3101 = vld [vmem:[#allocation10 + $0x2c] sm:$0xf]
        %v3106 = vunpack.c.l.b16 %v3098
        %v3107 = vunpack.c.l.b16 %v3099
        %v3108 = vunpack.c.l.b16 %v3100
        %v3109 = vunpack.c.l.b16 %v3101
        %v3110 = vpack.c.b16 %v3107, %v3106
        %v3111 = vpack.c.b16 %v3109, %v3108
        %v3115 = vsel %vm1441, %v3090, 0
        %v3118 = vsel %vm1441, %v3091, 0
        %v3121 = vsel %vm1441, %v3092, 0
        %v3124 = vsel %vm1441, %v3093, 0
        %v3127 = vsel %vm1441, %v3094, 0
        %v3130 = vsel %vm1441, %v3095, 0
        %v3133 = vsel %vm1441, %v3096, 0
        %v3136 = vsel %vm1441, %v3097, 0
        %3138 = vmatpush.bf16.msra.mxu0 0
        %3139 = vmatpush.bf16.msra.mxu0 0
        %3140 = vmatpush.bf16.msra.mxu0 0
        %3141 = vmatpush.bf16.msra.mxu0 0
        %3142 = vmatpush.bf16.msra.mxu0 0
        %3143 = vmatpush.bf16.msra.mxu0 0
        %3144 = vmatpush.bf16.msra.mxu0 %v3111
        %3145 = vmatpush.bf16.msra.mxu0 %v3110
        %3146 = vmatmul.bf16.gmra.mxu0 %v3115
        %v3147 = vpop.f32.mrf.mxu0
        %v3148 = vadd.f32 0.0, %v3147
        %v3149 = vpop.f32.mrf.mxu0
        %v3150 = vadd.f32 0.0, %v3149
        %3151 = vmatmul.bf16.gmra.mxu0 %v3118
        %v3152 = vpop.f32.mrf.mxu0
        %v3153 = vadd.f32 0.0, %v3152
        %v3154 = vpop.f32.mrf.mxu0
        %v3155 = vadd.f32 0.0, %v3154
        %3156 = vmatmul.bf16.gmra.mxu0 %v3121
        %v3157 = vpop.f32.mrf.mxu0
        %v3158 = vadd.f32 0.0, %v3157
        %v3159 = vpop.f32.mrf.mxu0
        %v3160 = vadd.f32 0.0, %v3159
        %3161 = vmatmul.bf16.gmra.mxu0 %v3124
        %v3162 = vpop.f32.mrf.mxu0
        %v3163 = vadd.f32 0.0, %v3162
        %v3164 = vpop.f32.mrf.mxu0
        %v3165 = vadd.f32 0.0, %v3164
        %3166 = vmatmul.bf16.gmra.mxu0 %v3127
        %v3167 = vpop.f32.mrf.mxu0
        %v3168 = vadd.f32 0.0, %v3167
        %v3169 = vpop.f32.mrf.mxu0
        %v3170 = vadd.f32 0.0, %v3169
        %3171 = vmatmul.bf16.gmra.mxu0 %v3130
        %v3172 = vpop.f32.mrf.mxu0
        %v3173 = vadd.f32 0.0, %v3172
        %v3174 = vpop.f32.mrf.mxu0
        %v3175 = vadd.f32 0.0, %v3174
        %3176 = vmatmul.bf16.gmra.mxu0 %v3133
        %v3177 = vpop.f32.mrf.mxu0
        %v3178 = vadd.f32 0.0, %v3177
        %v3179 = vpop.f32.mrf.mxu0
        %v3180 = vadd.f32 0.0, %v3179
        %3181 = vmatmul.bf16.gmra.mxu0 %v3136
        %v3182 = vpop.f32.mrf.mxu0
        %v3183 = vadd.f32 0.0, %v3182
        %v3184 = vpop.f32.mrf.mxu0
        %v3185 = vadd.f32 0.0, %v3184
        %3186 = vdwg.mxu0
        %v3187 = vld [vmem:[#allocation3] sm:$0xff]
        %v3188 = vld [vmem:[#allocation3 + $0x8] sm:$0xff]
        %v3189 = vld [vmem:[#allocation3 + $0x10] sm:$0xff]
        %v3190 = vld [vmem:[#allocation3 + $0x18] sm:$0xff]
        %v3191 = vld [vmem:[#allocation3 + $0x20] sm:$0xff]
        %v3192 = vld [vmem:[#allocation3 + $0x28] sm:$0xff]
        %v3193 = vld [vmem:[#allocation3 + $0x30] sm:$0xff]
        %v3194 = vld [vmem:[#allocation3 + $0x38] sm:$0xff]
        %v3195 = vld [vmem:[#allocation3 + $0x40] sm:$0xff]
        %v3196 = vld [vmem:[#allocation3 + $0x48] sm:$0xff]
        %v3197 = vld [vmem:[#allocation3 + $0x50] sm:$0xff]
        %v3198 = vld [vmem:[#allocation3 + $0x58] sm:$0xff]
        %v3199 = vld [vmem:[#allocation3 + $0x60] sm:$0xff]
        %v3200 = vld [vmem:[#allocation3 + $0x68] sm:$0xff]
        %v3201 = vld [vmem:[#allocation3 + $0x70] sm:$0xff]
        %v3202 = vld [vmem:[#allocation3 + $0x78] sm:$0xff]
        %v3203 = vadd.f32 %v3187, %v3148
        %v3204 = vadd.f32 %v3188, %v3150
        %v3205 = vadd.f32 %v3189, %v3153
        %v3206 = vadd.f32 %v3190, %v3155
        %v3207 = vadd.f32 %v3191, %v3158
        %v3208 = vadd.f32 %v3192, %v3160
        %v3209 = vadd.f32 %v3193, %v3163
        %v3210 = vadd.f32 %v3194, %v3165
        %v3211 = vadd.f32 %v3195, %v3168
        %v3212 = vadd.f32 %v3196, %v3170
        %v3213 = vadd.f32 %v3197, %v3173
        %v3214 = vadd.f32 %v3198, %v3175
        %v3215 = vadd.f32 %v3199, %v3178
        %v3216 = vadd.f32 %v3200, %v3180
        %v3217 = vadd.f32 %v3201, %v3183
        %v3218 = vadd.f32 %v3202, %v3185
        %3219 = vst [vmem:[#allocation3] sm:$0xff] %v3203
        %3220 = vst [vmem:[#allocation3 + $0x8] sm:$0xff] %v3204
        %3221 = vst [vmem:[#allocation3 + $0x10] sm:$0xff] %v3205
        %3222 = vst [vmem:[#allocation3 + $0x18] sm:$0xff] %v3206
        %3223 = vst [vmem:[#allocation3 + $0x20] sm:$0xff] %v3207
        %3224 = vst [vmem:[#allocation3 + $0x28] sm:$0xff] %v3208
        %3225 = vst [vmem:[#allocation3 + $0x30] sm:$0xff] %v3209
        %3226 = vst [vmem:[#allocation3 + $0x38] sm:$0xff] %v3210
        %3227 = vst [vmem:[#allocation3 + $0x40] sm:$0xff] %v3211
        %3228 = vst [vmem:[#allocation3 + $0x48] sm:$0xff] %v3212
        %3229 = vst [vmem:[#allocation3 + $0x50] sm:$0xff] %v3213
        %3230 = vst [vmem:[#allocation3 + $0x58] sm:$0xff] %v3214
        %3231 = vst [vmem:[#allocation3 + $0x60] sm:$0xff] %v3215
        %3232 = vst [vmem:[#allocation3 + $0x68] sm:$0xff] %v3216
        %3233 = vst [vmem:[#allocation3 + $0x70] sm:$0xff] %v3217
        %3234 = vst [vmem:[#allocation3 + $0x78] sm:$0xff] %v3218
        %v3235 = vld [vmem:[#allocation2] sm:$0xf]
        %v3236 = vld [vmem:[#allocation2 + $0xc] sm:$0xf]
        %v3237 = vld [vmem:[#allocation2 + $0x18] sm:$0xf]
        %v3238 = vld [vmem:[#allocation2 + $0x24] sm:$0xf]
        %v3239 = vld [vmem:[#allocation2 + $0x30] sm:$0xf]
        %v3240 = vld [vmem:[#allocation2 + $0x3c] sm:$0xf]
        %v3241 = vld [vmem:[#allocation2 + $0x48] sm:$0xf]
        %v3242 = vld [vmem:[#allocation2 + $0x54] sm:$0xf]
        %v3243 = vld [vmem:[#allocation2 + $0x60] sm:$0xf]
        %v3244 = vld [vmem:[#allocation2 + $0x6c] sm:$0xf]
        %v3245 = vld [vmem:[#allocation2 + $0x78] sm:$0xf]
        %v3246 = vld [vmem:[#allocation2 + $0x84] sm:$0xf]
        %v3247 = vld [vmem:[#allocation2 + $0x90] sm:$0xf]
        %v3248 = vld [vmem:[#allocation2 + $0x9c] sm:$0xf]
        %v3249 = vld [vmem:[#allocation2 + $0xa8] sm:$0xf]
        %v3250 = vld [vmem:[#allocation2 + $0xb4] sm:$0xf]
        %v3251 = vld [vmem:[#allocation2 + $0x4] sm:$0xf]
        %v3252 = vld [vmem:[#allocation2 + $0x10] sm:$0xf]
        %v3253 = vld [vmem:[#allocation2 + $0x1c] sm:$0xf]
        %v3254 = vld [vmem:[#allocation2 + $0x28] sm:$0xf]
        %v3255 = vld [vmem:[#allocation2 + $0x34] sm:$0xf]
        %v3256 = vld [vmem:[#allocation2 + $0x40] sm:$0xf]
        %v3257 = vld [vmem:[#allocation2 + $0x4c] sm:$0xf]
        %v3258 = vld [vmem:[#allocation2 + $0x58] sm:$0xf]
        %v3259 = vld [vmem:[#allocation2 + $0x64] sm:$0xf]
        %v3260 = vld [vmem:[#allocation2 + $0x70] sm:$0xf]
        %v3261 = vld [vmem:[#allocation2 + $0x7c] sm:$0xf]
        %v3262 = vld [vmem:[#allocation2 + $0x88] sm:$0xf]
        %v3263 = vld [vmem:[#allocation2 + $0x94] sm:$0xf]
        %v3264 = vld [vmem:[#allocation2 + $0xa0] sm:$0xf]
        %v3265 = vld [vmem:[#allocation2 + $0xac] sm:$0xf]
        %v3266 = vld [vmem:[#allocation2 + $0xb8] sm:$0xf]
        %v3267 = vld [vmem:[#allocation2 + $0x8] sm:$0xf]
        %v3268 = vld [vmem:[#allocation2 + $0x14] sm:$0xf]
        %v3269 = vld [vmem:[#allocation2 + $0x20] sm:$0xf]
        %v3270 = vld [vmem:[#allocation2 + $0x2c] sm:$0xf]
        %v3271 = vld [vmem:[#allocation2 + $0x38] sm:$0xf]
        %v3272 = vld [vmem:[#allocation2 + $0x44] sm:$0xf]
        %v3273 = vld [vmem:[#allocation2 + $0x50] sm:$0xf]
        %v3274 = vld [vmem:[#allocation2 + $0x5c] sm:$0xf]
        %v3275 = vld [vmem:[#allocation2 + $0x68] sm:$0xf]
        %v3276 = vld [vmem:[#allocation2 + $0x74] sm:$0xf]
        %v3277 = vld [vmem:[#allocation2 + $0x80] sm:$0xf]
        %v3278 = vld [vmem:[#allocation2 + $0x8c] sm:$0xf]
        %v3279 = vld [vmem:[#allocation2 + $0x98] sm:$0xf]
        %v3280 = vld [vmem:[#allocation2 + $0xa4] sm:$0xf]
        %v3281 = vld [vmem:[#allocation2 + $0xb0] sm:$0xf]
        %v3282 = vld [vmem:[#allocation2 + $0xbc] sm:$0xf]
        %v3299 = vunpack.c.l.b16 %v3235
        %v3300 = vunpack.c.l.b16 %v3236
        %v3301 = vunpack.c.l.b16 %v3237
        %v3302 = vunpack.c.l.b16 %v3238
        %v3303 = vunpack.c.l.b16 %v3239
        %v3304 = vunpack.c.l.b16 %v3240
        %v3305 = vunpack.c.l.b16 %v3241
        %v3306 = vunpack.c.l.b16 %v3242
        %v3307 = vunpack.c.l.b16 %v3243
        %v3308 = vunpack.c.l.b16 %v3244
        %v3309 = vunpack.c.l.b16 %v3245
        %v3310 = vunpack.c.l.b16 %v3246
        %v3311 = vunpack.c.l.b16 %v3247
        %v3312 = vunpack.c.l.b16 %v3248
        %v3313 = vunpack.c.l.b16 %v3249
        %v3314 = vunpack.c.l.b16 %v3250
        %v3315 = vpack.c.b16 %v3300, %v3299
        %v3316 = vpack.c.b16 %v3302, %v3301
        %v3317 = vpack.c.b16 %v3304, %v3303
        %v3318 = vpack.c.b16 %v3306, %v3305
        %v3319 = vpack.c.b16 %v3308, %v3307
        %v3320 = vpack.c.b16 %v3310, %v3309
        %v3321 = vpack.c.b16 %v3312, %v3311
        %v3322 = vpack.c.b16 %v3314, %v3313
        %3323 = vrot.lane.b32.xlu0 %v3315, 32
        %v3324 = vpop.permute.xlu0 %3323
        %3325 = vrot.lane.b32.xlu0 %v3316, 32
        %v3326 = vpop.permute.xlu0 %3325
        %3327 = vrot.lane.b32.xlu0 %v3317, 32
        %v3328 = vpop.permute.xlu0 %3327
        %3329 = vrot.lane.b32.xlu0 %v3318, 32
        %v3330 = vpop.permute.xlu0 %3329
        %3331 = vrot.lane.b32.xlu0 %v3319, 32
        %v3332 = vpop.permute.xlu0 %3331
        %3333 = vrot.lane.b32.xlu0 %v3320, 32
        %v3334 = vpop.permute.xlu0 %3333
        %3335 = vrot.lane.b32.xlu0 %v3321, 32
        %v3336 = vpop.permute.xlu0 %3335
        %3337 = vrot.lane.b32.xlu0 %v3322, 32
        %v3338 = vpop.permute.xlu0 %3337
        %v3355 = vunpack.c.l.b16 %v3251
        %v3356 = vunpack.c.l.b16 %v3252
        %v3357 = vunpack.c.l.b16 %v3253
        %v3358 = vunpack.c.l.b16 %v3254
        %v3359 = vunpack.c.l.b16 %v3255
        %v3360 = vunpack.c.l.b16 %v3256
        %v3361 = vunpack.c.l.b16 %v3257
        %v3362 = vunpack.c.l.b16 %v3258
        %v3363 = vunpack.c.l.b16 %v3259
        %v3364 = vunpack.c.l.b16 %v3260
        %v3365 = vunpack.c.l.b16 %v3261
        %v3366 = vunpack.c.l.b16 %v3262
        %v3367 = vunpack.c.l.b16 %v3263
        %v3368 = vunpack.c.l.b16 %v3264
        %v3369 = vunpack.c.l.b16 %v3265
        %v3370 = vunpack.c.l.b16 %v3266
        %v3371 = vpack.c.b16 %v3356, %v3355
        %v3372 = vpack.c.b16 %v3358, %v3357
        %v3373 = vpack.c.b16 %v3360, %v3359
        %v3374 = vpack.c.b16 %v3362, %v3361
        %v3375 = vpack.c.b16 %v3364, %v3363
        %v3376 = vpack.c.b16 %v3366, %v3365
        %v3377 = vpack.c.b16 %v3368, %v3367
        %v3378 = vpack.c.b16 %v3370, %v3369
        %3379 = vrot.lane.b32.xlu0 %v3371, 32
        %v3380 = vpop.permute.xlu0 %3379
        %3381 = vrot.lane.b32.xlu0 %v3372, 32
        %v3382 = vpop.permute.xlu0 %3381
        %3383 = vrot.lane.b32.xlu0 %v3373, 32
        %v3384 = vpop.permute.xlu0 %3383
        %3385 = vrot.lane.b32.xlu0 %v3374, 32
        %v3386 = vpop.permute.xlu0 %3385
        %3387 = vrot.lane.b32.xlu0 %v3375, 32
        %v3388 = vpop.permute.xlu0 %3387
        %3389 = vrot.lane.b32.xlu0 %v3376, 32
        %v3390 = vpop.permute.xlu0 %3389
        %3391 = vrot.lane.b32.xlu0 %v3377, 32
        %v3392 = vpop.permute.xlu0 %3391
        %3393 = vrot.lane.b32.xlu0 %v3378, 32
        %v3394 = vpop.permute.xlu0 %3393
        %v3396 = vsel %vm1441, %v3324, 0
        %v3399 = vsel %vm1441, %v3326, 0
        %v3402 = vsel %vm1441, %v3328, 0
        %v3405 = vsel %vm1441, %v3330, 0
        %v3408 = vsel %vm1441, %v3332, 0
        %v3411 = vsel %vm1441, %v3334, 0
        %v3414 = vsel %vm1441, %v3336, 0
        %v3417 = vsel %vm1441, %v3338, 0
        %v3420 = vsel %vm1441, %v3380, 0
        %v3423 = vsel %vm1441, %v3382, 0
        %v3426 = vsel %vm1441, %v3384, 0
        %v3429 = vsel %vm1441, %v3386, 0
        %v3432 = vsel %vm1441, %v3388, 0
        %v3435 = vsel %vm1441, %v3390, 0
        %v3438 = vsel %vm1441, %v3392, 0
        %v3441 = vsel %vm1441, %v3394, 0
        %3443 = vmatpush.bf16.xpose.msra.mxu0 %v3441
        %3444 = vmatpush.bf16.xpose.msra.mxu0 %v3438
        %3445 = vmatpush.bf16.xpose.msra.mxu0 %v3435
        %3446 = vmatpush.bf16.xpose.msra.mxu0 %v3432
        %3447 = vmatpush.bf16.xpose.msra.mxu0 %v3429
        %3448 = vmatpush.bf16.xpose.msra.mxu0 %v3426
        %3449 = vmatpush.bf16.xpose.msra.mxu0 %v3423
        %3450 = vmatpush.bf16.xpose.msra.mxu0 %v3420
        %3451 = vmatmul.bf16.gmra.mxu0 %v3396
        %v3452 = vpop.f32.mrf.mxu0
        %v3453 = vadd.f32 0.0, %v3452
        %v3454 = vpop.f32.mrf.mxu0
        %v3455 = vadd.f32 0.0, %v3454
        %3456 = vmatmul.bf16.gmra.mxu0 %v3399
        %v3457 = vpop.f32.mrf.mxu0
        %v3458 = vadd.f32 0.0, %v3457
        %v3459 = vpop.f32.mrf.mxu0
        %v3460 = vadd.f32 0.0, %v3459
        %3461 = vmatmul.bf16.gmra.mxu0 %v3402
        %v3462 = vpop.f32.mrf.mxu0
        %v3463 = vadd.f32 0.0, %v3462
        %v3464 = vpop.f32.mrf.mxu0
        %v3465 = vadd.f32 0.0, %v3464
        %3466 = vmatmul.bf16.gmra.mxu0 %v3405
        %v3467 = vpop.f32.mrf.mxu0
        %v3468 = vadd.f32 0.0, %v3467
        %v3469 = vpop.f32.mrf.mxu0
        %v3470 = vadd.f32 0.0, %v3469
        %3471 = vmatmul.bf16.gmra.mxu0 %v3408
        %v3472 = vpop.f32.mrf.mxu0
        %v3473 = vadd.f32 0.0, %v3472
        %v3474 = vpop.f32.mrf.mxu0
        %v3475 = vadd.f32 0.0, %v3474
        %3476 = vmatmul.bf16.gmra.mxu0 %v3411
        %v3477 = vpop.f32.mrf.mxu0
        %v3478 = vadd.f32 0.0, %v3477
        %v3479 = vpop.f32.mrf.mxu0
        %v3480 = vadd.f32 0.0, %v3479
        %3481 = vmatmul.bf16.gmra.mxu0 %v3414
        %v3482 = vpop.f32.mrf.mxu0
        %v3483 = vadd.f32 0.0, %v3482
        %v3484 = vpop.f32.mrf.mxu0
        %v3485 = vadd.f32 0.0, %v3484
        %3486 = vmatmul.bf16.gmra.mxu0 %v3417
        %v3487 = vpop.f32.mrf.mxu0
        %v3488 = vadd.f32 0.0, %v3487
        %v3489 = vpop.f32.mrf.mxu0
        %v3490 = vadd.f32 0.0, %v3489
        %3491 = vdwg.mxu0
        %3492 = vmax.xlane.f32.xlu0 %v3453
        %v3493 = vpop.xlane.xlu0 %3492
        %3494 = vmax.xlane.f32.xlu0 %v3455
        %v3495 = vpop.xlane.xlu0 %3494
        %3496 = vmax.xlane.f32.xlu0 %v3458
        %v3497 = vpop.xlane.xlu0 %3496
        %3498 = vmax.xlane.f32.xlu0 %v3460
        %v3499 = vpop.xlane.xlu0 %3498
        %3500 = vmax.xlane.f32.xlu0 %v3463
        %v3501 = vpop.xlane.xlu0 %3500
        %3502 = vmax.xlane.f32.xlu0 %v3465
        %v3503 = vpop.xlane.xlu0 %3502
        %3504 = vmax.xlane.f32.xlu0 %v3468
        %v3505 = vpop.xlane.xlu0 %3504
        %3506 = vmax.xlane.f32.xlu0 %v3470
        %v3507 = vpop.xlane.xlu0 %3506
        %3508 = vmax.xlane.f32.xlu0 %v3473
        %v3509 = vpop.xlane.xlu0 %3508
        %3510 = vmax.xlane.f32.xlu0 %v3475
        %v3511 = vpop.xlane.xlu0 %3510
        %3512 = vmax.xlane.f32.xlu0 %v3478
        %v3513 = vpop.xlane.xlu0 %3512
        %3514 = vmax.xlane.f32.xlu0 %v3480
        %v3515 = vpop.xlane.xlu0 %3514
        %3516 = vmax.xlane.f32.xlu0 %v3483
        %v3517 = vpop.xlane.xlu0 %3516
        %3518 = vmax.xlane.f32.xlu0 %v3485
        %v3519 = vpop.xlane.xlu0 %3518
        %3520 = vmax.xlane.f32.xlu0 %v3488
        %v3521 = vpop.xlane.xlu0 %3520
        %3522 = vmax.xlane.f32.xlu0 %v3490
        %v3523 = vpop.xlane.xlu0 %3522
        %v3524 = vsub.f32 %v3453, %v3493
        %v3525 = vsub.f32 %v3455, %v3495
        %v3526 = vsub.f32 %v3458, %v3497
        %v3527 = vsub.f32 %v3460, %v3499
        %v3528 = vsub.f32 %v3463, %v3501
        %v3529 = vsub.f32 %v3465, %v3503
        %v3530 = vsub.f32 %v3468, %v3505
        %v3531 = vsub.f32 %v3470, %v3507
        %v3532 = vsub.f32 %v3473, %v3509
        %v3533 = vsub.f32 %v3475, %v3511
        %v3534 = vsub.f32 %v3478, %v3513
        %v3535 = vsub.f32 %v3480, %v3515
        %v3536 = vsub.f32 %v3483, %v3517
        %v3537 = vsub.f32 %v3485, %v3519
        %v3538 = vsub.f32 %v3488, %v3521
        %v3539 = vsub.f32 %v3490, %v3523
        %v3540 = vmul.f32 %v3524, 1.442695
        %v3541 = vpow.pop %v3540
        %v3542 = vmul.f32 %v3525, 1.442695
        %v3543 = vpow.pop %v3542
        %v3544 = vmul.f32 %v3526, 1.442695
        %v3545 = vpow.pop %v3544
        %v3546 = vmul.f32 %v3527, 1.442695
        %v3547 = vpow.pop %v3546
        %v3548 = vmul.f32 %v3528, 1.442695
        %v3549 = vpow.pop %v3548
        %v3550 = vmul.f32 %v3529, 1.442695
        %v3551 = vpow.pop %v3550
        %v3552 = vmul.f32 %v3530, 1.442695
        %v3553 = vpow.pop %v3552
        %v3554 = vmul.f32 %v3531, 1.442695
        %v3555 = vpow.pop %v3554
        %v3556 = vmul.f32 %v3532, 1.442695
        %v3557 = vpow.pop %v3556
        %v3558 = vmul.f32 %v3533, 1.442695
        %v3559 = vpow.pop %v3558
        %v3560 = vmul.f32 %v3534, 1.442695
        %v3561 = vpow.pop %v3560
        %v3562 = vmul.f32 %v3535, 1.442695
        %v3563 = vpow.pop %v3562
        %v3564 = vmul.f32 %v3536, 1.442695
        %v3565 = vpow.pop %v3564
        %v3566 = vmul.f32 %v3537, 1.442695
        %v3567 = vpow.pop %v3566
        %v3568 = vmul.f32 %v3538, 1.442695
        %v3569 = vpow.pop %v3568
        %v3570 = vmul.f32 %v3539, 1.442695
        %v3571 = vpow.pop %v3570
        %3572 = vadd.xlane.f32.xlu0 %v3541
        %v3573 = vpop.xlane.xlu0 %3572
        %3574 = vadd.xlane.f32.xlu0 %v3543
        %v3575 = vpop.xlane.xlu0 %3574
        %3576 = vadd.xlane.f32.xlu0 %v3545
        %v3577 = vpop.xlane.xlu0 %3576
        %3578 = vadd.xlane.f32.xlu0 %v3547
        %v3579 = vpop.xlane.xlu0 %3578
        %3580 = vadd.xlane.f32.xlu0 %v3549
        %v3581 = vpop.xlane.xlu0 %3580
        %3582 = vadd.xlane.f32.xlu0 %v3551
        %v3583 = vpop.xlane.xlu0 %3582
        %3584 = vadd.xlane.f32.xlu0 %v3553
        %v3585 = vpop.xlane.xlu0 %3584
        %3586 = vadd.xlane.f32.xlu0 %v3555
        %v3587 = vpop.xlane.xlu0 %3586
        %3588 = vadd.xlane.f32.xlu0 %v3557
        %v3589 = vpop.xlane.xlu0 %3588
        %3590 = vadd.xlane.f32.xlu0 %v3559
        %v3591 = vpop.xlane.xlu0 %3590
        %3592 = vadd.xlane.f32.xlu0 %v3561
        %v3593 = vpop.xlane.xlu0 %3592
        %3594 = vadd.xlane.f32.xlu0 %v3563
        %v3595 = vpop.xlane.xlu0 %3594
        %3596 = vadd.xlane.f32.xlu0 %v3565
        %v3597 = vpop.xlane.xlu0 %3596
        %3598 = vadd.xlane.f32.xlu0 %v3567
        %v3599 = vpop.xlane.xlu0 %3598
        %3600 = vadd.xlane.f32.xlu0 %v3569
        %v3601 = vpop.xlane.xlu0 %3600
        %3602 = vadd.xlane.f32.xlu0 %v3571
        %v3603 = vpop.xlane.xlu0 %3602
        %v3604 = vpack.c.bf16 %v3543, %v3541
        %v3605 = vpack.c.bf16 %v3547, %v3545
        %v3606 = vpack.c.bf16 %v3551, %v3549
        %v3607 = vpack.c.bf16 %v3555, %v3553
        %v3608 = vpack.c.bf16 %v3559, %v3557
        %v3609 = vpack.c.bf16 %v3563, %v3561
        %v3610 = vpack.c.bf16 %v3567, %v3565
        %v3611 = vpack.c.bf16 %v3571, %v3569
        %v3628 = vunpack.c.l.b16 %v3267
        %v3629 = vunpack.c.l.b16 %v3268
        %v3630 = vunpack.c.l.b16 %v3269
        %v3631 = vunpack.c.l.b16 %v3270
        %v3632 = vunpack.c.l.b16 %v3271
        %v3633 = vunpack.c.l.b16 %v3272
        %v3634 = vunpack.c.l.b16 %v3273
        %v3635 = vunpack.c.l.b16 %v3274
        %v3636 = vunpack.c.l.b16 %v3275
        %v3637 = vunpack.c.l.b16 %v3276
        %v3638 = vunpack.c.l.b16 %v3277
        %v3639 = vunpack.c.l.b16 %v3278
        %v3640 = vunpack.c.l.b16 %v3279
        %v3641 = vunpack.c.l.b16 %v3280
        %v3642 = vunpack.c.l.b16 %v3281
        %v3643 = vunpack.c.l.b16 %v3282
        %v3644 = vpack.c.b16 %v3629, %v3628
        %v3645 = vpack.c.b16 %v3631, %v3630
        %v3646 = vpack.c.b16 %v3633, %v3632
        %v3647 = vpack.c.b16 %v3635, %v3634
        %v3648 = vpack.c.b16 %v3637, %v3636
        %v3649 = vpack.c.b16 %v3639, %v3638
        %v3650 = vpack.c.b16 %v3641, %v3640
        %v3651 = vpack.c.b16 %v3643, %v3642
        %3652 = vrot.lane.b32.xlu0 %v3644, 32
        %v3653 = vpop.permute.xlu0 %3652
        %3654 = vrot.lane.b32.xlu0 %v3645, 32
        %v3655 = vpop.permute.xlu0 %3654
        %3656 = vrot.lane.b32.xlu0 %v3646, 32
        %v3657 = vpop.permute.xlu0 %3656
        %3658 = vrot.lane.b32.xlu0 %v3647, 32
        %v3659 = vpop.permute.xlu0 %3658
        %3660 = vrot.lane.b32.xlu0 %v3648, 32
        %v3661 = vpop.permute.xlu0 %3660
        %3662 = vrot.lane.b32.xlu0 %v3649, 32
        %v3663 = vpop.permute.xlu0 %3662
        %3664 = vrot.lane.b32.xlu0 %v3650, 32
        %v3665 = vpop.permute.xlu0 %3664
        %3666 = vrot.lane.b32.xlu0 %v3651, 32
        %v3667 = vpop.permute.xlu0 %3666
        %3676 = vmatpush.bf16.msra.mxu0 %v3667
        %3677 = vmatpush.bf16.msra.mxu0 %v3665
        %3678 = vmatpush.bf16.msra.mxu0 %v3663
        %3679 = vmatpush.bf16.msra.mxu0 %v3661
        %3680 = vmatpush.bf16.msra.mxu0 %v3659
        %3681 = vmatpush.bf16.msra.mxu0 %v3657
        %3682 = vmatpush.bf16.msra.mxu0 %v3655
        %3683 = vmatpush.bf16.msra.mxu0 %v3653
        %3684 = vmatmul.bf16.gmra.mxu0 %v3604
        %v3685 = vpop.f32.mrf.mxu0
        %v3686 = vadd.f32 0.0, %v3685
        %v3687 = vpop.f32.mrf.mxu0
        %v3688 = vadd.f32 0.0, %v3687
        %3689 = vmatmul.bf16.gmra.mxu0 %v3605
        %v3690 = vpop.f32.mrf.mxu0
        %v3691 = vadd.f32 0.0, %v3690
        %v3692 = vpop.f32.mrf.mxu0
        %v3693 = vadd.f32 0.0, %v3692
        %3694 = vmatmul.bf16.gmra.mxu0 %v3606
        %v3695 = vpop.f32.mrf.mxu0
        %v3696 = vadd.f32 0.0, %v3695
        %v3697 = vpop.f32.mrf.mxu0
        %v3698 = vadd.f32 0.0, %v3697
        %3699 = vmatmul.bf16.gmra.mxu0 %v3607
        %v3700 = vpop.f32.mrf.mxu0
        %v3701 = vadd.f32 0.0, %v3700
        %v3702 = vpop.f32.mrf.mxu0
        %v3703 = vadd.f32 0.0, %v3702
        %3704 = vmatmul.bf16.gmra.mxu0 %v3608
        %v3705 = vpop.f32.mrf.mxu0
        %v3706 = vadd.f32 0.0, %v3705
        %v3707 = vpop.f32.mrf.mxu0
        %v3708 = vadd.f32 0.0, %v3707
        %3709 = vmatmul.bf16.gmra.mxu0 %v3609
        %v3710 = vpop.f32.mrf.mxu0
        %v3711 = vadd.f32 0.0, %v3710
        %v3712 = vpop.f32.mrf.mxu0
        %v3713 = vadd.f32 0.0, %v3712
        %3714 = vmatmul.bf16.gmra.mxu0 %v3610
        %v3715 = vpop.f32.mrf.mxu0
        %v3716 = vadd.f32 0.0, %v3715
        %v3717 = vpop.f32.mrf.mxu0
        %v3718 = vadd.f32 0.0, %v3717
        %3719 = vmatmul.bf16.gmra.mxu0 %v3611
        %v3720 = vpop.f32.mrf.mxu0
        %v3721 = vadd.f32 0.0, %v3720
        %v3722 = vpop.f32.mrf.mxu0
        %v3723 = vadd.f32 0.0, %v3722
        %3724 = vdwg.mxu0
        %v3725 = vrcp.pop %v3573
        %v3726 = vrcp.pop %v3575
        %v3727 = vrcp.pop %v3577
        %v3728 = vrcp.pop %v3579
        %v3729 = vrcp.pop %v3581
        %v3730 = vrcp.pop %v3583
        %v3731 = vrcp.pop %v3585
        %v3732 = vrcp.pop %v3587
        %v3733 = vrcp.pop %v3589
        %v3734 = vrcp.pop %v3591
        %v3735 = vrcp.pop %v3593
        %v3736 = vrcp.pop %v3595
        %v3737 = vrcp.pop %v3597
        %v3738 = vrcp.pop %v3599
        %v3739 = vrcp.pop %v3601
        %v3740 = vrcp.pop %v3603
        %v3741 = vmul.f32 %v3686, %v3725
        %v3742 = vmul.f32 %v3688, %v3726
        %v3743 = vmul.f32 %v3691, %v3727
        %v3744 = vmul.f32 %v3693, %v3728
        %v3745 = vmul.f32 %v3696, %v3729
        %v3746 = vmul.f32 %v3698, %v3730
        %v3747 = vmul.f32 %v3701, %v3731
        %v3748 = vmul.f32 %v3703, %v3732
        %v3749 = vmul.f32 %v3706, %v3733
        %v3750 = vmul.f32 %v3708, %v3734
        %v3751 = vmul.f32 %v3711, %v3735
        %v3752 = vmul.f32 %v3713, %v3736
        %v3753 = vmul.f32 %v3716, %v3737
        %v3754 = vmul.f32 %v3718, %v3738
        %v3755 = vmul.f32 %v3721, %v3739
        %v3756 = vmul.f32 %v3723, %v3740
        %v3757 = vpack.c.bf16 %v3742, %v3741
        %v3758 = vpack.c.bf16 %v3744, %v3743
        %v3759 = vpack.c.bf16 %v3746, %v3745
        %v3760 = vpack.c.bf16 %v3748, %v3747
        %v3761 = vpack.c.bf16 %v3750, %v3749
        %v3762 = vpack.c.bf16 %v3752, %v3751
        %v3763 = vpack.c.bf16 %v3754, %v3753
        %v3764 = vpack.c.bf16 %v3756, %v3755
        %v3765 = vld [vmem:[#allocation10 + $0x30] sm:$0xf]
        %v3766 = vld [vmem:[#allocation10 + $0x34] sm:$0xf]
        %v3767 = vld [vmem:[#allocation10 + $0x38] sm:$0xf]
        %v3768 = vld [vmem:[#allocation10 + $0x3c] sm:$0xf]
        %v3773 = vunpack.c.l.b16 %v3765
        %v3774 = vunpack.c.l.b16 %v3766
        %v3775 = vunpack.c.l.b16 %v3767
        %v3776 = vunpack.c.l.b16 %v3768
        %v3777 = vpack.c.b16 %v3774, %v3773
        %v3778 = vpack.c.b16 %v3776, %v3775
        %v3782 = vsel %vm1441, %v3757, 0
        %v3785 = vsel %vm1441, %v3758, 0
        %v3788 = vsel %vm1441, %v3759, 0
        %v3791 = vsel %vm1441, %v3760, 0
        %v3794 = vsel %vm1441, %v3761, 0
        %v3797 = vsel %vm1441, %v3762, 0
        %v3800 = vsel %vm1441, %v3763, 0
        %v3803 = vsel %vm1441, %v3764, 0
        %3805 = vmatpush.bf16.msra.mxu0 0
        %3806 = vmatpush.bf16.msra.mxu0 0
        %3807 = vmatpush.bf16.msra.mxu0 0
        %3808 = vmatpush.bf16.msra.mxu0 0
        %3809 = vmatpush.bf16.msra.mxu0 0
        %3810 = vmatpush.bf16.msra.mxu0 0
        %3811 = vmatpush.bf16.msra.mxu0 %v3778
        %3812 = vmatpush.bf16.msra.mxu0 %v3777
        %3813 = vmatmul.bf16.gmra.mxu0 %v3782
        %v3814 = vpop.f32.mrf.mxu0
        %v3815 = vadd.f32 0.0, %v3814
        %v3816 = vpop.f32.mrf.mxu0
        %v3817 = vadd.f32 0.0, %v3816
        %3818 = vmatmul.bf16.gmra.mxu0 %v3785
        %v3819 = vpop.f32.mrf.mxu0
        %v3820 = vadd.f32 0.0, %v3819
        %v3821 = vpop.f32.mrf.mxu0
        %v3822 = vadd.f32 0.0, %v3821
        %3823 = vmatmul.bf16.gmra.mxu0 %v3788
        %v3824 = vpop.f32.mrf.mxu0
        %v3825 = vadd.f32 0.0, %v3824
        %v3826 = vpop.f32.mrf.mxu0
        %v3827 = vadd.f32 0.0, %v3826
        %3828 = vmatmul.bf16.gmra.mxu0 %v3791
        %v3829 = vpop.f32.mrf.mxu0
        %v3830 = vadd.f32 0.0, %v3829
        %v3831 = vpop.f32.mrf.mxu0
        %v3832 = vadd.f32 0.0, %v3831
        %3833 = vmatmul.bf16.gmra.mxu0 %v3794
        %v3834 = vpop.f32.mrf.mxu0
        %v3835 = vadd.f32 0.0, %v3834
        %v3836 = vpop.f32.mrf.mxu0
        %v3837 = vadd.f32 0.0, %v3836
        %3838 = vmatmul.bf16.gmra.mxu0 %v3797
        %v3839 = vpop.f32.mrf.mxu0
        %v3840 = vadd.f32 0.0, %v3839
        %v3841 = vpop.f32.mrf.mxu0
        %v3842 = vadd.f32 0.0, %v3841
        %3843 = vmatmul.bf16.gmra.mxu0 %v3800
        %v3844 = vpop.f32.mrf.mxu0
        %v3845 = vadd.f32 0.0, %v3844
        %v3846 = vpop.f32.mrf.mxu0
        %v3847 = vadd.f32 0.0, %v3846
        %3848 = vmatmul.bf16.gmra.mxu0 %v3803
        %v3849 = vpop.f32.mrf.mxu0
        %v3850 = vadd.f32 0.0, %v3849
        %v3851 = vpop.f32.mrf.mxu0
        %v3852 = vadd.f32 0.0, %v3851
        %3853 = vdwg.mxu0
        %v3854 = vld [vmem:[#allocation3] sm:$0xff]
        %v3855 = vld [vmem:[#allocation3 + $0x8] sm:$0xff]
        %v3856 = vld [vmem:[#allocation3 + $0x10] sm:$0xff]
        %v3857 = vld [vmem:[#allocation3 + $0x18] sm:$0xff]
        %v3858 = vld [vmem:[#allocation3 + $0x20] sm:$0xff]
        %v3859 = vld [vmem:[#allocation3 + $0x28] sm:$0xff]
        %v3860 = vld [vmem:[#allocation3 + $0x30] sm:$0xff]
        %v3861 = vld [vmem:[#allocation3 + $0x38] sm:$0xff]
        %v3862 = vld [vmem:[#allocation3 + $0x40] sm:$0xff]
        %v3863 = vld [vmem:[#allocation3 + $0x48] sm:$0xff]
        %v3864 = vld [vmem:[#allocation3 + $0x50] sm:$0xff]
        %v3865 = vld [vmem:[#allocation3 + $0x58] sm:$0xff]
        %v3866 = vld [vmem:[#allocation3 + $0x60] sm:$0xff]
        %v3867 = vld [vmem:[#allocation3 + $0x68] sm:$0xff]
        %v3868 = vld [vmem:[#allocation3 + $0x70] sm:$0xff]
        %v3869 = vld [vmem:[#allocation3 + $0x78] sm:$0xff]
        %v3870 = vadd.f32 %v3854, %v3815
        %v3871 = vadd.f32 %v3855, %v3817
        %v3872 = vadd.f32 %v3856, %v3820
        %v3873 = vadd.f32 %v3857, %v3822
        %v3874 = vadd.f32 %v3858, %v3825
        %v3875 = vadd.f32 %v3859, %v3827
        %v3876 = vadd.f32 %v3860, %v3830
        %v3877 = vadd.f32 %v3861, %v3832
        %v3878 = vadd.f32 %v3862, %v3835
        %v3879 = vadd.f32 %v3863, %v3837
        %v3880 = vadd.f32 %v3864, %v3840
        %v3881 = vadd.f32 %v3865, %v3842
        %v3882 = vadd.f32 %v3866, %v3845
        %v3883 = vadd.f32 %v3867, %v3847
        %v3884 = vadd.f32 %v3868, %v3850
        %v3885 = vadd.f32 %v3869, %v3852
        %3886 = vst [vmem:[#allocation3] sm:$0xff] %v3870
        %3887 = vst [vmem:[#allocation3 + $0x8] sm:$0xff] %v3871
        %3888 = vst [vmem:[#allocation3 + $0x10] sm:$0xff] %v3872
        %3889 = vst [vmem:[#allocation3 + $0x18] sm:$0xff] %v3873
        %3890 = vst [vmem:[#allocation3 + $0x20] sm:$0xff] %v3874
        %3891 = vst [vmem:[#allocation3 + $0x28] sm:$0xff] %v3875
        %3892 = vst [vmem:[#allocation3 + $0x30] sm:$0xff] %v3876
        %3893 = vst [vmem:[#allocation3 + $0x38] sm:$0xff] %v3877
        %3894 = vst [vmem:[#allocation3 + $0x40] sm:$0xff] %v3878
        %3895 = vst [vmem:[#allocation3 + $0x48] sm:$0xff] %v3879
        %3896 = vst [vmem:[#allocation3 + $0x50] sm:$0xff] %v3880
        %3897 = vst [vmem:[#allocation3 + $0x58] sm:$0xff] %v3881
        %3898 = vst [vmem:[#allocation3 + $0x60] sm:$0xff] %v3882
        %3899 = vst [vmem:[#allocation3 + $0x68] sm:$0xff] %v3883
        %3900 = vst [vmem:[#allocation3 + $0x70] sm:$0xff] %v3884
        %3901 = vst [vmem:[#allocation3 + $0x78] sm:$0xff] %v3885
        %v3902 = vld [vmem:[#allocation3] sm:$0xff]
        %v3903 = vld [vmem:[#allocation3 + $0x8] sm:$0xff]
        %v3904 = vld [vmem:[#allocation3 + $0x10] sm:$0xff]
        %v3905 = vld [vmem:[#allocation3 + $0x18] sm:$0xff]
        %v3906 = vld [vmem:[#allocation3 + $0x20] sm:$0xff]
        %v3907 = vld [vmem:[#allocation3 + $0x28] sm:$0xff]
        %v3908 = vld [vmem:[#allocation3 + $0x30] sm:$0xff]
        %v3909 = vld [vmem:[#allocation3 + $0x38] sm:$0xff]
        %v3910 = vld [vmem:[#allocation3 + $0x40] sm:$0xff]
        %v3911 = vld [vmem:[#allocation3 + $0x48] sm:$0xff]
        %v3912 = vld [vmem:[#allocation3 + $0x50] sm:$0xff]
        %v3913 = vld [vmem:[#allocation3 + $0x58] sm:$0xff]
        %v3914 = vld [vmem:[#allocation3 + $0x60] sm:$0xff]
        %v3915 = vld [vmem:[#allocation3 + $0x68] sm:$0xff]
        %v3916 = vld [vmem:[#allocation3 + $0x70] sm:$0xff]
        %v3917 = vld [vmem:[#allocation3 + $0x78] sm:$0xff]
        %v3918 = vld [vmem:[%s4] sm:$0x1]
        %v3920 = vperm.slane %v3918, 0
        %v3922 = vadd.f32 %v3902, %v3920
        %v3923 = vadd.f32 %v3903, %v3920
        %v3924 = vadd.f32 %v3904, %v3920
        %v3925 = vadd.f32 %v3905, %v3920
        %v3926 = vadd.f32 %v3906, %v3920
        %v3927 = vadd.f32 %v3907, %v3920
        %v3928 = vadd.f32 %v3908, %v3920
        %v3929 = vadd.f32 %v3909, %v3920
        %v3930 = vadd.f32 %v3910, %v3920
        %v3931 = vadd.f32 %v3911, %v3920
        %v3932 = vadd.f32 %v3912, %v3920
        %v3933 = vadd.f32 %v3913, %v3920
        %v3934 = vadd.f32 %v3914, %v3920
        %v3935 = vadd.f32 %v3915, %v3920
        %v3936 = vadd.f32 %v3916, %v3920
        %v3937 = vadd.f32 %v3917, %v3920
        %v3938 = vld [vmem:[%s473] sm:$0xff]
        %v3939 = vld [vmem:[%s473 + $0x8] sm:$0xff]
        %v3940 = vld [vmem:[%s473 + $0x10] sm:$0xff]
        %v3941 = vld [vmem:[%s473 + $0x18] sm:$0xff]
        %v3942 = vld [vmem:[%s473 + $0x20] sm:$0xff]
        %v3943 = vld [vmem:[%s473 + $0x28] sm:$0xff]
        %v3944 = vld [vmem:[%s473 + $0x30] sm:$0xff]
        %v3945 = vld [vmem:[%s473 + $0x38] sm:$0xff]
        %v3946 = vld [vmem:[%s473 + $0x40] sm:$0xff]
        %v3947 = vld [vmem:[%s473 + $0x48] sm:$0xff]
        %v3948 = vld [vmem:[%s473 + $0x50] sm:$0xff]
        %v3949 = vld [vmem:[%s473 + $0x58] sm:$0xff]
        %v3950 = vld [vmem:[%s473 + $0x60] sm:$0xff]
        %v3951 = vld [vmem:[%s473 + $0x68] sm:$0xff]
        %v3952 = vld [vmem:[%s473 + $0x70] sm:$0xff]
        %v3953 = vld [vmem:[%s473 + $0x78] sm:$0xff]
        %v3954 = vadd.f32 %v3938, %v3922
        %v3955 = vadd.f32 %v3939, %v3923
        %v3956 = vadd.f32 %v3940, %v3924
        %v3957 = vadd.f32 %v3941, %v3925
        %v3958 = vadd.f32 %v3942, %v3926
        %v3959 = vadd.f32 %v3943, %v3927
        %v3960 = vadd.f32 %v3944, %v3928
        %v3961 = vadd.f32 %v3945, %v3929
        %v3962 = vadd.f32 %v3946, %v3930
        %v3963 = vadd.f32 %v3947, %v3931
        %v3964 = vadd.f32 %v3948, %v3932
        %v3965 = vadd.f32 %v3949, %v3933
        %v3966 = vadd.f32 %v3950, %v3934
        %v3967 = vadd.f32 %v3951, %v3935
        %v3968 = vadd.f32 %v3952, %v3936
        %v3969 = vadd.f32 %v3953, %v3937
        %v3970 = vld [vmem:[%s7] sm:$0x1]
        %v3971 = vld [vmem:[%s8] sm:$0x1]
        %3972 = vadd.xlane.f32.xlu0 %v3954
        %v3973 = vpop.xlane.xlu0 %3972
        %3974 = vadd.xlane.f32.xlu0 %v3955
        %v3975 = vpop.xlane.xlu0 %3974
        %3976 = vadd.xlane.f32.xlu0 %v3956
        %v3977 = vpop.xlane.xlu0 %3976
        %3978 = vadd.xlane.f32.xlu0 %v3957
        %v3979 = vpop.xlane.xlu0 %3978
        %3980 = vadd.xlane.f32.xlu0 %v3958
        %v3981 = vpop.xlane.xlu0 %3980
        %3982 = vadd.xlane.f32.xlu0 %v3959
        %v3983 = vpop.xlane.xlu0 %3982
        %3984 = vadd.xlane.f32.xlu0 %v3960
        %v3985 = vpop.xlane.xlu0 %3984
        %3986 = vadd.xlane.f32.xlu0 %v3961
        %v3987 = vpop.xlane.xlu0 %3986
        %3988 = vadd.xlane.f32.xlu0 %v3962
        %v3989 = vpop.xlane.xlu0 %3988
        %3990 = vadd.xlane.f32.xlu0 %v3963
        %v3991 = vpop.xlane.xlu0 %3990
        %3992 = vadd.xlane.f32.xlu0 %v3964
        %v3993 = vpop.xlane.xlu0 %3992
        %3994 = vadd.xlane.f32.xlu0 %v3965
        %v3995 = vpop.xlane.xlu0 %3994
        %3996 = vadd.xlane.f32.xlu0 %v3966
        %v3997 = vpop.xlane.xlu0 %3996
        %3998 = vadd.xlane.f32.xlu0 %v3967
        %v3999 = vpop.xlane.xlu0 %3998
        %4000 = vadd.xlane.f32.xlu0 %v3968
        %v4001 = vpop.xlane.xlu0 %4000
        %4002 = vadd.xlane.f32.xlu0 %v3969
        %v4003 = vpop.xlane.xlu0 %4002
        %v4004 = vmul.f32 %v3973, %v599
        %v4005 = vmul.f32 %v3975, %v599
        %v4006 = vmul.f32 %v3977, %v599
        %v4007 = vmul.f32 %v3979, %v599
        %v4008 = vmul.f32 %v3981, %v599
        %v4009 = vmul.f32 %v3983, %v599
        %v4010 = vmul.f32 %v3985, %v599
        %v4011 = vmul.f32 %v3987, %v599
        %v4012 = vmul.f32 %v3989, %v599
        %v4013 = vmul.f32 %v3991, %v599
        %v4014 = vmul.f32 %v3993, %v599
        %v4015 = vmul.f32 %v3995, %v599
        %v4016 = vmul.f32 %v3997, %v599
        %v4017 = vmul.f32 %v3999, %v599
        %v4018 = vmul.f32 %v4001, %v599
        %v4019 = vmul.f32 %v4003, %v599
        %v4020 = vsub.f32 %v3954, %v4004
        %v4021 = vsub.f32 %v3955, %v4005
        %v4022 = vsub.f32 %v3956, %v4006
        %v4023 = vsub.f32 %v3957, %v4007
        %v4024 = vsub.f32 %v3958, %v4008
        %v4025 = vsub.f32 %v3959, %v4009
        %v4026 = vsub.f32 %v3960, %v4010
        %v4027 = vsub.f32 %v3961, %v4011
        %v4028 = vsub.f32 %v3962, %v4012
        %v4029 = vsub.f32 %v3963, %v4013
        %v4030 = vsub.f32 %v3964, %v4014
        %v4031 = vsub.f32 %v3965, %v4015
        %v4032 = vsub.f32 %v3966, %v4016
        %v4033 = vsub.f32 %v3967, %v4017
        %v4034 = vsub.f32 %v3968, %v4018
        %v4035 = vsub.f32 %v3969, %v4019
        %v4036 = vmul.f32 %v4020, %v4020
        %v4037 = vmul.f32 %v4021, %v4021
        %v4038 = vmul.f32 %v4022, %v4022
        %v4039 = vmul.f32 %v4023, %v4023
        %v4040 = vmul.f32 %v4024, %v4024
        %v4041 = vmul.f32 %v4025, %v4025
        %v4042 = vmul.f32 %v4026, %v4026
        %v4043 = vmul.f32 %v4027, %v4027
        %v4044 = vmul.f32 %v4028, %v4028
        %v4045 = vmul.f32 %v4029, %v4029
        %v4046 = vmul.f32 %v4030, %v4030
        %v4047 = vmul.f32 %v4031, %v4031
        %v4048 = vmul.f32 %v4032, %v4032
        %v4049 = vmul.f32 %v4033, %v4033
        %v4050 = vmul.f32 %v4034, %v4034
        %v4051 = vmul.f32 %v4035, %v4035
        %4052 = vadd.xlane.f32.xlu0 %v4036
        %v4053 = vpop.xlane.xlu0 %4052
        %4054 = vadd.xlane.f32.xlu0 %v4037
        %v4055 = vpop.xlane.xlu0 %4054
        %4056 = vadd.xlane.f32.xlu0 %v4038
        %v4057 = vpop.xlane.xlu0 %4056
        %4058 = vadd.xlane.f32.xlu0 %v4039
        %v4059 = vpop.xlane.xlu0 %4058
        %4060 = vadd.xlane.f32.xlu0 %v4040
        %v4061 = vpop.xlane.xlu0 %4060
        %4062 = vadd.xlane.f32.xlu0 %v4041
        %v4063 = vpop.xlane.xlu0 %4062
        %4064 = vadd.xlane.f32.xlu0 %v4042
        %v4065 = vpop.xlane.xlu0 %4064
        %4066 = vadd.xlane.f32.xlu0 %v4043
        %v4067 = vpop.xlane.xlu0 %4066
        %4068 = vadd.xlane.f32.xlu0 %v4044
        %v4069 = vpop.xlane.xlu0 %4068
        %4070 = vadd.xlane.f32.xlu0 %v4045
        %v4071 = vpop.xlane.xlu0 %4070
        %4072 = vadd.xlane.f32.xlu0 %v4046
        %v4073 = vpop.xlane.xlu0 %4072
        %4074 = vadd.xlane.f32.xlu0 %v4047
        %v4075 = vpop.xlane.xlu0 %4074
        %4076 = vadd.xlane.f32.xlu0 %v4048
        %v4077 = vpop.xlane.xlu0 %4076
        %4078 = vadd.xlane.f32.xlu0 %v4049
        %v4079 = vpop.xlane.xlu0 %4078
        %4080 = vadd.xlane.f32.xlu0 %v4050
        %v4081 = vpop.xlane.xlu0 %4080
        %4082 = vadd.xlane.f32.xlu0 %v4051
        %v4083 = vpop.xlane.xlu0 %4082
        %v4084 = vmul.f32 %v4053, %v599
        %v4085 = vmul.f32 %v4055, %v599
        %v4086 = vmul.f32 %v4057, %v599
        %v4087 = vmul.f32 %v4059, %v599
        %v4088 = vmul.f32 %v4061, %v599
        %v4089 = vmul.f32 %v4063, %v599
        %v4090 = vmul.f32 %v4065, %v599
        %v4091 = vmul.f32 %v4067, %v599
        %v4092 = vmul.f32 %v4069, %v599
        %v4093 = vmul.f32 %v4071, %v599
        %v4094 = vmul.f32 %v4073, %v599
        %v4095 = vmul.f32 %v4075, %v599
        %v4096 = vmul.f32 %v4077, %v599
        %v4097 = vmul.f32 %v4079, %v599
        %v4098 = vmul.f32 %v4081, %v599
        %v4099 = vmul.f32 %v4083, %v599
        %v4100 = vadd.f32 %v4084, 1e-05
        %v4101 = vadd.f32 %v4085, 1e-05
        %v4102 = vadd.f32 %v4086, 1e-05
        %v4103 = vadd.f32 %v4087, 1e-05
        %v4104 = vadd.f32 %v4088, 1e-05
        %v4105 = vadd.f32 %v4089, 1e-05
        %v4106 = vadd.f32 %v4090, 1e-05
        %v4107 = vadd.f32 %v4091, 1e-05
        %v4108 = vadd.f32 %v4092, 1e-05
        %v4109 = vadd.f32 %v4093, 1e-05
        %v4110 = vadd.f32 %v4094, 1e-05
        %v4111 = vadd.f32 %v4095, 1e-05
        %v4112 = vadd.f32 %v4096, 1e-05
        %v4113 = vadd.f32 %v4097, 1e-05
        %v4114 = vadd.f32 %v4098, 1e-05
        %v4115 = vadd.f32 %v4099, 1e-05
        %v4116 = vrsqrt.pop %v4100
        %v4117 = vmul.f32 %v4116, %v4100
        %v4118 = vmul.f32 %v4117, %v4116
        %v4119 = vmul.f32 0.5, %v4118
        %v4120 = vsub.f32 1.5, %v4119
        %v4121 = vmul.f32 %v4116, %v4120
        %vm4122 = vweird.f32 %v4100
        %vm4123 = vweird.f32 %v4116
        %vm4124 = vmor %vm4122, %vm4123
        %v4125 = vsel %vm4124, %v4116, %v4121
        %v4126 = vrsqrt.pop %v4101
        %v4127 = vmul.f32 %v4126, %v4101
        %v4128 = vmul.f32 %v4127, %v4126
        %v4129 = vmul.f32 0.5, %v4128
        %v4130 = vsub.f32 1.5, %v4129
        %v4131 = vmul.f32 %v4126, %v4130
        %vm4132 = vweird.f32 %v4101
        %vm4133 = vweird.f32 %v4126
        %vm4134 = vmor %vm4132, %vm4133
        %v4135 = vsel %vm4134, %v4126, %v4131
        %v4136 = vrsqrt.pop %v4102
        %v4137 = vmul.f32 %v4136, %v4102
        %v4138 = vmul.f32 %v4137, %v4136
        %v4139 = vmul.f32 0.5, %v4138
        %v4140 = vsub.f32 1.5, %v4139
        %v4141 = vmul.f32 %v4136, %v4140
        %vm4142 = vweird.f32 %v4102
        %vm4143 = vweird.f32 %v4136
        %vm4144 = vmor %vm4142, %vm4143
        %v4145 = vsel %vm4144, %v4136, %v4141
        %v4146 = vrsqrt.pop %v4103
        %v4147 = vmul.f32 %v4146, %v4103
        %v4148 = vmul.f32 %v4147, %v4146
        %v4149 = vmul.f32 0.5, %v4148
        %v4150 = vsub.f32 1.5, %v4149
        %v4151 = vmul.f32 %v4146, %v4150
        %vm4152 = vweird.f32 %v4103
        %vm4153 = vweird.f32 %v4146
        %vm4154 = vmor %vm4152, %vm4153
        %v4155 = vsel %vm4154, %v4146, %v4151
        %v4156 = vrsqrt.pop %v4104
        %v4157 = vmul.f32 %v4156, %v4104
        %v4158 = vmul.f32 %v4157, %v4156
        %v4159 = vmul.f32 0.5, %v4158
        %v4160 = vsub.f32 1.5, %v4159
        %v4161 = vmul.f32 %v4156, %v4160
        %vm4162 = vweird.f32 %v4104
        %vm4163 = vweird.f32 %v4156
        %vm4164 = vmor %vm4162, %vm4163
        %v4165 = vsel %vm4164, %v4156, %v4161
        %v4166 = vrsqrt.pop %v4105
        %v4167 = vmul.f32 %v4166, %v4105
        %v4168 = vmul.f32 %v4167, %v4166
        %v4169 = vmul.f32 0.5, %v4168
        %v4170 = vsub.f32 1.5, %v4169
        %v4171 = vmul.f32 %v4166, %v4170
        %vm4172 = vweird.f32 %v4105
        %vm4173 = vweird.f32 %v4166
        %vm4174 = vmor %vm4172, %vm4173
        %v4175 = vsel %vm4174, %v4166, %v4171
        %v4176 = vrsqrt.pop %v4106
        %v4177 = vmul.f32 %v4176, %v4106
        %v4178 = vmul.f32 %v4177, %v4176
        %v4179 = vmul.f32 0.5, %v4178
        %v4180 = vsub.f32 1.5, %v4179
        %v4181 = vmul.f32 %v4176, %v4180
        %vm4182 = vweird.f32 %v4106
        %vm4183 = vweird.f32 %v4176
        %vm4184 = vmor %vm4182, %vm4183
        %v4185 = vsel %vm4184, %v4176, %v4181
        %v4186 = vrsqrt.pop %v4107
        %v4187 = vmul.f32 %v4186, %v4107
        %v4188 = vmul.f32 %v4187, %v4186
        %v4189 = vmul.f32 0.5, %v4188
        %v4190 = vsub.f32 1.5, %v4189
        %v4191 = vmul.f32 %v4186, %v4190
        %vm4192 = vweird.f32 %v4107
        %vm4193 = vweird.f32 %v4186
        %vm4194 = vmor %vm4192, %vm4193
        %v4195 = vsel %vm4194, %v4186, %v4191
        %v4196 = vrsqrt.pop %v4108
        %v4197 = vmul.f32 %v4196, %v4108
        %v4198 = vmul.f32 %v4197, %v4196
        %v4199 = vmul.f32 0.5, %v4198
        %v4200 = vsub.f32 1.5, %v4199
        %v4201 = vmul.f32 %v4196, %v4200
        %vm4202 = vweird.f32 %v4108
        %vm4203 = vweird.f32 %v4196
        %vm4204 = vmor %vm4202, %vm4203
        %v4205 = vsel %vm4204, %v4196, %v4201
        %v4206 = vrsqrt.pop %v4109
        %v4207 = vmul.f32 %v4206, %v4109
        %v4208 = vmul.f32 %v4207, %v4206
        %v4209 = vmul.f32 0.5, %v4208
        %v4210 = vsub.f32 1.5, %v4209
        %v4211 = vmul.f32 %v4206, %v4210
        %vm4212 = vweird.f32 %v4109
        %vm4213 = vweird.f32 %v4206
        %vm4214 = vmor %vm4212, %vm4213
        %v4215 = vsel %vm4214, %v4206, %v4211
        %v4216 = vrsqrt.pop %v4110
        %v4217 = vmul.f32 %v4216, %v4110
        %v4218 = vmul.f32 %v4217, %v4216
        %v4219 = vmul.f32 0.5, %v4218
        %v4220 = vsub.f32 1.5, %v4219
        %v4221 = vmul.f32 %v4216, %v4220
        %vm4222 = vweird.f32 %v4110
        %vm4223 = vweird.f32 %v4216
        %vm4224 = vmor %vm4222, %vm4223
        %v4225 = vsel %vm4224, %v4216, %v4221
        %v4226 = vrsqrt.pop %v4111
        %v4227 = vmul.f32 %v4226, %v4111
        %v4228 = vmul.f32 %v4227, %v4226
        %v4229 = vmul.f32 0.5, %v4228
        %v4230 = vsub.f32 1.5, %v4229
        %v4231 = vmul.f32 %v4226, %v4230
        %vm4232 = vweird.f32 %v4111
        %vm4233 = vweird.f32 %v4226
        %vm4234 = vmor %vm4232, %vm4233
        %v4235 = vsel %vm4234, %v4226, %v4231
        %v4236 = vrsqrt.pop %v4112
        %v4237 = vmul.f32 %v4236, %v4112
        %v4238 = vmul.f32 %v4237, %v4236
        %v4239 = vmul.f32 0.5, %v4238
        %v4240 = vsub.f32 1.5, %v4239
        %v4241 = vmul.f32 %v4236, %v4240
        %vm4242 = vweird.f32 %v4112
        %vm4243 = vweird.f32 %v4236
        %vm4244 = vmor %vm4242, %vm4243
        %v4245 = vsel %vm4244, %v4236, %v4241
        %v4246 = vrsqrt.pop %v4113
        %v4247 = vmul.f32 %v4246, %v4113
        %v4248 = vmul.f32 %v4247, %v4246
        %v4249 = vmul.f32 0.5, %v4248
        %v4250 = vsub.f32 1.5, %v4249
        %v4251 = vmul.f32 %v4246, %v4250
        %vm4252 = vweird.f32 %v4113
        %vm4253 = vweird.f32 %v4246
        %vm4254 = vmor %vm4252, %vm4253
        %v4255 = vsel %vm4254, %v4246, %v4251
        %v4256 = vrsqrt.pop %v4114
        %v4257 = vmul.f32 %v4256, %v4114
        %v4258 = vmul.f32 %v4257, %v4256
        %v4259 = vmul.f32 0.5, %v4258
        %v4260 = vsub.f32 1.5, %v4259
        %v4261 = vmul.f32 %v4256, %v4260
        %vm4262 = vweird.f32 %v4114
        %vm4263 = vweird.f32 %v4256
        %vm4264 = vmor %vm4262, %vm4263
        %v4265 = vsel %vm4264, %v4256, %v4261
        %v4266 = vrsqrt.pop %v4115
        %v4267 = vmul.f32 %v4266, %v4115
        %v4268 = vmul.f32 %v4267, %v4266
        %v4269 = vmul.f32 0.5, %v4268
        %v4270 = vsub.f32 1.5, %v4269
        %v4271 = vmul.f32 %v4266, %v4270
        %vm4272 = vweird.f32 %v4115
        %vm4273 = vweird.f32 %v4266
        %vm4274 = vmor %vm4272, %vm4273
        %v4275 = vsel %vm4274, %v4266, %v4271
        %v4276 = vmul.f32 %v4020, %v4125
        %v4277 = vmul.f32 %v4021, %v4135
        %v4278 = vmul.f32 %v4022, %v4145
        %v4279 = vmul.f32 %v4023, %v4155
        %v4280 = vmul.f32 %v4024, %v4165
        %v4281 = vmul.f32 %v4025, %v4175
        %v4282 = vmul.f32 %v4026, %v4185
        %v4283 = vmul.f32 %v4027, %v4195
        %v4284 = vmul.f32 %v4028, %v4205
        %v4285 = vmul.f32 %v4029, %v4215
        %v4286 = vmul.f32 %v4030, %v4225
        %v4287 = vmul.f32 %v4031, %v4235
        %v4288 = vmul.f32 %v4032, %v4245
        %v4289 = vmul.f32 %v4033, %v4255
        %v4290 = vmul.f32 %v4034, %v4265
        %v4291 = vmul.f32 %v4035, %v4275
        %v4293 = vperm.slane %v3970, 0
        %v4295 = vmul.f32 %v4276, %v4293
        %v4296 = vmul.f32 %v4277, %v4293
        %v4297 = vmul.f32 %v4278, %v4293
        %v4298 = vmul.f32 %v4279, %v4293
        %v4299 = vmul.f32 %v4280, %v4293
        %v4300 = vmul.f32 %v4281, %v4293
        %v4301 = vmul.f32 %v4282, %v4293
        %v4302 = vmul.f32 %v4283, %v4293
        %v4303 = vmul.f32 %v4284, %v4293
        %v4304 = vmul.f32 %v4285, %v4293
        %v4305 = vmul.f32 %v4286, %v4293
        %v4306 = vmul.f32 %v4287, %v4293
        %v4307 = vmul.f32 %v4288, %v4293
        %v4308 = vmul.f32 %v4289, %v4293
        %v4309 = vmul.f32 %v4290, %v4293
        %v4310 = vmul.f32 %v4291, %v4293
        %v4312 = vperm.slane %v3971, 0
        %v4314 = vadd.f32 %v4295, %v4312
        %v4315 = vadd.f32 %v4296, %v4312
        %v4316 = vadd.f32 %v4297, %v4312
        %v4317 = vadd.f32 %v4298, %v4312
        %v4318 = vadd.f32 %v4299, %v4312
        %v4319 = vadd.f32 %v4300, %v4312
        %v4320 = vadd.f32 %v4301, %v4312
        %v4321 = vadd.f32 %v4302, %v4312
        %v4322 = vadd.f32 %v4303, %v4312
        %v4323 = vadd.f32 %v4304, %v4312
        %v4324 = vadd.f32 %v4305, %v4312
        %v4325 = vadd.f32 %v4306, %v4312
        %v4326 = vadd.f32 %v4307, %v4312
        %v4327 = vadd.f32 %v4308, %v4312
        %v4328 = vadd.f32 %v4309, %v4312
        %v4329 = vadd.f32 %v4310, %v4312
        %v4330 = vpack.c.bf16 %v4315, %v4314
        %v4331 = vpack.c.bf16 %v4317, %v4316
        %v4332 = vpack.c.bf16 %v4319, %v4318
        %v4333 = vpack.c.bf16 %v4321, %v4320
        %v4334 = vpack.c.bf16 %v4323, %v4322
        %v4335 = vpack.c.bf16 %v4325, %v4324
        %v4336 = vpack.c.bf16 %v4327, %v4326
        %v4337 = vpack.c.bf16 %v4329, %v4328
        %v4338 = vld [vmem:[#allocation12] sm:$0xff]
        %v4339 = vld [vmem:[#allocation12 + $0x8] sm:$0xff]
        %v4340 = vld [vmem:[#allocation12 + $0x10] sm:$0xff]
        %v4341 = vld [vmem:[#allocation12 + $0x18] sm:$0xff]
        %v4342 = vld [vmem:[#allocation12 + $0x20] sm:$0xff]
        %v4343 = vld [vmem:[#allocation12 + $0x28] sm:$0xff]
        %v4344 = vld [vmem:[#allocation12 + $0x30] sm:$0xff]
        %v4345 = vld [vmem:[#allocation12 + $0x38] sm:$0xff]
        %v4346 = vld [vmem:[#allocation12 + $0x40] sm:$0xff]
        %v4347 = vld [vmem:[#allocation12 + $0x48] sm:$0xff]
        %v4348 = vld [vmem:[#allocation12 + $0x50] sm:$0xff]
        %v4349 = vld [vmem:[#allocation12 + $0x58] sm:$0xff]
        %v4350 = vld [vmem:[#allocation12 + $0x60] sm:$0xff]
        %v4351 = vld [vmem:[#allocation12 + $0x68] sm:$0xff]
        %v4352 = vld [vmem:[#allocation12 + $0x70] sm:$0xff]
        %v4353 = vld [vmem:[#allocation12 + $0x78] sm:$0xff]
        %v4354 = vld [vmem:[%s10] sm:$0x3]
        %v4356 = vperm.slane %v4354, 0
        %v4357 = vperm.slane %v4354, 1
        %v4376 = vunpack.c.l.b16 %v4338
        %v4377 = vunpack.c.h.b16 %v4338
        %v4378 = vunpack.c.l.b16 %v4339
        %v4379 = vunpack.c.h.b16 %v4339
        %v4380 = vunpack.c.l.b16 %v4340
        %v4381 = vunpack.c.h.b16 %v4340
        %v4382 = vunpack.c.l.b16 %v4341
        %v4383 = vunpack.c.h.b16 %v4341
        %v4384 = vunpack.c.l.b16 %v4342
        %v4385 = vunpack.c.h.b16 %v4342
        %v4386 = vunpack.c.l.b16 %v4343
        %v4387 = vunpack.c.h.b16 %v4343
        %v4388 = vunpack.c.l.b16 %v4344
        %v4389 = vunpack.c.h.b16 %v4344
        %v4390 = vunpack.c.l.b16 %v4345
        %v4391 = vunpack.c.h.b16 %v4345
        %v4392 = vunpack.c.l.b16 %v4346
        %v4393 = vunpack.c.h.b16 %v4346
        %v4394 = vunpack.c.l.b16 %v4347
        %v4395 = vunpack.c.h.b16 %v4347
        %v4396 = vunpack.c.l.b16 %v4348
        %v4397 = vunpack.c.h.b16 %v4348
        %v4398 = vunpack.c.l.b16 %v4349
        %v4399 = vunpack.c.h.b16 %v4349
        %v4400 = vunpack.c.l.b16 %v4350
        %v4401 = vunpack.c.h.b16 %v4350
        %v4402 = vunpack.c.l.b16 %v4351
        %v4403 = vunpack.c.h.b16 %v4351
        %v4404 = vunpack.c.l.b16 %v4352
        %v4405 = vunpack.c.h.b16 %v4352
        %v4406 = vunpack.c.l.b16 %v4353
        %v4407 = vunpack.c.h.b16 %v4353
        %v4408 = vpack.c.b16 %v4378, %v4376
        %v4409 = vpack.c.b16 %v4379, %v4377
        %v4410 = vpack.c.b16 %v4382, %v4380
        %v4411 = vpack.c.b16 %v4383, %v4381
        %v4412 = vpack.c.b16 %v4386, %v4384
        %v4413 = vpack.c.b16 %v4387, %v4385
        %v4414 = vpack.c.b16 %v4390, %v4388
        %v4415 = vpack.c.b16 %v4391, %v4389
        %v4416 = vpack.c.b16 %v4394, %v4392
        %v4417 = vpack.c.b16 %v4395, %v4393
        %v4418 = vpack.c.b16 %v4398, %v4396
        %v4419 = vpack.c.b16 %v4399, %v4397
        %v4420 = vpack.c.b16 %v4402, %v4400
        %v4421 = vpack.c.b16 %v4403, %v4401
        %v4422 = vpack.c.b16 %v4406, %v4404
        %v4423 = vpack.c.b16 %v4407, %v4405
        %4440 = vmatpush.bf16.msra.mxu0 %v4422
        %4441 = vmatpush.bf16.msra.mxu0 %v4420
        %4442 = vmatpush.bf16.msra.mxu0 %v4418
        %4443 = vmatpush.bf16.msra.mxu0 %v4416
        %4444 = vmatpush.bf16.msra.mxu0 %v4414
        %4445 = vmatpush.bf16.msra.mxu0 %v4412
        %4446 = vmatpush.bf16.msra.mxu0 %v4410
        %4447 = vmatpush.bf16.msra.mxu0 %v4408
        %4448 = vmatmul.bf16.gmra.mxu0 %v4330
        %v4449 = vpop.f32.mrf.mxu0
        %v4450 = vadd.f32 %v4356, %v4449
        %v4451 = vpop.f32.mrf.mxu0
        %v4452 = vadd.f32 %v4356, %v4451
        %4453 = vmatmul.bf16.gmra.mxu0 %v4331
        %v4454 = vpop.f32.mrf.mxu0
        %v4455 = vadd.f32 %v4356, %v4454
        %v4456 = vpop.f32.mrf.mxu0
        %v4457 = vadd.f32 %v4356, %v4456
        %4458 = vmatmul.bf16.gmra.mxu0 %v4332
        %v4459 = vpop.f32.mrf.mxu0
        %v4460 = vadd.f32 %v4356, %v4459
        %v4461 = vpop.f32.mrf.mxu0
        %v4462 = vadd.f32 %v4356, %v4461
        %4463 = vmatmul.bf16.gmra.mxu0 %v4333
        %v4464 = vpop.f32.mrf.mxu0
        %v4465 = vadd.f32 %v4356, %v4464
        %v4466 = vpop.f32.mrf.mxu0
        %v4467 = vadd.f32 %v4356, %v4466
        %4468 = vmatmul.bf16.gmra.mxu0 %v4334
        %v4469 = vpop.f32.mrf.mxu0
        %v4470 = vadd.f32 %v4356, %v4469
        %v4471 = vpop.f32.mrf.mxu0
        %v4472 = vadd.f32 %v4356, %v4471
        %4473 = vmatmul.bf16.gmra.mxu0 %v4335
        %v4474 = vpop.f32.mrf.mxu0
        %v4475 = vadd.f32 %v4356, %v4474
        %v4476 = vpop.f32.mrf.mxu0
        %v4477 = vadd.f32 %v4356, %v4476
        %4478 = vmatmul.bf16.gmra.mxu0 %v4336
        %v4479 = vpop.f32.mrf.mxu0
        %v4480 = vadd.f32 %v4356, %v4479
        %v4481 = vpop.f32.mrf.mxu0
        %v4482 = vadd.f32 %v4356, %v4481
        %4483 = vmatmul.bf16.gmra.mxu0 %v4337
        %v4484 = vpop.f32.mrf.mxu0
        %v4485 = vadd.f32 %v4356, %v4484
        %v4486 = vpop.f32.mrf.mxu0
        %v4487 = vadd.f32 %v4356, %v4486
        %4488 = vdwg.mxu0
        %4489 = vmatpush.bf16.msra.mxu0 %v4423
        %4490 = vmatpush.bf16.msra.mxu0 %v4421
        %4491 = vmatpush.bf16.msra.mxu0 %v4419
        %4492 = vmatpush.bf16.msra.mxu0 %v4417
        %4493 = vmatpush.bf16.msra.mxu0 %v4415
        %4494 = vmatpush.bf16.msra.mxu0 %v4413
        %4495 = vmatpush.bf16.msra.mxu0 %v4411
        %4496 = vmatpush.bf16.msra.mxu0 %v4409
        %4497 = vmatmul.bf16.gmra.mxu0 %v4330
        %v4498 = vpop.f32.mrf.mxu0
        %v4499 = vadd.f32 %v4357, %v4498
        %v4500 = vpop.f32.mrf.mxu0
        %v4501 = vadd.f32 %v4357, %v4500
        %4502 = vmatmul.bf16.gmra.mxu0 %v4331
        %v4503 = vpop.f32.mrf.mxu0
        %v4504 = vadd.f32 %v4357, %v4503
        %v4505 = vpop.f32.mrf.mxu0
        %v4506 = vadd.f32 %v4357, %v4505
        %4507 = vmatmul.bf16.gmra.mxu0 %v4332
        %v4508 = vpop.f32.mrf.mxu0
        %v4509 = vadd.f32 %v4357, %v4508
        %v4510 = vpop.f32.mrf.mxu0
        %v4511 = vadd.f32 %v4357, %v4510
        %4512 = vmatmul.bf16.gmra.mxu0 %v4333
        %v4513 = vpop.f32.mrf.mxu0
        %v4514 = vadd.f32 %v4357, %v4513
        %v4515 = vpop.f32.mrf.mxu0
        %v4516 = vadd.f32 %v4357, %v4515
        %4517 = vmatmul.bf16.gmra.mxu0 %v4334
        %v4518 = vpop.f32.mrf.mxu0
        %v4519 = vadd.f32 %v4357, %v4518
        %v4520 = vpop.f32.mrf.mxu0
        %v4521 = vadd.f32 %v4357, %v4520
        %4522 = vmatmul.bf16.gmra.mxu0 %v4335
        %v4523 = vpop.f32.mrf.mxu0
        %v4524 = vadd.f32 %v4357, %v4523
        %v4525 = vpop.f32.mrf.mxu0
        %v4526 = vadd.f32 %v4357, %v4525
        %4527 = vmatmul.bf16.gmra.mxu0 %v4336
        %v4528 = vpop.f32.mrf.mxu0
        %v4529 = vadd.f32 %v4357, %v4528
        %v4530 = vpop.f32.mrf.mxu0
        %v4531 = vadd.f32 %v4357, %v4530
        %4532 = vmatmul.bf16.gmra.mxu0 %v4337
        %v4533 = vpop.f32.mrf.mxu0
        %v4534 = vadd.f32 %v4357, %v4533
        %v4535 = vpop.f32.mrf.mxu0
        %v4536 = vadd.f32 %v4357, %v4535
        %4537 = vdwg.mxu0
        %v4538 = vmax.f32 %v4450, 0.0
        %v4539 = vmax.f32 %v4499, 0.0
        %v4540 = vmax.f32 %v4452, 0.0
        %v4541 = vmax.f32 %v4501, 0.0
        %v4542 = vmax.f32 %v4455, 0.0
        %v4543 = vmax.f32 %v4504, 0.0
        %v4544 = vmax.f32 %v4457, 0.0
        %v4545 = vmax.f32 %v4506, 0.0
        %v4546 = vmax.f32 %v4460, 0.0
        %v4547 = vmax.f32 %v4509, 0.0
        %v4548 = vmax.f32 %v4462, 0.0
        %v4549 = vmax.f32 %v4511, 0.0
        %v4550 = vmax.f32 %v4465, 0.0
        %v4551 = vmax.f32 %v4514, 0.0
        %v4552 = vmax.f32 %v4467, 0.0
        %v4553 = vmax.f32 %v4516, 0.0
        %v4554 = vmax.f32 %v4470, 0.0
        %v4555 = vmax.f32 %v4519, 0.0
        %v4556 = vmax.f32 %v4472, 0.0
        %v4557 = vmax.f32 %v4521, 0.0
        %v4558 = vmax.f32 %v4475, 0.0
        %v4559 = vmax.f32 %v4524, 0.0
        %v4560 = vmax.f32 %v4477, 0.0
        %v4561 = vmax.f32 %v4526, 0.0
        %v4562 = vmax.f32 %v4480, 0.0
        %v4563 = vmax.f32 %v4529, 0.0
        %v4564 = vmax.f32 %v4482, 0.0
        %v4565 = vmax.f32 %v4531, 0.0
        %v4566 = vmax.f32 %v4485, 0.0
        %v4567 = vmax.f32 %v4534, 0.0
        %v4568 = vmax.f32 %v4487, 0.0
        %v4569 = vmax.f32 %v4536, 0.0
        %v4570 = vpack.c.bf16 %v4540, %v4538
        %v4571 = vpack.c.bf16 %v4541, %v4539
        %v4572 = vpack.c.bf16 %v4544, %v4542
        %v4573 = vpack.c.bf16 %v4545, %v4543
        %v4574 = vpack.c.bf16 %v4548, %v4546
        %v4575 = vpack.c.bf16 %v4549, %v4547
        %v4576 = vpack.c.bf16 %v4552, %v4550
        %v4577 = vpack.c.bf16 %v4553, %v4551
        %v4578 = vpack.c.bf16 %v4556, %v4554
        %v4579 = vpack.c.bf16 %v4557, %v4555
        %v4580 = vpack.c.bf16 %v4560, %v4558
        %v4581 = vpack.c.bf16 %v4561, %v4559
        %v4582 = vpack.c.bf16 %v4564, %v4562
        %v4583 = vpack.c.bf16 %v4565, %v4563
        %v4584 = vpack.c.bf16 %v4568, %v4566
        %v4585 = vpack.c.bf16 %v4569, %v4567
        %v4586 = vld [vmem:[#allocation13] sm:$0xf]
        %v4587 = vld [vmem:[#allocation13 + $0x4] sm:$0xf]
        %v4588 = vld [vmem:[#allocation13 + $0x8] sm:$0xf]
        %v4589 = vld [vmem:[#allocation13 + $0xc] sm:$0xf]
        %v4590 = vld [vmem:[#allocation13 + $0x10] sm:$0xf]
        %v4591 = vld [vmem:[#allocation13 + $0x14] sm:$0xf]
        %v4592 = vld [vmem:[#allocation13 + $0x18] sm:$0xf]
        %v4593 = vld [vmem:[#allocation13 + $0x1c] sm:$0xf]
        %v4594 = vld [vmem:[#allocation13 + $0x20] sm:$0xf]
        %v4595 = vld [vmem:[#allocation13 + $0x24] sm:$0xf]
        %v4596 = vld [vmem:[#allocation13 + $0x28] sm:$0xf]
        %v4597 = vld [vmem:[#allocation13 + $0x2c] sm:$0xf]
        %v4598 = vld [vmem:[#allocation13 + $0x30] sm:$0xf]
        %v4599 = vld [vmem:[#allocation13 + $0x34] sm:$0xf]
        %v4600 = vld [vmem:[#allocation13 + $0x38] sm:$0xf]
        %v4601 = vld [vmem:[#allocation13 + $0x3c] sm:$0xf]
        %v4602 = vld [vmem:[#allocation13 + $0x40] sm:$0xf]
        %v4603 = vld [vmem:[#allocation13 + $0x44] sm:$0xf]
        %v4604 = vld [vmem:[#allocation13 + $0x48] sm:$0xf]
        %v4605 = vld [vmem:[#allocation13 + $0x4c] sm:$0xf]
        %v4606 = vld [vmem:[#allocation13 + $0x50] sm:$0xf]
        %v4607 = vld [vmem:[#allocation13 + $0x54] sm:$0xf]
        %v4608 = vld [vmem:[#allocation13 + $0x58] sm:$0xf]
        %v4609 = vld [vmem:[#allocation13 + $0x5c] sm:$0xf]
        %v4610 = vld [vmem:[#allocation13 + $0x60] sm:$0xf]
        %v4611 = vld [vmem:[#allocation13 + $0x64] sm:$0xf]
        %v4612 = vld [vmem:[#allocation13 + $0x68] sm:$0xf]
        %v4613 = vld [vmem:[#allocation13 + $0x6c] sm:$0xf]
        %v4614 = vld [vmem:[#allocation13 + $0x70] sm:$0xf]
        %v4615 = vld [vmem:[#allocation13 + $0x74] sm:$0xf]
        %v4616 = vld [vmem:[#allocation13 + $0x78] sm:$0xf]
        %v4617 = vld [vmem:[#allocation13 + $0x7c] sm:$0xf]
        %v4618 = vld [vmem:[%s12] sm:$0x1]
        %v4620 = vperm.slane %v4618, 0
        %v4654 = vunpack.c.l.b16 %v4586
        %v4655 = vunpack.c.l.b16 %v4587
        %v4656 = vunpack.c.l.b16 %v4588
        %v4657 = vunpack.c.l.b16 %v4589
        %v4658 = vunpack.c.l.b16 %v4590
        %v4659 = vunpack.c.l.b16 %v4591
        %v4660 = vunpack.c.l.b16 %v4592
        %v4661 = vunpack.c.l.b16 %v4593
        %v4662 = vunpack.c.l.b16 %v4594
        %v4663 = vunpack.c.l.b16 %v4595
        %v4664 = vunpack.c.l.b16 %v4596
        %v4665 = vunpack.c.l.b16 %v4597
        %v4666 = vunpack.c.l.b16 %v4598
        %v4667 = vunpack.c.l.b16 %v4599
        %v4668 = vunpack.c.l.b16 %v4600
        %v4669 = vunpack.c.l.b16 %v4601
        %v4670 = vunpack.c.l.b16 %v4602
        %v4671 = vunpack.c.l.b16 %v4603
        %v4672 = vunpack.c.l.b16 %v4604
        %v4673 = vunpack.c.l.b16 %v4605
        %v4674 = vunpack.c.l.b16 %v4606
        %v4675 = vunpack.c.l.b16 %v4607
        %v4676 = vunpack.c.l.b16 %v4608
        %v4677 = vunpack.c.l.b16 %v4609
        %v4678 = vunpack.c.l.b16 %v4610
        %v4679 = vunpack.c.l.b16 %v4611
        %v4680 = vunpack.c.l.b16 %v4612
        %v4681 = vunpack.c.l.b16 %v4613
        %v4682 = vunpack.c.l.b16 %v4614
        %v4683 = vunpack.c.l.b16 %v4615
        %v4684 = vunpack.c.l.b16 %v4616
        %v4685 = vunpack.c.l.b16 %v4617
        %v4686 = vpack.c.b16 %v4655, %v4654
        %v4687 = vpack.c.b16 %v4657, %v4656
        %v4688 = vpack.c.b16 %v4659, %v4658
        %v4689 = vpack.c.b16 %v4661, %v4660
        %v4690 = vpack.c.b16 %v4663, %v4662
        %v4691 = vpack.c.b16 %v4665, %v4664
        %v4692 = vpack.c.b16 %v4667, %v4666
        %v4693 = vpack.c.b16 %v4669, %v4668
        %v4694 = vpack.c.b16 %v4671, %v4670
        %v4695 = vpack.c.b16 %v4673, %v4672
        %v4696 = vpack.c.b16 %v4675, %v4674
        %v4697 = vpack.c.b16 %v4677, %v4676
        %v4698 = vpack.c.b16 %v4679, %v4678
        %v4699 = vpack.c.b16 %v4681, %v4680
        %v4700 = vpack.c.b16 %v4683, %v4682
        %v4701 = vpack.c.b16 %v4685, %v4684
        %4718 = vmatpush.bf16.msra.mxu0 %v4693
        %4719 = vmatpush.bf16.msra.mxu0 %v4692
        %4720 = vmatpush.bf16.msra.mxu0 %v4691
        %4721 = vmatpush.bf16.msra.mxu0 %v4690
        %4722 = vmatpush.bf16.msra.mxu0 %v4689
        %4723 = vmatpush.bf16.msra.mxu0 %v4688
        %4724 = vmatpush.bf16.msra.mxu0 %v4687
        %4725 = vmatpush.bf16.msra.mxu0 %v4686
        %4726 = vmatmul.bf16.gmra.mxu0 %v4570
        %v4727 = vpop.f32.mrf.mxu0
        %v4728 = vadd.f32 %v4620, %v4727
        %v4729 = vpop.f32.mrf.mxu0
        %v4730 = vadd.f32 %v4620, %v4729
        %4731 = vmatmul.bf16.gmra.mxu0 %v4572
        %v4732 = vpop.f32.mrf.mxu0
        %v4733 = vadd.f32 %v4620, %v4732
        %v4734 = vpop.f32.mrf.mxu0
        %v4735 = vadd.f32 %v4620, %v4734
        %4736 = vmatmul.bf16.gmra.mxu0 %v4574
        %v4737 = vpop.f32.mrf.mxu0
        %v4738 = vadd.f32 %v4620, %v4737
        %v4739 = vpop.f32.mrf.mxu0
        %v4740 = vadd.f32 %v4620, %v4739
        %4741 = vmatmul.bf16.gmra.mxu0 %v4576
        %v4742 = vpop.f32.mrf.mxu0
        %v4743 = vadd.f32 %v4620, %v4742
        %v4744 = vpop.f32.mrf.mxu0
        %v4745 = vadd.f32 %v4620, %v4744
        %4746 = vmatmul.bf16.gmra.mxu0 %v4578
        %v4747 = vpop.f32.mrf.mxu0
        %v4748 = vadd.f32 %v4620, %v4747
        %v4749 = vpop.f32.mrf.mxu0
        %v4750 = vadd.f32 %v4620, %v4749
        %4751 = vmatmul.bf16.gmra.mxu0 %v4580
        %v4752 = vpop.f32.mrf.mxu0
        %v4753 = vadd.f32 %v4620, %v4752
        %v4754 = vpop.f32.mrf.mxu0
        %v4755 = vadd.f32 %v4620, %v4754
        %4756 = vmatmul.bf16.gmra.mxu0 %v4582
        %v4757 = vpop.f32.mrf.mxu0
        %v4758 = vadd.f32 %v4620, %v4757
        %v4759 = vpop.f32.mrf.mxu0
        %v4760 = vadd.f32 %v4620, %v4759
        %4761 = vmatmul.bf16.gmra.mxu0 %v4584
        %v4762 = vpop.f32.mrf.mxu0
        %v4763 = vadd.f32 %v4620, %v4762
        %v4764 = vpop.f32.mrf.mxu0
        %v4765 = vadd.f32 %v4620, %v4764
        %4766 = vdwg.mxu0
        %4767 = vmatpush.bf16.msra.mxu0 %v4701
        %4768 = vmatpush.bf16.msra.mxu0 %v4700
        %4769 = vmatpush.bf16.msra.mxu0 %v4699
        %4770 = vmatpush.bf16.msra.mxu0 %v4698
        %4771 = vmatpush.bf16.msra.mxu0 %v4697
        %4772 = vmatpush.bf16.msra.mxu0 %v4696
        %4773 = vmatpush.bf16.msra.mxu0 %v4695
        %4774 = vmatpush.bf16.msra.mxu0 %v4694
        %4775 = vmatmul.bf16.gmra.mxu0 %v4571
        %v4776 = vpop.f32.mrf.mxu0
        %v4777 = vadd.f32 %v4728, %v4776
        %v4778 = vpop.f32.mrf.mxu0
        %v4779 = vadd.f32 %v4730, %v4778
        %4780 = vmatmul.bf16.gmra.mxu0 %v4573
        %v4781 = vpop.f32.mrf.mxu0
        %v4782 = vadd.f32 %v4733, %v4781
        %v4783 = vpop.f32.mrf.mxu0
        %v4784 = vadd.f32 %v4735, %v4783
        %4785 = vmatmul.bf16.gmra.mxu0 %v4575
        %v4786 = vpop.f32.mrf.mxu0
        %v4787 = vadd.f32 %v4738, %v4786
        %v4788 = vpop.f32.mrf.mxu0
        %v4789 = vadd.f32 %v4740, %v4788
        %4790 = vmatmul.bf16.gmra.mxu0 %v4577
        %v4791 = vpop.f32.mrf.mxu0
        %v4792 = vadd.f32 %v4743, %v4791
        %v4793 = vpop.f32.mrf.mxu0
        %v4794 = vadd.f32 %v4745, %v4793
        %4795 = vmatmul.bf16.gmra.mxu0 %v4579
        %v4796 = vpop.f32.mrf.mxu0
        %v4797 = vadd.f32 %v4748, %v4796
        %v4798 = vpop.f32.mrf.mxu0
        %v4799 = vadd.f32 %v4750, %v4798
        %4800 = vmatmul.bf16.gmra.mxu0 %v4581
        %v4801 = vpop.f32.mrf.mxu0
        %v4802 = vadd.f32 %v4753, %v4801
        %v4803 = vpop.f32.mrf.mxu0
        %v4804 = vadd.f32 %v4755, %v4803
        %4805 = vmatmul.bf16.gmra.mxu0 %v4583
        %v4806 = vpop.f32.mrf.mxu0
        %v4807 = vadd.f32 %v4758, %v4806
        %v4808 = vpop.f32.mrf.mxu0
        %v4809 = vadd.f32 %v4760, %v4808
        %4810 = vmatmul.bf16.gmra.mxu0 %v4585
        %v4811 = vpop.f32.mrf.mxu0
        %v4812 = vadd.f32 %v4763, %v4811
        %v4813 = vpop.f32.mrf.mxu0
        %v4814 = vadd.f32 %v4765, %v4813
        %4815 = vdwg.mxu0
        %v4816 = vadd.f32 %v3954, %v4777
        %v4817 = vadd.f32 %v3955, %v4779
        %v4818 = vadd.f32 %v3956, %v4782
        %v4819 = vadd.f32 %v3957, %v4784
        %v4820 = vadd.f32 %v3958, %v4787
        %v4821 = vadd.f32 %v3959, %v4789
        %v4822 = vadd.f32 %v3960, %v4792
        %v4823 = vadd.f32 %v3961, %v4794
        %v4824 = vadd.f32 %v3962, %v4797
        %v4825 = vadd.f32 %v3963, %v4799
        %v4826 = vadd.f32 %v3964, %v4802
        %v4827 = vadd.f32 %v3965, %v4804
        %v4828 = vadd.f32 %v3966, %v4807
        %v4829 = vadd.f32 %v3967, %v4809
        %v4830 = vadd.f32 %v3968, %v4812
        %v4831 = vadd.f32 %v3969, %v4814
        %4832 = vst [vmem:[%s541] sm:$0xff] %v4816
        %4833 = vst [vmem:[%s541 + $0x8] sm:$0xff] %v4817
        %4834 = vst [vmem:[%s541 + $0x10] sm:$0xff] %v4818
        %4835 = vst [vmem:[%s541 + $0x18] sm:$0xff] %v4819
        %4836 = vst [vmem:[%s541 + $0x20] sm:$0xff] %v4820
        %4837 = vst [vmem:[%s541 + $0x28] sm:$0xff] %v4821
        %4838 = vst [vmem:[%s541 + $0x30] sm:$0xff] %v4822
        %4839 = vst [vmem:[%s541 + $0x38] sm:$0xff] %v4823
        %4840 = vst [vmem:[%s541 + $0x40] sm:$0xff] %v4824
        %4841 = vst [vmem:[%s541 + $0x48] sm:$0xff] %v4825
        %4842 = vst [vmem:[%s541 + $0x50] sm:$0xff] %v4826
        %4843 = vst [vmem:[%s541 + $0x58] sm:$0xff] %v4827
        %4844 = vst [vmem:[%s541 + $0x60] sm:$0xff] %v4828
        %4845 = vst [vmem:[%s541 + $0x68] sm:$0xff] %v4829
        %4846 = vst [vmem:[%s541 + $0x70] sm:$0xff] %v4830
        %4847 = vst [vmem:[%s541 + $0x78] sm:$0xff] %v4831
        %s4848 = sand.u32 %s319, 1
        %s4849 = scalar_lea.sflag [#allocation6], %s4848
        %s4850 = sand.u32 %s319, 1
        %s4851 = smul.addr %s4850, 128
        %s4852 = scalar_lea.vmem [#allocation15], %s4851
        // Predicated region
        $region97: #{tpu_custom_call.1} parent=71 // pred_check
          %p4853 = pneg %p329
        $region98: #{tpu_custom_call.1} parent=71 // pred_check_branch
          %4855 = sbr.rel (%p4853) target = $region100
        $region99: #{tpu_custom_call.1} parent=71 // pred_region
          %4857 = vsyncadd %s4849, 0
          %s4858 = smul.addr %s33, 16
          %s4859 = smul.addr %s4858, 8
          %s4860 = scalar_lea.hbm %s13, %s4859
          %s4861 = sshll.u32 %s4852, 4
          %s4862 = int_to_ptr.vmem [resolvable:$true] %s4861
          %s4863 = sshll.u32 %s4860, 4
          %s4864 = int_to_ptr.hbm [resolvable:$true] %s4863
          %4869 = dma.vmem_to_hbm [thread:$0]  %s4862, 2048, %s4864, %s4849, 128, 128, 8
        $region100: #{tpu_custom_call.1} parent=71 // pred_fallthru
          _
      $region72: #{tpu_custom_call.1} parent=5 // pred_fallthru
        _
      %p4870 = scmp.le.s32.totalorder 2, %s28
      // Predicated region
      $region101: #{tpu_custom_call.1} parent=5 // pred_check
        %p4871 = pneg %p4870
      $region102: #{tpu_custom_call.1} parent=5 // pred_check_branch
        %4873 = sbr.rel (%p4871) target = $region104
      $region103: #{tpu_custom_call.1} parent=5 // pred_region
        %s4874 = ssub.s32 %s28, 2
        // Predicated region
        $region105: #{tpu_custom_call.1} parent=103 // pred_check
          %p4875 = pneg %p335
        $region106: #{tpu_custom_call.1} parent=103 // pred_check_branch
          %4877 = sbr.rel (%p4875) target = $region108
        $region107: #{tpu_custom_call.1} parent=103 // pred_region
          %s4878 = sand.u32 %s320, 1
          %s4879 = scalar_lea.sflag [#allocation6], %s4878
          %s4880 = sand.u32 %s320, 1
          %s4881 = smul.addr %s4880, 128
          %s4882 = scalar_lea.vmem [#allocation15], %s4881
          %4884 = dma.done %s4879, 2048
        $region108: #{tpu_custom_call.1} parent=103 // pred_fallthru
          _
      $region104: #{tpu_custom_call.1} parent=5 // pred_fallthru
        _
    $region6: #{tpu_custom_call.1} parent=1 // loop_footer
      %s32 = sadd.s32 1, %s28
    $region7: #{tpu_custom_call.1} parent=1 // loop_footer_branch
      %27 = sbr.rel target = $region3
    $region8: #{tpu_custom_call.1} parent=1 // loop_exit
      _
    %4885 = vsyncpa [#allocation5], 1
    %s4886 = scalar_lea.sflag [#allocation5], 1
    %4887 = vsyncpa %s4886, 1
    %4888 = vsyncpa [#allocation8], 1
    %4889 = vsyncpa [#allocation11], 1
    %4890 = vsyncpa [#allocation14], 1
    %4891 = vsyncpa [#allocation6], 1
    %s4892 = scalar_lea.sflag [#allocation6], 1
    %4893 = vsyncpa %s4892, 1

</llo_original>
